<compile_context>
chip_gen: v6e
topology: v6e:2x2x1
jax: 0.10.0
libtpu: 0.0.40
codegen_flags: <defaults>
</compile_context>

<pallas_src>
import numpy as np

import jax
import jax.numpy as jnp
from jax import lax
from jax.experimental import pallas as pl
from jax.experimental.pallas import tpu as pltpu  # noqa: F401  (TPU backend assumed)

# ----------------------------- configuration -------------------------------
B = 2                        # batch
IN_C = 3                     # input channels
HW_IN = 16                   # input spatial
CONV_DIMS = [(3, 8), (8, 8), (8, 16), (16, 16), (16, 32), (32, 32)]
POOL_AFTER = {1, 3}          # maxpool(2,2) after these conv indices (VGG-style)
FEAT_C = 32                  # channels after conv stack
POOL_OUT = 2                 # adaptive-avg-pool target (scaled from 7)
FEAT = FEAT_C * POOL_OUT * POOL_OUT   # 128   (scaled from 512*7*7)
HID = 64                     # scaled from 4096
NUM_CLASSES = 10             # scaled VOC head
BN_EPS = 1e-5
LANES = 128                  # W*Cout == 128 for every conv layer below
BIAS_PAD = 16                # bias sections padded to a full bf16 sublane tile

# per-layer geometry of the (square) conv stack: (H == W, Cin, Cout, pool-mode)
LAYER_GEOM = [
    (16, 3, 8, None),
    (16, 8, 8, 'max'),     # maxpool 2x2
    (8, 8, 16, None),
    (8, 16, 16, 'max'),    # maxpool 2x2
    (4, 16, 32, None),
    (4, 32, 32, 'avg'),    # adaptive avg pool 4x4 -> 2x2 (== avgpool 2x2)
]


def _param_offsets():
    offs, row = [], 0
    for (W, Cin, _Cout, _pool) in LAYER_GEOM:
        offs.append(row)
        row += 3 * W * Cin + BIAS_PAD
    head = row
    total = head + 3 * FEAT + BIAS_PAD
    return offs, head, total


CONV_OFFS, HEAD_OFF, TOTAL_PARAM_ROWS = _param_offsets()


# --------------------- weight pre-transforms (off the hot path) ---------------------
def _parity_perm(W, Cout):
    """Column permutation to parity-major layout: new col p*(W/2)*Cout + x2*Cout + co."""
    half = W // 2
    p = np.arange(2)[:, None, None]
    x2 = np.arange(half)[None, :, None]
    co = np.arange(Cout)[None, None, :]
    return ((2 * x2 + p) * Cout + co).reshape(-1)


def _band_conv_weight(w_hwio, dy, W, pooled):
    """Banded lane-space weight for vertical tap dy of a 3x3/pad-1 conv.

    Maps an un-padded input row (lane j = x_in*Cin + c) to an output row
    (lane n = x_out*Cout + co, or parity-major if pooled).  Shape (W*Cin, W*Cout).
    'SAME' horizontal edge handling is folded in via the validity mask.
    """
    Cin, Cout = int(w_hwio.shape[2]), int(w_hwio.shape[3])
    x_in = np.arange(W)[:, None]
    x_out = np.arange(W)[None, :]
    kx = x_in - x_out + 1                                     # kernel x index
    valid = jnp.asarray((kx >= 0) & (kx <= 2), jnp.float32)
    kxc = np.clip(kx, 0, 2)
    blocks = w_hwio[dy][kxc] * valid[:, :, None, None]        # (W, W, Cin, Cout)
    wb = jnp.transpose(blocks, (0, 2, 1, 3)).reshape(W * Cin, W * Cout)
    if pooled:
        wb = wb[:, _parity_perm(W, Cout)]                     # parity-major output columns
    return wb


def prepare_kernel_params(params):
    """Pack every parameter into a single (TOTAL_PARAM_ROWS, 128) bf16 slab (one DMA)."""
    rows = []
    for (W, Cin, Cout, pool), (w, bias) in zip(LAYER_GEOM, params['conv']):
        for dy in range(3):
            rows.append(_band_conv_weight(w, dy, W, pool is not None))       # (W*Cin, 128)
        brow = jnp.tile(bias, W).reshape(1, W * Cout)                          # (1, 128)
        rows.append(jnp.concatenate(
            [brow, jnp.zeros((BIAS_PAD - 1, LANES), jnp.float32)], axis=0))

    h = params['head']

    def fold_bn(wmat, bvec, gamma, beta, rmean, rvar):
        s = gamma * jax.lax.rsqrt(rvar + BN_EPS)
        return wmat * s, (bvec - rmean) * s + beta

    bw1f, bb1f = fold_bn(h['bw1'], h['bb1'], h['g1'], h['be1'], h['rm1'], h['rv1'])
    bw2f, bb2f = fold_bn(h['bw2'], h['bb2'], h['g2'], h['be2'], h['rm2'], h['rv2'])

    # kernel feature order p = r*64 + x*32 + co  ->  torch NCHW-flatten order q = co*4 + r*2 + x
    r = np.arange(POOL_OUT)[:, None, None]
    xp = np.arange(POOL_OUT)[None, :, None]
    co = np.arange(FEAT_C)[None, None, :]
    perm = (co * (POOL_OUT * POOL_OUT) + r * POOL_OUT + xp).reshape(-1)

    w1 = jnp.concatenate([h['cw1'], bw1f], axis=1)[perm, :]                    # (128, 128)
    b1 = jnp.concatenate([h['cb1'], bb1f], axis=1)                             # (1, 128)
    w2 = jnp.zeros((2 * HID, 2 * HID), jnp.float32)
    w2 = w2.at[:HID, :HID].set(h['cw2']).at[HID:, HID:].set(bw2f)              # block-diag
    b2 = jnp.concatenate([h['cb2'], bb2f], axis=1)
    w3 = jnp.zeros((2 * HID, LANES), jnp.float32)
    w3 = w3.at[:HID, :NUM_CLASSES].set(h['cw3'])
    w3 = w3.at[HID:, NUM_CLASSES:NUM_CLASSES + 4].set(h['bw3'])
    b3 = jnp.zeros((1, LANES), jnp.float32)
    b3 = b3.at[:, :NUM_CLASSES].set(h['cb3'])
    b3 = b3.at[:, NUM_CLASSES:NUM_CLASSES + 4].set(h['bb3'])

    rows += [w1, w2, w3, b1, b2, b3, jnp.zeros((BIAS_PAD - 3, LANES), jnp.float32)]
    slab = jnp.concatenate(rows, axis=0).astype(jnp.bfloat16)
    assert slab.shape == (TOTAL_PARAM_ROWS, LANES)
    return slab


# --------------------- in-kernel 0/1 selection matrices (iota based, no int division) ---------------------
def _iota2(shape):
    return (lax.broadcasted_iota(jnp.int32, shape, 0),
            lax.broadcasted_iota(jnp.int32, shape, 1))


def _bidx(j, period):
    """j // period for j < B*period, without vector integer division."""
    b = jnp.zeros(j.shape, jnp.int32)
    for k in range(1, B):
        b = b + (j >= k * period).astype(jnp.int32)
    return b


def _repad_select(H):
    """(B*(H+2), B*(H+2)-2): padded next-layer rows <- conv-output rows (pad rows -> 0)."""
    n_out, n_src = B * (H + 2), B * (H + 2) - 2
    j, m = _iota2((n_out, n_src))
    b = _bidx(j, H + 2)
    r = j - b * (H + 2) - 1
    hit = (r >= 0) & (r < H) & (m == b * (H + 2) + r)
    return jnp.where(hit, 1.0, 0.0).astype(jnp.bfloat16)


def _pool_select(H, parity):
    """(B*(H//2+2), B*(H+2)-2): padded pooled rows <- conv-output rows of vertical parity."""
    Hh = H // 2
    n_out, n_src = B * (Hh + 2), B * (H + 2) - 2
    j, m = _iota2((n_out, n_src))
    b = _bidx(j, Hh + 2)
    r = j - b * (Hh + 2) - 1
    hit = (r >= 0) & (r < Hh) & (m == b * (H + 2) + 2 * r + parity)
    return jnp.where(hit, 1.0, 0.0).astype(jnp.bfloat16)


def _feat_select(H, parity):
    """(2*B, B*(H+2)-2): feature rows (r'*B + b) <- final conv-output rows of vertical parity."""
    n_out, n_src = 2 * B, B * (H + 2) - 2
    i, m = _iota2((n_out, n_src))
    rp = (i >= B).astype(jnp.int32)
    b = i - rp * B
    hit = (m == b * (H + 2) + 2 * rp + parity)
    return jnp.where(hit, 1.0, 0.0).astype(jnp.bfloat16)


# ------------------------------ the fused Pallas kernel ------------------------------
def fused_vgg_kernel(x_ref, w_ref, out_ref):
    """Whole forward pass: 6x (conv3x3+ReLU [+pool]) -> flatten -> fused classifier/box_reg head.

    x_ref : (B*(16+2), 16*3) f32  vertically padded input slab (lane j = x*Cin + c)
    w_ref : (TOTAL_PARAM_ROWS, 128) bf16 packed parameter slab
    out_ref: (B, 14) f32  -> softmax(cls) || sigmoid(bbox)
    """
    f32, bf16 = jnp.float32, jnp.bfloat16

    def mxu(a, b):
        return jnp.dot(a, b, preferred_element_type=f32)

    src = x_ref[...].astype(f32)                      # (B*(H+2), W*Cin) padded activation slab
    n_layers = len(LAYER_GEOM)

    for l, (H, Cin, Cout, pool) in enumerate(LAYER_GEOM):
        W = H                                         # square feature maps
        base = CONV_OFFS[l]
        wcin = W * Cin
        M = B * (H + 2) - 2                           # batch folded into M rows

        # 3 banded MXU dots (one per vertical tap), bf16 operands, f32 accumulation.
        acc = mxu(src[0:M, :].astype(bf16), w_ref[base:base + wcin, :])
        acc = acc + mxu(src[1:M + 1, :].astype(bf16), w_ref[base + wcin:base + 2 * wcin, :])
        acc = acc + mxu(src[2:M + 2, :].astype(bf16), w_ref[base + 2 * wcin:base + 3 * wcin, :])
        bias = w_ref[base + 3 * wcin:base + 3 * wcin + 1, :].astype(f32)     # (1, 128)
        y = jnp.maximum(acc + bias, 0.0)                                     # (M, 128)

        if pool is None:
            # re-insert the vertical pad rows for the next layer with one tiny matmul
            src = mxu(_repad_select(H), y.astype(bf16))
        else:
            half = (W // 2) * Cout
            if pool == 'max':                           # horizontal pool: parity-major lane halves
                hp = jnp.maximum(y[:, :half], y[:, half:])
            else:
                hp = (y[:, :half] + y[:, half:]) * 0.5
            hp = hp.astype(bf16)
            if l < n_layers - 1:                        # vertical pool + re-pad for next layer
                ev = mxu(_pool_select(H, 0), hp)
                od = mxu(_pool_select(H, 1), hp)
            else:                                       # final avg pool -> feature rows r'*B + b
                ev = mxu(_feat_select(H, 0), hp)
                od = mxu(_feat_select(H, 1), hp)
            src = jnp.maximum(ev, od) if pool == 'max' else (ev + od) * 0.5

    # ---- fused classifier + box_reg head (BN pre-folded, flatten pre-permuted) ----
    feat = src                                          # (2*B, 64): rows r'*B + b
    x0 = feat[:B, :].astype(bf16)                       # r' = 0 half of the flattened features
    x1 = feat[B:, :].astype(bf16)                       # r' = 1 half

    hoff = HEAD_OFF
    hbias = w_ref[hoff + 3 * FEAT:hoff + 3 * FEAT + 3, :].astype(f32)        # (3, 128)
    half_feat = FEAT // 2

    h1 = jnp.maximum(mxu(x0, w_ref[hoff:hoff + half_feat, :])
                     + mxu(x1, w_ref[hoff + half_feat:hoff + FEAT, :])
                     + hbias[0:1, :], 0.0)                                   # (B, 128)
    h2 = jnp.maximum(mxu(h1.astype(bf16), w_ref[hoff + FEAT:hoff + 2 * FEAT, :])
                     + hbias[1:2, :], 0.0)                                   # (B, 128)
    z = (mxu(h2.astype(bf16), w_ref[hoff + 2 * FEAT:hoff + 3 * FEAT, :])
         + hbias[2:3, :])                                                    # (B, 128)

    logits = z[:, :NUM_CLASSES]
    m = jnp.max(logits, axis=1, keepdims=True)
    e = jnp.exp(logits - m)
    cls = e / jnp.sum(e, axis=1, keepdims=True)
    bb = z[:, NUM_CLASSES:NUM_CLASSES + 4]
    bbox = 0.5 * (jnp.tanh(0.5 * bb) + 1.0)             # numerically robust sigmoid

    out_ref[...] = jnp.concatenate([cls, bbox], axis=1)  # single merged (B, 14) store


# ------------------------------ wrapper ------------------------------
def fused_forward(x_nchw, w_slab):
    """Mirrors FeatureExtractedVGG.forward: returns (cls_softmax, bbox_sigmoid)."""
    b = x_nchw.shape[0]
    assert b == B
    # only XLA glue on the hot path: padded row slab with lanes j = x*Cin + c
    x = jnp.transpose(x_nchw, (0, 2, 3, 1)).reshape(b, HW_IN, HW_IN * IN_C)
    x = jnp.pad(x, ((0, 0), (1, 1), (0, 0))).reshape(b * (HW_IN + 2), HW_IN * IN_C)

    out = pl.pallas_call(
        fused_vgg_kernel,
        out_shape=jax.ShapeDtypeStruct((b, NUM_CLASSES + 4), jnp.float32),
    )(x, w_slab)
    return out[:, :NUM_CLASSES], out[:, NUM_CLASSES:]


# ------------------------------ parameter init ------------------------------
def init_params(key):
    params = {'conv': [], 'head': {}}
    for cin, cout in CONV_DIMS:
        key, k1, k2 = jax.random.split(key, 3)
        w = jax.random.normal(k1, (3, 3, cin, cout), jnp.float32) / jnp.sqrt(9.0 * cin)
        b = 0.01 * jax.random.normal(k2, (cout,), jnp.float32)
        params['conv'].append((w, b))

    def linear(k, din, dout):
        k1, k2 = jax.random.split(k)
        w = jax.random.normal(k1, (din, dout), jnp.float32) / jnp.sqrt(float(din))
        b = 0.01 * jax.random.normal(k2, (1, dout), jnp.float32)
        return w, b

    def bn_params(k, dim):
        k1, k2, k3, k4 = jax.random.split(k, 4)
        gamma = 1.0 + 0.1 * jax.random.normal(k1, (1, dim), jnp.float32)
        beta = 0.01 * jax.random.normal(k2, (1, dim), jnp.float32)
        rmean = 0.1 * jax.random.normal(k3, (1, dim), jnp.float32)
        rvar = 1.0 + 0.1 * jnp.abs(jax.random.normal(k4, (1, dim), jnp.float32))
        return gamma, beta, rmean, rvar

    h = params['head']
    key, *ks = jax.random.split(key, 9)
    h['cw1'], h['cb1'] = linear(ks[0], FEAT, HID)
    h['cw2'], h['cb2'] = linear(ks[1], HID, HID)
    h['cw3'], h['cb3'] = linear(ks[2], HID, NUM_CLASSES)
    h['bw1'], h['bb1'] = linear(ks[3], FEAT, HID)
    h['bw2'], h['bb2'] = linear(ks[4], HID, HID)
    h['bw3'], h['bb3'] = linear(ks[5], HID, 4)
    h['g1'], h['be1'], h['rm1'], h['rv1'] = bn_params(ks[6], HID)
    h['g2'], h['be2'], h['rm2'], h['rv2'] = bn_params(ks[7], HID)
    return params


# ------------------------------ pure-JAX reference (torch semantics) ------------------------------
def reference_forward(x_nchw, params):
    x = jnp.transpose(x_nchw, (0, 2, 3, 1))                   # NHWC
    for i, (w, bias) in enumerate(params['conv']):
        x = jax.lax.conv_general_dilated(
            x, w, window_strides=(1, 1), padding='SAME',
            dimension_numbers=('NHWC', 'HWIO', 'NHWC'))
        x = jnp.maximum(x + bias, 0.0)
        if i in POOL_AFTER:
            x = jax.lax.reduce_window(x, -jnp.inf, jax.lax.max,
                                      (1, 2, 2, 1), (1, 2, 2, 1), 'VALID')
    # adaptive avg pool 4x4 -> 2x2
    x = jax.lax.reduce_window(x, 0.0, jax.lax.add,
                              (1, 2, 2, 1), (1, 2, 2, 1), 'VALID') * 0.25
    feat = jnp.transpose(x, (0, 3, 1, 2)).reshape(x.shape[0], -1)   # torch NCHW .view order

    h = params['head']

    def lin(v, w, b):
        return v @ w + b

    def bn(v, g, be, rm, rv):
        return (v - rm) * g * jax.lax.rsqrt(rv + BN_EPS) + be

    c = jnp.maximum(lin(feat, h['cw1'], h['cb1']), 0.0)
    c = jnp.maximum(lin(c, h['cw2'], h['cb2']), 0.0)
    cls = jax.nn.softmax(lin(c, h['cw3'], h['cb3']), axis=1)

    g1 = jnp.maximum(bn(lin(feat, h['bw1'], h['bb1']),
                        h['g1'], h['be1'], h['rm1'], h['rv1']), 0.0)
    g2 = jnp.maximum(bn(lin(g1, h['bw2'], h['bb2']),
                        h['g2'], h['be2'], h['rm2'], h['rv2']), 0.0)
    bbox = jax.nn.sigmoid(lin(g2, h['bw3'], h['bb3']))
    return cls, bbox


# ----------------------------------- main ------------------------------------
if __name__ == "__main__":
    root = jax.random.PRNGKey(0)
    pkey, xkey = jax.random.split(root)
    params = init_params(pkey)
    w_slab = prepare_kernel_params(params)       # one-time weight packing, off the hot path
    x = jax.random.normal(xkey, (B, IN_C, HW_IN, HW_IN), jnp.float32)

    fwd = jax.jit(fused_forward)
    cls, bbox = fwd(x, w_slab)
    jax.block_until_ready((cls, bbox))

    # structural checks
    assert cls.shape == (B, NUM_CLASSES) and cls.dtype == jnp.float32
    assert bbox.shape == (B, 4) and bbox.dtype == jnp.float32
    assert bool(jnp.allclose(jnp.sum(cls, axis=1), 1.0, atol=5e-3))      # softmax rows
    assert bool(jnp.all((bbox >= 0.0) & (bbox <= 1.0)))                  # sigmoid range

    # numerical check vs. a pure-JAX reference of the original module semantics
    ref_cls, ref_bbox = jax.jit(reference_forward)(x, params)
    jax.block_until_ready((ref_cls, ref_bbox))
    assert bool(jnp.allclose(cls, ref_cls, atol=3e-2)), \
        ("cls mismatch", float(jnp.max(jnp.abs(cls - ref_cls))))
    assert bool(jnp.allclose(bbox, ref_bbox, atol=3e-2)), \
        ("bbox mismatch", float(jnp.max(jnp.abs(bbox - ref_bbox))))

    print("KERNEL_OK")
</pallas_src>

<mosaic_0001>
module attributes {stable_mosaic.version = 11 : i64} {
  func.func @fused_vgg_kernel(%arg0: memref<36x48xf32, #tpu.memory_space<vmem>>, %arg1: memref<2176x128xbf16, #tpu.memory_space<vmem>>, %arg2: memref<2x14xf32, #tpu.memory_space<vmem>>) attributes {dimension_semantics = [], scalar_prefetch = 0 : i64, scratch_operands = 0 : i64, tpu.core_type = #tpu.core_type<tc>} {
    %c0 = arith.constant 0 : index
    %c0_0 = arith.constant 0 : index
    %0 = vector.load %arg0[%c0, %c0_0] : memref<36x48xf32, #tpu.memory_space<vmem>>, vector<36x48xf32>
    %1 = vector.extract_strided_slice %0 {offsets = [0, 0], sizes = [34, 48], strides = [1, 1]} : vector<36x48xf32> to vector<34x48xf32>
    %2 = arith.truncf %1 : vector<34x48xf32> to vector<34x48xbf16>
    %c0_1 = arith.constant 0 : index
    %c0_2 = arith.constant 0 : index
    %3 = vector.load %arg1[%c0_1, %c0_2] : memref<2176x128xbf16, #tpu.memory_space<vmem>>, vector<48x128xbf16>
    %cst = arith.constant dense<0.000000e+00> : vector<34x128xf32>
    %4 = tpu.matmul %2, %3, %cst {dimension_numbers = #tpu.dot_dimension_numbers<[1], [0], [0], [1], [0, 0, 1, 1], [], []>} : vector<34x48xbf16>, vector<48x128xbf16>, vector<34x128xf32> -> vector<34x128xf32>
    %5 = vector.extract_strided_slice %0 {offsets = [1, 0], sizes = [34, 48], strides = [1, 1]} : vector<36x48xf32> to vector<34x48xf32>
    %6 = arith.truncf %5 : vector<34x48xf32> to vector<34x48xbf16>
    %c48 = arith.constant 48 : index
    %c0_3 = arith.constant 0 : index
    %7 = vector.load %arg1[%c48, %c0_3] : memref<2176x128xbf16, #tpu.memory_space<vmem>>, vector<48x128xbf16>
    %cst_4 = arith.constant dense<0.000000e+00> : vector<34x128xf32>
    %8 = tpu.matmul %6, %7, %cst_4 {dimension_numbers = #tpu.dot_dimension_numbers<[1], [0], [0], [1], [0, 0, 1, 1], [], []>} : vector<34x48xbf16>, vector<48x128xbf16>, vector<34x128xf32> -> vector<34x128xf32>
    %9 = arith.addf %4, %8 : vector<34x128xf32>
    %10 = vector.extract_strided_slice %0 {offsets = [2, 0], sizes = [34, 48], strides = [1, 1]} : vector<36x48xf32> to vector<34x48xf32>
    %11 = arith.truncf %10 : vector<34x48xf32> to vector<34x48xbf16>
    %c96 = arith.constant 96 : index
    %c0_5 = arith.constant 0 : index
    %12 = vector.load %arg1[%c96, %c0_5] : memref<2176x128xbf16, #tpu.memory_space<vmem>>, vector<48x128xbf16>
    %cst_6 = arith.constant dense<0.000000e+00> : vector<34x128xf32>
    %13 = tpu.matmul %11, %12, %cst_6 {dimension_numbers = #tpu.dot_dimension_numbers<[1], [0], [0], [1], [0, 0, 1, 1], [], []>} : vector<34x48xbf16>, vector<48x128xbf16>, vector<34x128xf32> -> vector<34x128xf32>
    %14 = arith.addf %9, %13 : vector<34x128xf32>
    %c144 = arith.constant 144 : index
    %c0_7 = arith.constant 0 : index
    %15 = vector.load %arg1[%c144, %c0_7] : memref<2176x128xbf16, #tpu.memory_space<vmem>>, vector<1x128xbf16>
    %16 = arith.extf %15 : vector<1x128xbf16> to vector<1x128xf32>
    %17 = vector.broadcast %16 : vector<1x128xf32> to vector<34x128xf32>
    %18 = arith.addf %14, %17 : vector<34x128xf32>
    %cst_8 = arith.constant 0.000000e+00 : f32
    %19 = vector.broadcast %cst_8 : f32 to vector<34x128xf32>
    %20 = arith.maximumf %18, %19 : vector<34x128xf32>
    %21 = tpu.iota {dimensions = array<i32: 0>} : vector<36x34xi32>
    %22 = tpu.iota {dimensions = array<i32: 1>} : vector<36x34xi32>
    %c0_i32 = arith.constant 0 : i32
    %23 = vector.broadcast %c0_i32 : i32 to vector<36x34xi32>
    %c18_i32 = arith.constant 18 : i32
    %24 = vector.broadcast %c18_i32 : i32 to vector<36x34xi32>
    %25 = arith.cmpi sge, %21, %24 : vector<36x34xi32>
    %26 = arith.extui %25 : vector<36x34xi1> to vector<36x34xi32>
    %27 = arith.addi %23, %26 : vector<36x34xi32>
    %c18_i32_9 = arith.constant 18 : i32
    %28 = vector.broadcast %c18_i32_9 : i32 to vector<36x34xi32>
    %29 = arith.muli %27, %28 : vector<36x34xi32>
    %30 = arith.subi %21, %29 : vector<36x34xi32>
    %c1_i32 = arith.constant 1 : i32
    %31 = vector.broadcast %c1_i32 : i32 to vector<36x34xi32>
    %32 = arith.subi %30, %31 : vector<36x34xi32>
    %c0_i32_10 = arith.constant 0 : i32
    %33 = vector.broadcast %c0_i32_10 : i32 to vector<36x34xi32>
    %34 = arith.cmpi sge, %32, %33 : vector<36x34xi32>
    %c16_i32 = arith.constant 16 : i32
    %35 = vector.broadcast %c16_i32 : i32 to vector<36x34xi32>
    %36 = arith.cmpi slt, %32, %35 : vector<36x34xi32>
    %37 = arith.andi %34, %36 : vector<36x34xi1>
    %c18_i32_11 = arith.constant 18 : i32
    %38 = vector.broadcast %c18_i32_11 : i32 to vector<36x34xi32>
    %39 = arith.muli %27, %38 : vector<36x34xi32>
    %40 = arith.addi %39, %32 : vector<36x34xi32>
    %41 = arith.cmpi eq, %22, %40 : vector<36x34xi32>
    %42 = arith.andi %37, %41 : vector<36x34xi1>
    %cst_12 = arith.constant 1.000000e+00 : f32
    %cst_13 = arith.constant 0.000000e+00 : f32
    %43 = vector.broadcast %cst_12 : f32 to vector<36x34xf32>
    %44 = vector.broadcast %cst_13 : f32 to vector<36x34xf32>
    %45 = arith.select %42, %43, %44 : vector<36x34xi1>, vector<36x34xf32>
    %46 = arith.truncf %45 : vector<36x34xf32> to vector<36x34xbf16>
    %47 = arith.truncf %20 : vector<34x128xf32> to vector<34x128xbf16>
    %cst_14 = arith.constant dense<0.000000e+00> : vector<36x128xf32>
    %48 = tpu.matmul %46, %47, %cst_14 {dimension_numbers = #tpu.dot_dimension_numbers<[1], [0], [0], [1], [0, 0, 1, 1], [], []>} : vector<36x34xbf16>, vector<34x128xbf16>, vector<36x128xf32> -> vector<36x128xf32>
    %49 = vector.extract_strided_slice %48 {offsets = [0, 0], sizes = [34, 128], strides = [1, 1]} : vector<36x128xf32> to vector<34x128xf32>
    %50 = arith.truncf %49 : vector<34x128xf32> to vector<34x128xbf16>
    %c160 = arith.constant 160 : index
    %c0_15 = arith.constant 0 : index
    %51 = vector.load %arg1[%c160, %c0_15] : memref<2176x128xbf16, #tpu.memory_space<vmem>>, vector<128x128xbf16>
    %cst_16 = arith.constant dense<0.000000e+00> : vector<34x128xf32>
    %52 = tpu.matmul %50, %51, %cst_16 {dimension_numbers = #tpu.dot_dimension_numbers<[1], [0], [0], [1], [0, 0, 1, 1], [], []>} : vector<34x128xbf16>, vector<128x128xbf16>, vector<34x128xf32> -> vector<34x128xf32>
    %53 = vector.extract_strided_slice %48 {offsets = [1, 0], sizes = [34, 128], strides = [1, 1]} : vector<36x128xf32> to vector<34x128xf32>
    %54 = arith.truncf %53 : vector<34x128xf32> to vector<34x128xbf16>
    %c288 = arith.constant 288 : index
    %c0_17 = arith.constant 0 : index
    %55 = vector.load %arg1[%c288, %c0_17] : memref<2176x128xbf16, #tpu.memory_space<vmem>>, vector<128x128xbf16>
    %cst_18 = arith.constant dense<0.000000e+00> : vector<34x128xf32>
    %56 = tpu.matmul %54, %55, %cst_18 {dimension_numbers = #tpu.dot_dimension_numbers<[1], [0], [0], [1], [0, 0, 1, 1], [], []>} : vector<34x128xbf16>, vector<128x128xbf16>, vector<34x128xf32> -> vector<34x128xf32>
    %57 = arith.addf %52, %56 : vector<34x128xf32>
    %58 = vector.extract_strided_slice %48 {offsets = [2, 0], sizes = [34, 128], strides = [1, 1]} : vector<36x128xf32> to vector<34x128xf32>
    %59 = arith.truncf %58 : vector<34x128xf32> to vector<34x128xbf16>
    %c416 = arith.constant 416 : index
    %c0_19 = arith.constant 0 : index
    %60 = vector.load %arg1[%c416, %c0_19] : memref<2176x128xbf16, #tpu.memory_space<vmem>>, vector<128x128xbf16>
    %cst_20 = arith.constant dense<0.000000e+00> : vector<34x128xf32>
    %61 = tpu.matmul %59, %60, %cst_20 {dimension_numbers = #tpu.dot_dimension_numbers<[1], [0], [0], [1], [0, 0, 1, 1], [], []>} : vector<34x128xbf16>, vector<128x128xbf16>, vector<34x128xf32> -> vector<34x128xf32>
    %62 = arith.addf %57, %61 : vector<34x128xf32>
    %c544 = arith.constant 544 : index
    %c0_21 = arith.constant 0 : index
    %63 = vector.load %arg1[%c544, %c0_21] : memref<2176x128xbf16, #tpu.memory_space<vmem>>, vector<1x128xbf16>
    %64 = arith.extf %63 : vector<1x128xbf16> to vector<1x128xf32>
    %65 = vector.broadcast %64 : vector<1x128xf32> to vector<34x128xf32>
    %66 = arith.addf %62, %65 : vector<34x128xf32>
    %cst_22 = arith.constant 0.000000e+00 : f32
    %67 = vector.broadcast %cst_22 : f32 to vector<34x128xf32>
    %68 = arith.maximumf %66, %67 : vector<34x128xf32>
    %69 = vector.extract_strided_slice %68 {offsets = [0, 0], sizes = [34, 64], strides = [1, 1]} : vector<34x128xf32> to vector<34x64xf32>
    %70 = vector.extract_strided_slice %68 {offsets = [0, 64], sizes = [34, 64], strides = [1, 1]} : vector<34x128xf32> to vector<34x64xf32>
    %71 = arith.maximumf %69, %70 : vector<34x64xf32>
    %72 = arith.truncf %71 : vector<34x64xf32> to vector<34x64xbf16>
    %73 = tpu.iota {dimensions = array<i32: 0>} : vector<20x34xi32>
    %74 = tpu.iota {dimensions = array<i32: 1>} : vector<20x34xi32>
    %c0_i32_23 = arith.constant 0 : i32
    %75 = vector.broadcast %c0_i32_23 : i32 to vector<20x34xi32>
    %c10_i32 = arith.constant 10 : i32
    %76 = vector.broadcast %c10_i32 : i32 to vector<20x34xi32>
    %77 = arith.cmpi sge, %73, %76 : vector<20x34xi32>
    %78 = arith.extui %77 : vector<20x34xi1> to vector<20x34xi32>
    %79 = arith.addi %75, %78 : vector<20x34xi32>
    %c10_i32_24 = arith.constant 10 : i32
    %80 = vector.broadcast %c10_i32_24 : i32 to vector<20x34xi32>
    %81 = arith.muli %79, %80 : vector<20x34xi32>
    %82 = arith.subi %73, %81 : vector<20x34xi32>
    %c1_i32_25 = arith.constant 1 : i32
    %83 = vector.broadcast %c1_i32_25 : i32 to vector<20x34xi32>
    %84 = arith.subi %82, %83 : vector<20x34xi32>
    %c0_i32_26 = arith.constant 0 : i32
    %85 = vector.broadcast %c0_i32_26 : i32 to vector<20x34xi32>
    %86 = arith.cmpi sge, %84, %85 : vector<20x34xi32>
    %c8_i32 = arith.constant 8 : i32
    %87 = vector.broadcast %c8_i32 : i32 to vector<20x34xi32>
    %88 = arith.cmpi slt, %84, %87 : vector<20x34xi32>
    %89 = arith.andi %86, %88 : vector<20x34xi1>
    %c18_i32_27 = arith.constant 18 : i32
    %90 = vector.broadcast %c18_i32_27 : i32 to vector<20x34xi32>
    %91 = arith.muli %79, %90 : vector<20x34xi32>
    %c2_i32 = arith.constant 2 : i32
    %92 = vector.broadcast %c2_i32 : i32 to vector<20x34xi32>
    %93 = arith.muli %92, %84 : vector<20x34xi32>
    %94 = arith.addi %91, %93 : vector<20x34xi32>
    %c0_i32_28 = arith.constant 0 : i32
    %95 = vector.broadcast %c0_i32_28 : i32 to vector<20x34xi32>
    %96 = arith.addi %94, %95 : vector<20x34xi32>
    %97 = arith.cmpi eq, %74, %96 : vector<20x34xi32>
    %98 = arith.andi %89, %97 : vector<20x34xi1>
    %cst_29 = arith.constant 1.000000e+00 : f32
    %cst_30 = arith.constant 0.000000e+00 : f32
    %99 = vector.broadcast %cst_29 : f32 to vector<20x34xf32>
    %100 = vector.broadcast %cst_30 : f32 to vector<20x34xf32>
    %101 = arith.select %98, %99, %100 : vector<20x34xi1>, vector<20x34xf32>
    %102 = arith.truncf %101 : vector<20x34xf32> to vector<20x34xbf16>
    %cst_31 = arith.constant dense<0.000000e+00> : vector<20x64xf32>
    %103 = tpu.matmul %102, %72, %cst_31 {dimension_numbers = #tpu.dot_dimension_numbers<[1], [0], [0], [1], [0, 0, 1, 1], [], []>} : vector<20x34xbf16>, vector<34x64xbf16>, vector<20x64xf32> -> vector<20x64xf32>
    %104 = tpu.iota {dimensions = array<i32: 0>} : vector<20x34xi32>
    %105 = tpu.iota {dimensions = array<i32: 1>} : vector<20x34xi32>
    %c0_i32_32 = arith.constant 0 : i32
    %106 = vector.broadcast %c0_i32_32 : i32 to vector<20x34xi32>
    %c10_i32_33 = arith.constant 10 : i32
    %107 = vector.broadcast %c10_i32_33 : i32 to vector<20x34xi32>
    %108 = arith.cmpi sge, %104, %107 : vector<20x34xi32>
    %109 = arith.extui %108 : vector<20x34xi1> to vector<20x34xi32>
    %110 = arith.addi %106, %109 : vector<20x34xi32>
    %c10_i32_34 = arith.constant 10 : i32
    %111 = vector.broadcast %c10_i32_34 : i32 to vector<20x34xi32>
    %112 = arith.muli %110, %111 : vector<20x34xi32>
    %113 = arith.subi %104, %112 : vector<20x34xi32>
    %c1_i32_35 = arith.constant 1 : i32
    %114 = vector.broadcast %c1_i32_35 : i32 to vector<20x34xi32>
    %115 = arith.subi %113, %114 : vector<20x34xi32>
    %c0_i32_36 = arith.constant 0 : i32
    %116 = vector.broadcast %c0_i32_36 : i32 to vector<20x34xi32>
    %117 = arith.cmpi sge, %115, %116 : vector<20x34xi32>
    %c8_i32_37 = arith.constant 8 : i32
    %118 = vector.broadcast %c8_i32_37 : i32 to vector<20x34xi32>
    %119 = arith.cmpi slt, %115, %118 : vector<20x34xi32>
    %120 = arith.andi %117, %119 : vector<20x34xi1>
    %c18_i32_38 = arith.constant 18 : i32
    %121 = vector.broadcast %c18_i32_38 : i32 to vector<20x34xi32>
    %122 = arith.muli %110, %121 : vector<20x34xi32>
    %c2_i32_39 = arith.constant 2 : i32
    %123 = vector.broadcast %c2_i32_39 : i32 to vector<20x34xi32>
    %124 = arith.muli %123, %115 : vector<20x34xi32>
    %125 = arith.addi %122, %124 : vector<20x34xi32>
    %c1_i32_40 = arith.constant 1 : i32
    %126 = vector.broadcast %c1_i32_40 : i32 to vector<20x34xi32>
    %127 = arith.addi %125, %126 : vector<20x34xi32>
    %128 = arith.cmpi eq, %105, %127 : vector<20x34xi32>
    %129 = arith.andi %120, %128 : vector<20x34xi1>
    %cst_41 = arith.constant 1.000000e+00 : f32
    %cst_42 = arith.constant 0.000000e+00 : f32
    %130 = vector.broadcast %cst_41 : f32 to vector<20x34xf32>
    %131 = vector.broadcast %cst_42 : f32 to vector<20x34xf32>
    %132 = arith.select %129, %130, %131 : vector<20x34xi1>, vector<20x34xf32>
    %133 = arith.truncf %132 : vector<20x34xf32> to vector<20x34xbf16>
    %cst_43 = arith.constant dense<0.000000e+00> : vector<20x64xf32>
    %134 = tpu.matmul %133, %72, %cst_43 {dimension_numbers = #tpu.dot_dimension_numbers<[1], [0], [0], [1], [0, 0, 1, 1], [], []>} : vector<20x34xbf16>, vector<34x64xbf16>, vector<20x64xf32> -> vector<20x64xf32>
    %135 = arith.maximumf %103, %134 : vector<20x64xf32>
    %136 = vector.extract_strided_slice %135 {offsets = [0, 0], sizes = [18, 64], strides = [1, 1]} : vector<20x64xf32> to vector<18x64xf32>
    %137 = arith.truncf %136 : vector<18x64xf32> to vector<18x64xbf16>
    %c560 = arith.constant 560 : index
    %c0_44 = arith.constant 0 : index
    %138 = vector.load %arg1[%c560, %c0_44] : memref<2176x128xbf16, #tpu.memory_space<vmem>>, vector<64x128xbf16>
    %cst_45 = arith.constant dense<0.000000e+00> : vector<18x128xf32>
    %139 = tpu.matmul %137, %138, %cst_45 {dimension_numbers = #tpu.dot_dimension_numbers<[1], [0], [0], [1], [0, 0, 1, 1], [], []>} : vector<18x64xbf16>, vector<64x128xbf16>, vector<18x128xf32> -> vector<18x128xf32>
    %140 = vector.extract_strided_slice %135 {offsets = [1, 0], sizes = [18, 64], strides = [1, 1]} : vector<20x64xf32> to vector<18x64xf32>
    %141 = arith.truncf %140 : vector<18x64xf32> to vector<18x64xbf16>
    %c624 = arith.constant 624 : index
    %c0_46 = arith.constant 0 : index
    %142 = vector.load %arg1[%c624, %c0_46] : memref<2176x128xbf16, #tpu.memory_space<vmem>>, vector<64x128xbf16>
    %cst_47 = arith.constant dense<0.000000e+00> : vector<18x128xf32>
    %143 = tpu.matmul %141, %142, %cst_47 {dimension_numbers = #tpu.dot_dimension_numbers<[1], [0], [0], [1], [0, 0, 1, 1], [], []>} : vector<18x64xbf16>, vector<64x128xbf16>, vector<18x128xf32> -> vector<18x128xf32>
    %144 = arith.addf %139, %143 : vector<18x128xf32>
    %145 = vector.extract_strided_slice %135 {offsets = [2, 0], sizes = [18, 64], strides = [1, 1]} : vector<20x64xf32> to vector<18x64xf32>
    %146 = arith.truncf %145 : vector<18x64xf32> to vector<18x64xbf16>
    %c688 = arith.constant 688 : index
    %c0_48 = arith.constant 0 : index
    %147 = vector.load %arg1[%c688, %c0_48] : memref<2176x128xbf16, #tpu.memory_space<vmem>>, vector<64x128xbf16>
    %cst_49 = arith.constant dense<0.000000e+00> : vector<18x128xf32>
    %148 = tpu.matmul %146, %147, %cst_49 {dimension_numbers = #tpu.dot_dimension_numbers<[1], [0], [0], [1], [0, 0, 1, 1], [], []>} : vector<18x64xbf16>, vector<64x128xbf16>, vector<18x128xf32> -> vector<18x128xf32>
    %149 = arith.addf %144, %148 : vector<18x128xf32>
    %c752 = arith.constant 752 : index
    %c0_50 = arith.constant 0 : index
    %150 = vector.load %arg1[%c752, %c0_50] : memref<2176x128xbf16, #tpu.memory_space<vmem>>, vector<1x128xbf16>
    %151 = arith.extf %150 : vector<1x128xbf16> to vector<1x128xf32>
    %152 = vector.broadcast %151 : vector<1x128xf32> to vector<18x128xf32>
    %153 = arith.addf %149, %152 : vector<18x128xf32>
    %cst_51 = arith.constant 0.000000e+00 : f32
    %154 = vector.broadcast %cst_51 : f32 to vector<18x128xf32>
    %155 = arith.maximumf %153, %154 : vector<18x128xf32>
    %156 = tpu.iota {dimensions = array<i32: 0>} : vector<20x18xi32>
    %157 = tpu.iota {dimensions = array<i32: 1>} : vector<20x18xi32>
    %c0_i32_52 = arith.constant 0 : i32
    %158 = vector.broadcast %c0_i32_52 : i32 to vector<20x18xi32>
    %c10_i32_53 = arith.constant 10 : i32
    %159 = vector.broadcast %c10_i32_53 : i32 to vector<20x18xi32>
    %160 = arith.cmpi sge, %156, %159 : vector<20x18xi32>
    %161 = arith.extui %160 : vector<20x18xi1> to vector<20x18xi32>
    %162 = arith.addi %158, %161 : vector<20x18xi32>
    %c10_i32_54 = arith.constant 10 : i32
    %163 = vector.broadcast %c10_i32_54 : i32 to vector<20x18xi32>
    %164 = arith.muli %162, %163 : vector<20x18xi32>
    %165 = arith.subi %156, %164 : vector<20x18xi32>
    %c1_i32_55 = arith.constant 1 : i32
    %166 = vector.broadcast %c1_i32_55 : i32 to vector<20x18xi32>
    %167 = arith.subi %165, %166 : vector<20x18xi32>
    %c0_i32_56 = arith.constant 0 : i32
    %168 = vector.broadcast %c0_i32_56 : i32 to vector<20x18xi32>
    %169 = arith.cmpi sge, %167, %168 : vector<20x18xi32>
    %c8_i32_57 = arith.constant 8 : i32
    %170 = vector.broadcast %c8_i32_57 : i32 to vector<20x18xi32>
    %171 = arith.cmpi slt, %167, %170 : vector<20x18xi32>
    %172 = arith.andi %169, %171 : vector<20x18xi1>
    %c10_i32_58 = arith.constant 10 : i32
    %173 = vector.broadcast %c10_i32_58 : i32 to vector<20x18xi32>
    %174 = arith.muli %162, %173 : vector<20x18xi32>
    %175 = arith.addi %174, %167 : vector<20x18xi32>
    %176 = arith.cmpi eq, %157, %175 : vector<20x18xi32>
    %177 = arith.andi %172, %176 : vector<20x18xi1>
    %cst_59 = arith.constant 1.000000e+00 : f32
    %cst_60 = arith.constant 0.000000e+00 : f32
    %178 = vector.broadcast %cst_59 : f32 to vector<20x18xf32>
    %179 = vector.broadcast %cst_60 : f32 to vector<20x18xf32>
    %180 = arith.select %177, %178, %179 : vector<20x18xi1>, vector<20x18xf32>
    %181 = arith.truncf %180 : vector<20x18xf32> to vector<20x18xbf16>
    %182 = arith.truncf %155 : vector<18x128xf32> to vector<18x128xbf16>
    %cst_61 = arith.constant dense<0.000000e+00> : vector<20x128xf32>
    %183 = tpu.matmul %181, %182, %cst_61 {dimension_numbers = #tpu.dot_dimension_numbers<[1], [0], [0], [1], [0, 0, 1, 1], [], []>} : vector<20x18xbf16>, vector<18x128xbf16>, vector<20x128xf32> -> vector<20x128xf32>
    %184 = vector.extract_strided_slice %183 {offsets = [0, 0], sizes = [18, 128], strides = [1, 1]} : vector<20x128xf32> to vector<18x128xf32>
    %185 = arith.truncf %184 : vector<18x128xf32> to vector<18x128xbf16>
    %c768 = arith.constant 768 : index
    %c0_62 = arith.constant 0 : index
    %186 = vector.load %arg1[%c768, %c0_62] : memref<2176x128xbf16, #tpu.memory_space<vmem>>, vector<128x128xbf16>
    %cst_63 = arith.constant dense<0.000000e+00> : vector<18x128xf32>
    %187 = tpu.matmul %185, %186, %cst_63 {dimension_numbers = #tpu.dot_dimension_numbers<[1], [0], [0], [1], [0, 0, 1, 1], [], []>} : vector<18x128xbf16>, vector<128x128xbf16>, vector<18x128xf32> -> vector<18x128xf32>
    %188 = vector.extract_strided_slice %183 {offsets = [1, 0], sizes = [18, 128], strides = [1, 1]} : vector<20x128xf32> to vector<18x128xf32>
    %189 = arith.truncf %188 : vector<18x128xf32> to vector<18x128xbf16>
    %c896 = arith.constant 896 : index
    %c0_64 = arith.constant 0 : index
    %190 = vector.load %arg1[%c896, %c0_64] : memref<2176x128xbf16, #tpu.memory_space<vmem>>, vector<128x128xbf16>
    %cst_65 = arith.constant dense<0.000000e+00> : vector<18x128xf32>
    %191 = tpu.matmul %189, %190, %cst_65 {dimension_numbers = #tpu.dot_dimension_numbers<[1], [0], [0], [1], [0, 0, 1, 1], [], []>} : vector<18x128xbf16>, vector<128x128xbf16>, vector<18x128xf32> -> vector<18x128xf32>
    %192 = arith.addf %187, %191 : vector<18x128xf32>
    %193 = vector.extract_strided_slice %183 {offsets = [2, 0], sizes = [18, 128], strides = [1, 1]} : vector<20x128xf32> to vector<18x128xf32>
    %194 = arith.truncf %193 : vector<18x128xf32> to vector<18x128xbf16>
    %c1024 = arith.constant 1024 : index
    %c0_66 = arith.constant 0 : index
    %195 = vector.load %arg1[%c1024, %c0_66] : memref<2176x128xbf16, #tpu.memory_space<vmem>>, vector<128x128xbf16>
    %cst_67 = arith.constant dense<0.000000e+00> : vector<18x128xf32>
    %196 = tpu.matmul %194, %195, %cst_67 {dimension_numbers = #tpu.dot_dimension_numbers<[1], [0], [0], [1], [0, 0, 1, 1], [], []>} : vector<18x128xbf16>, vector<128x128xbf16>, vector<18x128xf32> -> vector<18x128xf32>
    %197 = arith.addf %192, %196 : vector<18x128xf32>
    %c1152 = arith.constant 1152 : index
    %c0_68 = arith.constant 0 : index
    %198 = vector.load %arg1[%c1152, %c0_68] : memref<2176x128xbf16, #tpu.memory_space<vmem>>, vector<1x128xbf16>
    %199 = arith.extf %198 : vector<1x128xbf16> to vector<1x128xf32>
    %200 = vector.broadcast %199 : vector<1x128xf32> to vector<18x128xf32>
    %201 = arith.addf %197, %200 : vector<18x128xf32>
    %cst_69 = arith.constant 0.000000e+00 : f32
    %202 = vector.broadcast %cst_69 : f32 to vector<18x128xf32>
    %203 = arith.maximumf %201, %202 : vector<18x128xf32>
    %204 = vector.extract_strided_slice %203 {offsets = [0, 0], sizes = [18, 64], strides = [1, 1]} : vector<18x128xf32> to vector<18x64xf32>
    %205 = vector.extract_strided_slice %203 {offsets = [0, 64], sizes = [18, 64], strides = [1, 1]} : vector<18x128xf32> to vector<18x64xf32>
    %206 = arith.maximumf %204, %205 : vector<18x64xf32>
    %207 = arith.truncf %206 : vector<18x64xf32> to vector<18x64xbf16>
    %208 = tpu.iota {dimensions = array<i32: 0>} : vector<12x18xi32>
    %209 = tpu.iota {dimensions = array<i32: 1>} : vector<12x18xi32>
    %c0_i32_70 = arith.constant 0 : i32
    %210 = vector.broadcast %c0_i32_70 : i32 to vector<12x18xi32>
    %c6_i32 = arith.constant 6 : i32
    %211 = vector.broadcast %c6_i32 : i32 to vector<12x18xi32>
    %212 = arith.cmpi sge, %208, %211 : vector<12x18xi32>
    %213 = arith.extui %212 : vector<12x18xi1> to vector<12x18xi32>
    %214 = arith.addi %210, %213 : vector<12x18xi32>
    %c6_i32_71 = arith.constant 6 : i32
    %215 = vector.broadcast %c6_i32_71 : i32 to vector<12x18xi32>
    %216 = arith.muli %214, %215 : vector<12x18xi32>
    %217 = arith.subi %208, %216 : vector<12x18xi32>
    %c1_i32_72 = arith.constant 1 : i32
    %218 = vector.broadcast %c1_i32_72 : i32 to vector<12x18xi32>
    %219 = arith.subi %217, %218 : vector<12x18xi32>
    %c0_i32_73 = arith.constant 0 : i32
    %220 = vector.broadcast %c0_i32_73 : i32 to vector<12x18xi32>
    %221 = arith.cmpi sge, %219, %220 : vector<12x18xi32>
    %c4_i32 = arith.constant 4 : i32
    %222 = vector.broadcast %c4_i32 : i32 to vector<12x18xi32>
    %223 = arith.cmpi slt, %219, %222 : vector<12x18xi32>
    %224 = arith.andi %221, %223 : vector<12x18xi1>
    %c10_i32_74 = arith.constant 10 : i32
    %225 = vector.broadcast %c10_i32_74 : i32 to vector<12x18xi32>
    %226 = arith.muli %214, %225 : vector<12x18xi32>
    %c2_i32_75 = arith.constant 2 : i32
    %227 = vector.broadcast %c2_i32_75 : i32 to vector<12x18xi32>
    %228 = arith.muli %227, %219 : vector<12x18xi32>
    %229 = arith.addi %226, %228 : vector<12x18xi32>
    %c0_i32_76 = arith.constant 0 : i32
    %230 = vector.broadcast %c0_i32_76 : i32 to vector<12x18xi32>
    %231 = arith.addi %229, %230 : vector<12x18xi32>
    %232 = arith.cmpi eq, %209, %231 : vector<12x18xi32>
    %233 = arith.andi %224, %232 : vector<12x18xi1>
    %cst_77 = arith.constant 1.000000e+00 : f32
    %cst_78 = arith.constant 0.000000e+00 : f32
    %234 = vector.broadcast %cst_77 : f32 to vector<12x18xf32>
    %235 = vector.broadcast %cst_78 : f32 to vector<12x18xf32>
    %236 = arith.select %233, %234, %235 : vector<12x18xi1>, vector<12x18xf32>
    %237 = arith.truncf %236 : vector<12x18xf32> to vector<12x18xbf16>
    %cst_79 = arith.constant dense<0.000000e+00> : vector<12x64xf32>
    %238 = tpu.matmul %237, %207, %cst_79 {dimension_numbers = #tpu.dot_dimension_numbers<[1], [0], [0], [1], [0, 0, 1, 1], [], []>} : vector<12x18xbf16>, vector<18x64xbf16>, vector<12x64xf32> -> vector<12x64xf32>
    %239 = tpu.iota {dimensions = array<i32: 0>} : vector<12x18xi32>
    %240 = tpu.iota {dimensions = array<i32: 1>} : vector<12x18xi32>
    %c0_i32_80 = arith.constant 0 : i32
    %241 = vector.broadcast %c0_i32_80 : i32 to vector<12x18xi32>
    %c6_i32_81 = arith.constant 6 : i32
    %242 = vector.broadcast %c6_i32_81 : i32 to vector<12x18xi32>
    %243 = arith.cmpi sge, %239, %242 : vector<12x18xi32>
    %244 = arith.extui %243 : vector<12x18xi1> to vector<12x18xi32>
    %245 = arith.addi %241, %244 : vector<12x18xi32>
    %c6_i32_82 = arith.constant 6 : i32
    %246 = vector.broadcast %c6_i32_82 : i32 to vector<12x18xi32>
    %247 = arith.muli %245, %246 : vector<12x18xi32>
    %248 = arith.subi %239, %247 : vector<12x18xi32>
    %c1_i32_83 = arith.constant 1 : i32
    %249 = vector.broadcast %c1_i32_83 : i32 to vector<12x18xi32>
    %250 = arith.subi %248, %249 : vector<12x18xi32>
    %c0_i32_84 = arith.constant 0 : i32
    %251 = vector.broadcast %c0_i32_84 : i32 to vector<12x18xi32>
    %252 = arith.cmpi sge, %250, %251 : vector<12x18xi32>
    %c4_i32_85 = arith.constant 4 : i32
    %253 = vector.broadcast %c4_i32_85 : i32 to vector<12x18xi32>
    %254 = arith.cmpi slt, %250, %253 : vector<12x18xi32>
    %255 = arith.andi %252, %254 : vector<12x18xi1>
    %c10_i32_86 = arith.constant 10 : i32
    %256 = vector.broadcast %c10_i32_86 : i32 to vector<12x18xi32>
    %257 = arith.muli %245, %256 : vector<12x18xi32>
    %c2_i32_87 = arith.constant 2 : i32
    %258 = vector.broadcast %c2_i32_87 : i32 to vector<12x18xi32>
    %259 = arith.muli %258, %250 : vector<12x18xi32>
    %260 = arith.addi %257, %259 : vector<12x18xi32>
    %c1_i32_88 = arith.constant 1 : i32
    %261 = vector.broadcast %c1_i32_88 : i32 to vector<12x18xi32>
    %262 = arith.addi %260, %261 : vector<12x18xi32>
    %263 = arith.cmpi eq, %240, %262 : vector<12x18xi32>
    %264 = arith.andi %255, %263 : vector<12x18xi1>
    %cst_89 = arith.constant 1.000000e+00 : f32
    %cst_90 = arith.constant 0.000000e+00 : f32
    %265 = vector.broadcast %cst_89 : f32 to vector<12x18xf32>
    %266 = vector.broadcast %cst_90 : f32 to vector<12x18xf32>
    %267 = arith.select %264, %265, %266 : vector<12x18xi1>, vector<12x18xf32>
    %268 = arith.truncf %267 : vector<12x18xf32> to vector<12x18xbf16>
    %cst_91 = arith.constant dense<0.000000e+00> : vector<12x64xf32>
    %269 = tpu.matmul %268, %207, %cst_91 {dimension_numbers = #tpu.dot_dimension_numbers<[1], [0], [0], [1], [0, 0, 1, 1], [], []>} : vector<12x18xbf16>, vector<18x64xbf16>, vector<12x64xf32> -> vector<12x64xf32>
    %270 = arith.maximumf %238, %269 : vector<12x64xf32>
    %271 = vector.extract_strided_slice %270 {offsets = [0, 0], sizes = [10, 64], strides = [1, 1]} : vector<12x64xf32> to vector<10x64xf32>
    %272 = arith.truncf %271 : vector<10x64xf32> to vector<10x64xbf16>
    %c1168 = arith.constant 1168 : index
    %c0_92 = arith.constant 0 : index
    %273 = vector.load %arg1[%c1168, %c0_92] : memref<2176x128xbf16, #tpu.memory_space<vmem>>, vector<64x128xbf16>
    %cst_93 = arith.constant dense<0.000000e+00> : vector<10x128xf32>
    %274 = tpu.matmul %272, %273, %cst_93 {dimension_numbers = #tpu.dot_dimension_numbers<[1], [0], [0], [1], [0, 0, 1, 1], [], []>} : vector<10x64xbf16>, vector<64x128xbf16>, vector<10x128xf32> -> vector<10x128xf32>
    %275 = vector.extract_strided_slice %270 {offsets = [1, 0], sizes = [10, 64], strides = [1, 1]} : vector<12x64xf32> to vector<10x64xf32>
    %276 = arith.truncf %275 : vector<10x64xf32> to vector<10x64xbf16>
    %c1232 = arith.constant 1232 : index
    %c0_94 = arith.constant 0 : index
    %277 = vector.load %arg1[%c1232, %c0_94] : memref<2176x128xbf16, #tpu.memory_space<vmem>>, vector<64x128xbf16>
    %cst_95 = arith.constant dense<0.000000e+00> : vector<10x128xf32>
    %278 = tpu.matmul %276, %277, %cst_95 {dimension_numbers = #tpu.dot_dimension_numbers<[1], [0], [0], [1], [0, 0, 1, 1], [], []>} : vector<10x64xbf16>, vector<64x128xbf16>, vector<10x128xf32> -> vector<10x128xf32>
    %279 = arith.addf %274, %278 : vector<10x128xf32>
    %280 = vector.extract_strided_slice %270 {offsets = [2, 0], sizes = [10, 64], strides = [1, 1]} : vector<12x64xf32> to vector<10x64xf32>
    %281 = arith.truncf %280 : vector<10x64xf32> to vector<10x64xbf16>
    %c1296 = arith.constant 1296 : index
    %c0_96 = arith.constant 0 : index
    %282 = vector.load %arg1[%c1296, %c0_96] : memref<2176x128xbf16, #tpu.memory_space<vmem>>, vector<64x128xbf16>
    %cst_97 = arith.constant dense<0.000000e+00> : vector<10x128xf32>
    %283 = tpu.matmul %281, %282, %cst_97 {dimension_numbers = #tpu.dot_dimension_numbers<[1], [0], [0], [1], [0, 0, 1, 1], [], []>} : vector<10x64xbf16>, vector<64x128xbf16>, vector<10x128xf32> -> vector<10x128xf32>
    %284 = arith.addf %279, %283 : vector<10x128xf32>
    %c1360 = arith.constant 1360 : index
    %c0_98 = arith.constant 0 : index
    %285 = vector.load %arg1[%c1360, %c0_98] : memref<2176x128xbf16, #tpu.memory_space<vmem>>, vector<1x128xbf16>
    %286 = arith.extf %285 : vector<1x128xbf16> to vector<1x128xf32>
    %287 = vector.broadcast %286 : vector<1x128xf32> to vector<10x128xf32>
    %288 = arith.addf %284, %287 : vector<10x128xf32>
    %cst_99 = arith.constant 0.000000e+00 : f32
    %289 = vector.broadcast %cst_99 : f32 to vector<10x128xf32>
    %290 = arith.maximumf %288, %289 : vector<10x128xf32>
    %291 = tpu.iota {dimensions = array<i32: 0>} : vector<12x10xi32>
    %292 = tpu.iota {dimensions = array<i32: 1>} : vector<12x10xi32>
    %c0_i32_100 = arith.constant 0 : i32
    %293 = vector.broadcast %c0_i32_100 : i32 to vector<12x10xi32>
    %c6_i32_101 = arith.constant 6 : i32
    %294 = vector.broadcast %c6_i32_101 : i32 to vector<12x10xi32>
    %295 = arith.cmpi sge, %291, %294 : vector<12x10xi32>
    %296 = arith.extui %295 : vector<12x10xi1> to vector<12x10xi32>
    %297 = arith.addi %293, %296 : vector<12x10xi32>
    %c6_i32_102 = arith.constant 6 : i32
    %298 = vector.broadcast %c6_i32_102 : i32 to vector<12x10xi32>
    %299 = arith.muli %297, %298 : vector<12x10xi32>
    %300 = arith.subi %291, %299 : vector<12x10xi32>
    %c1_i32_103 = arith.constant 1 : i32
    %301 = vector.broadcast %c1_i32_103 : i32 to vector<12x10xi32>
    %302 = arith.subi %300, %301 : vector<12x10xi32>
    %c0_i32_104 = arith.constant 0 : i32
    %303 = vector.broadcast %c0_i32_104 : i32 to vector<12x10xi32>
    %304 = arith.cmpi sge, %302, %303 : vector<12x10xi32>
    %c4_i32_105 = arith.constant 4 : i32
    %305 = vector.broadcast %c4_i32_105 : i32 to vector<12x10xi32>
    %306 = arith.cmpi slt, %302, %305 : vector<12x10xi32>
    %307 = arith.andi %304, %306 : vector<12x10xi1>
    %c6_i32_106 = arith.constant 6 : i32
    %308 = vector.broadcast %c6_i32_106 : i32 to vector<12x10xi32>
    %309 = arith.muli %297, %308 : vector<12x10xi32>
    %310 = arith.addi %309, %302 : vector<12x10xi32>
    %311 = arith.cmpi eq, %292, %310 : vector<12x10xi32>
    %312 = arith.andi %307, %311 : vector<12x10xi1>
    %cst_107 = arith.constant 1.000000e+00 : f32
    %cst_108 = arith.constant 0.000000e+00 : f32
    %313 = vector.broadcast %cst_107 : f32 to vector<12x10xf32>
    %314 = vector.broadcast %cst_108 : f32 to vector<12x10xf32>
    %315 = arith.select %312, %313, %314 : vector<12x10xi1>, vector<12x10xf32>
    %316 = arith.truncf %315 : vector<12x10xf32> to vector<12x10xbf16>
    %317 = arith.truncf %290 : vector<10x128xf32> to vector<10x128xbf16>
    %cst_109 = arith.constant dense<0.000000e+00> : vector<12x128xf32>
    %318 = tpu.matmul %316, %317, %cst_109 {dimension_numbers = #tpu.dot_dimension_numbers<[1], [0], [0], [1], [0, 0, 1, 1], [], []>} : vector<12x10xbf16>, vector<10x128xbf16>, vector<12x128xf32> -> vector<12x128xf32>
    %319 = vector.extract_strided_slice %318 {offsets = [0, 0], sizes = [10, 128], strides = [1, 1]} : vector<12x128xf32> to vector<10x128xf32>
    %320 = arith.truncf %319 : vector<10x128xf32> to vector<10x128xbf16>
    %c1376 = arith.constant 1376 : index
    %c0_110 = arith.constant 0 : index
    %321 = vector.load %arg1[%c1376, %c0_110] : memref<2176x128xbf16, #tpu.memory_space<vmem>>, vector<128x128xbf16>
    %cst_111 = arith.constant dense<0.000000e+00> : vector<10x128xf32>
    %322 = tpu.matmul %320, %321, %cst_111 {dimension_numbers = #tpu.dot_dimension_numbers<[1], [0], [0], [1], [0, 0, 1, 1], [], []>} : vector<10x128xbf16>, vector<128x128xbf16>, vector<10x128xf32> -> vector<10x128xf32>
    %323 = vector.extract_strided_slice %318 {offsets = [1, 0], sizes = [10, 128], strides = [1, 1]} : vector<12x128xf32> to vector<10x128xf32>
    %324 = arith.truncf %323 : vector<10x128xf32> to vector<10x128xbf16>
    %c1504 = arith.constant 1504 : index
    %c0_112 = arith.constant 0 : index
    %325 = vector.load %arg1[%c1504, %c0_112] : memref<2176x128xbf16, #tpu.memory_space<vmem>>, vector<128x128xbf16>
    %cst_113 = arith.constant dense<0.000000e+00> : vector<10x128xf32>
    %326 = tpu.matmul %324, %325, %cst_113 {dimension_numbers = #tpu.dot_dimension_numbers<[1], [0], [0], [1], [0, 0, 1, 1], [], []>} : vector<10x128xbf16>, vector<128x128xbf16>, vector<10x128xf32> -> vector<10x128xf32>
    %327 = arith.addf %322, %326 : vector<10x128xf32>
    %328 = vector.extract_strided_slice %318 {offsets = [2, 0], sizes = [10, 128], strides = [1, 1]} : vector<12x128xf32> to vector<10x128xf32>
    %329 = arith.truncf %328 : vector<10x128xf32> to vector<10x128xbf16>
    %c1632 = arith.constant 1632 : index
    %c0_114 = arith.constant 0 : index
    %330 = vector.load %arg1[%c1632, %c0_114] : memref<2176x128xbf16, #tpu.memory_space<vmem>>, vector<128x128xbf16>
    %cst_115 = arith.constant dense<0.000000e+00> : vector<10x128xf32>
    %331 = tpu.matmul %329, %330, %cst_115 {dimension_numbers = #tpu.dot_dimension_numbers<[1], [0], [0], [1], [0, 0, 1, 1], [], []>} : vector<10x128xbf16>, vector<128x128xbf16>, vector<10x128xf32> -> vector<10x128xf32>
    %332 = arith.addf %327, %331 : vector<10x128xf32>
    %c1760 = arith.constant 1760 : index
    %c0_116 = arith.constant 0 : index
    %333 = vector.load %arg1[%c1760, %c0_116] : memref<2176x128xbf16, #tpu.memory_space<vmem>>, vector<1x128xbf16>
    %334 = arith.extf %333 : vector<1x128xbf16> to vector<1x128xf32>
    %335 = vector.broadcast %334 : vector<1x128xf32> to vector<10x128xf32>
    %336 = arith.addf %332, %335 : vector<10x128xf32>
    %cst_117 = arith.constant 0.000000e+00 : f32
    %337 = vector.broadcast %cst_117 : f32 to vector<10x128xf32>
    %338 = arith.maximumf %336, %337 : vector<10x128xf32>
    %339 = vector.extract_strided_slice %338 {offsets = [0, 0], sizes = [10, 64], strides = [1, 1]} : vector<10x128xf32> to vector<10x64xf32>
    %340 = vector.extract_strided_slice %338 {offsets = [0, 64], sizes = [10, 64], strides = [1, 1]} : vector<10x128xf32> to vector<10x64xf32>
    %341 = arith.addf %339, %340 : vector<10x64xf32>
    %cst_118 = arith.constant 5.000000e-01 : f32
    %342 = vector.broadcast %cst_118 : f32 to vector<10x64xf32>
    %343 = arith.mulf %341, %342 : vector<10x64xf32>
    %344 = arith.truncf %343 : vector<10x64xf32> to vector<10x64xbf16>
    %345 = tpu.iota {dimensions = array<i32: 0>} : vector<4x10xi32>
    %346 = tpu.iota {dimensions = array<i32: 1>} : vector<4x10xi32>
    %c2_i32_119 = arith.constant 2 : i32
    %347 = vector.broadcast %c2_i32_119 : i32 to vector<4x10xi32>
    %348 = arith.cmpi sge, %345, %347 : vector<4x10xi32>
    %349 = arith.extui %348 : vector<4x10xi1> to vector<4x10xi32>
    %c2_i32_120 = arith.constant 2 : i32
    %350 = vector.broadcast %c2_i32_120 : i32 to vector<4x10xi32>
    %351 = arith.muli %349, %350 : vector<4x10xi32>
    %352 = arith.subi %345, %351 : vector<4x10xi32>
    %c6_i32_121 = arith.constant 6 : i32
    %353 = vector.broadcast %c6_i32_121 : i32 to vector<4x10xi32>
    %354 = arith.muli %352, %353 : vector<4x10xi32>
    %c2_i32_122 = arith.constant 2 : i32
    %355 = vector.broadcast %c2_i32_122 : i32 to vector<4x10xi32>
    %356 = arith.muli %355, %349 : vector<4x10xi32>
    %357 = arith.addi %354, %356 : vector<4x10xi32>
    %c0_i32_123 = arith.constant 0 : i32
    %358 = vector.broadcast %c0_i32_123 : i32 to vector<4x10xi32>
    %359 = arith.addi %357, %358 : vector<4x10xi32>
    %360 = arith.cmpi eq, %346, %359 : vector<4x10xi32>
    %cst_124 = arith.constant 1.000000e+00 : f32
    %cst_125 = arith.constant 0.000000e+00 : f32
    %361 = vector.broadcast %cst_124 : f32 to vector<4x10xf32>
    %362 = vector.broadcast %cst_125 : f32 to vector<4x10xf32>
    %363 = arith.select %360, %361, %362 : vector<4x10xi1>, vector<4x10xf32>
    %364 = arith.truncf %363 : vector<4x10xf32> to vector<4x10xbf16>
    %cst_126 = arith.constant dense<0.000000e+00> : vector<4x64xf32>
    %365 = tpu.matmul %364, %344, %cst_126 {dimension_numbers = #tpu.dot_dimension_numbers<[1], [0], [0], [1], [0, 0, 1, 1], [], []>} : vector<4x10xbf16>, vector<10x64xbf16>, vector<4x64xf32> -> vector<4x64xf32>
    %366 = tpu.iota {dimensions = array<i32: 0>} : vector<4x10xi32>
    %367 = tpu.iota {dimensions = array<i32: 1>} : vector<4x10xi32>
    %c2_i32_127 = arith.constant 2 : i32
    %368 = vector.broadcast %c2_i32_127 : i32 to vector<4x10xi32>
    %369 = arith.cmpi sge, %366, %368 : vector<4x10xi32>
    %370 = arith.extui %369 : vector<4x10xi1> to vector<4x10xi32>
    %c2_i32_128 = arith.constant 2 : i32
    %371 = vector.broadcast %c2_i32_128 : i32 to vector<4x10xi32>
    %372 = arith.muli %370, %371 : vector<4x10xi32>
    %373 = arith.subi %366, %372 : vector<4x10xi32>
    %c6_i32_129 = arith.constant 6 : i32
    %374 = vector.broadcast %c6_i32_129 : i32 to vector<4x10xi32>
    %375 = arith.muli %373, %374 : vector<4x10xi32>
    %c2_i32_130 = arith.constant 2 : i32
    %376 = vector.broadcast %c2_i32_130 : i32 to vector<4x10xi32>
    %377 = arith.muli %376, %370 : vector<4x10xi32>
    %378 = arith.addi %375, %377 : vector<4x10xi32>
    %c1_i32_131 = arith.constant 1 : i32
    %379 = vector.broadcast %c1_i32_131 : i32 to vector<4x10xi32>
    %380 = arith.addi %378, %379 : vector<4x10xi32>
    %381 = arith.cmpi eq, %367, %380 : vector<4x10xi32>
    %cst_132 = arith.constant 1.000000e+00 : f32
    %cst_133 = arith.constant 0.000000e+00 : f32
    %382 = vector.broadcast %cst_132 : f32 to vector<4x10xf32>
    %383 = vector.broadcast %cst_133 : f32 to vector<4x10xf32>
    %384 = arith.select %381, %382, %383 : vector<4x10xi1>, vector<4x10xf32>
    %385 = arith.truncf %384 : vector<4x10xf32> to vector<4x10xbf16>
    %cst_134 = arith.constant dense<0.000000e+00> : vector<4x64xf32>
    %386 = tpu.matmul %385, %344, %cst_134 {dimension_numbers = #tpu.dot_dimension_numbers<[1], [0], [0], [1], [0, 0, 1, 1], [], []>} : vector<4x10xbf16>, vector<10x64xbf16>, vector<4x64xf32> -> vector<4x64xf32>
    %387 = arith.addf %365, %386 : vector<4x64xf32>
    %cst_135 = arith.constant 5.000000e-01 : f32
    %388 = vector.broadcast %cst_135 : f32 to vector<4x64xf32>
    %389 = arith.mulf %387, %388 : vector<4x64xf32>
    %390 = vector.extract_strided_slice %389 {offsets = [0, 0], sizes = [2, 64], strides = [1, 1]} : vector<4x64xf32> to vector<2x64xf32>
    %391 = arith.truncf %390 : vector<2x64xf32> to vector<2x64xbf16>
    %392 = vector.extract_strided_slice %389 {offsets = [2, 0], sizes = [2, 64], strides = [1, 1]} : vector<4x64xf32> to vector<2x64xf32>
    %393 = arith.truncf %392 : vector<2x64xf32> to vector<2x64xbf16>
    %c2160 = arith.constant 2160 : index
    %c0_136 = arith.constant 0 : index
    %394 = vector.load %arg1[%c2160, %c0_136] : memref<2176x128xbf16, #tpu.memory_space<vmem>>, vector<3x128xbf16>
    %395 = arith.extf %394 : vector<3x128xbf16> to vector<3x128xf32>
    %c1776 = arith.constant 1776 : index
    %c0_137 = arith.constant 0 : index
    %396 = vector.load %arg1[%c1776, %c0_137] : memref<2176x128xbf16, #tpu.memory_space<vmem>>, vector<64x128xbf16>
    %cst_138 = arith.constant dense<0.000000e+00> : vector<2x128xf32>
    %397 = tpu.matmul %391, %396, %cst_138 {dimension_numbers = #tpu.dot_dimension_numbers<[1], [0], [0], [1], [0, 0, 1, 1], [], []>} : vector<2x64xbf16>, vector<64x128xbf16>, vector<2x128xf32> -> vector<2x128xf32>
    %c1840 = arith.constant 1840 : index
    %c0_139 = arith.constant 0 : index
    %398 = vector.load %arg1[%c1840, %c0_139] : memref<2176x128xbf16, #tpu.memory_space<vmem>>, vector<64x128xbf16>
    %cst_140 = arith.constant dense<0.000000e+00> : vector<2x128xf32>
    %399 = tpu.matmul %393, %398, %cst_140 {dimension_numbers = #tpu.dot_dimension_numbers<[1], [0], [0], [1], [0, 0, 1, 1], [], []>} : vector<2x64xbf16>, vector<64x128xbf16>, vector<2x128xf32> -> vector<2x128xf32>
    %400 = arith.addf %397, %399 : vector<2x128xf32>
    %401 = vector.extract_strided_slice %395 {offsets = [0, 0], sizes = [1, 128], strides = [1, 1]} : vector<3x128xf32> to vector<1x128xf32>
    %402 = vector.broadcast %401 : vector<1x128xf32> to vector<2x128xf32>
    %403 = arith.addf %400, %402 : vector<2x128xf32>
    %cst_141 = arith.constant 0.000000e+00 : f32
    %404 = vector.broadcast %cst_141 : f32 to vector<2x128xf32>
    %405 = arith.maximumf %403, %404 : vector<2x128xf32>
    %406 = arith.truncf %405 : vector<2x128xf32> to vector<2x128xbf16>
    %c1904 = arith.constant 1904 : index
    %c0_142 = arith.constant 0 : index
    %407 = vector.load %arg1[%c1904, %c0_142] : memref<2176x128xbf16, #tpu.memory_space<vmem>>, vector<128x128xbf16>
    %cst_143 = arith.constant dense<0.000000e+00> : vector<2x128xf32>
    %408 = tpu.matmul %406, %407, %cst_143 {dimension_numbers = #tpu.dot_dimension_numbers<[1], [0], [0], [1], [0, 0, 1, 1], [], []>} : vector<2x128xbf16>, vector<128x128xbf16>, vector<2x128xf32> -> vector<2x128xf32>
    %409 = vector.extract_strided_slice %395 {offsets = [1, 0], sizes = [1, 128], strides = [1, 1]} : vector<3x128xf32> to vector<1x128xf32>
    %410 = vector.broadcast %409 : vector<1x128xf32> to vector<2x128xf32>
    %411 = arith.addf %408, %410 : vector<2x128xf32>
    %cst_144 = arith.constant 0.000000e+00 : f32
    %412 = vector.broadcast %cst_144 : f32 to vector<2x128xf32>
    %413 = arith.maximumf %411, %412 : vector<2x128xf32>
    %414 = arith.truncf %413 : vector<2x128xf32> to vector<2x128xbf16>
    %c2032 = arith.constant 2032 : index
    %c0_145 = arith.constant 0 : index
    %415 = vector.load %arg1[%c2032, %c0_145] : memref<2176x128xbf16, #tpu.memory_space<vmem>>, vector<128x128xbf16>
    %cst_146 = arith.constant dense<0.000000e+00> : vector<2x128xf32>
    %416 = tpu.matmul %414, %415, %cst_146 {dimension_numbers = #tpu.dot_dimension_numbers<[1], [0], [0], [1], [0, 0, 1, 1], [], []>} : vector<2x128xbf16>, vector<128x128xbf16>, vector<2x128xf32> -> vector<2x128xf32>
    %417 = vector.extract_strided_slice %395 {offsets = [2, 0], sizes = [1, 128], strides = [1, 1]} : vector<3x128xf32> to vector<1x128xf32>
    %418 = vector.broadcast %417 : vector<1x128xf32> to vector<2x128xf32>
    %419 = arith.addf %416, %418 : vector<2x128xf32>
    %420 = vector.extract_strided_slice %419 {offsets = [0, 0], sizes = [2, 10], strides = [1, 1]} : vector<2x128xf32> to vector<2x10xf32>
    %cst_147 = arith.constant dense<0xFF800000> : vector<2xf32>
    %421 = vector.multi_reduction <maximumf>, %420, %cst_147 [1] : vector<2x10xf32> to vector<2xf32>
    %422 = vector.shape_cast %421 : vector<2xf32> to vector<2x1xf32>
    %423 = vector.broadcast %422 : vector<2x1xf32> to vector<2x10xf32>
    %424 = arith.subf %420, %423 : vector<2x10xf32>
    %425 = math.exp %424 : vector<2x10xf32>
    %cst_148 = arith.constant dense<0.000000e+00> : vector<2xf32>
    %426 = vector.multi_reduction <add>, %425, %cst_148 [1] : vector<2x10xf32> to vector<2xf32>
    %427 = vector.shape_cast %426 : vector<2xf32> to vector<2x1xf32>
    %428 = vector.broadcast %427 : vector<2x1xf32> to vector<2x10xf32>
    %429 = arith.divf %425, %428 : vector<2x10xf32>
    %430 = vector.extract_strided_slice %419 {offsets = [0, 10], sizes = [2, 4], strides = [1, 1]} : vector<2x128xf32> to vector<2x4xf32>
    %cst_149 = arith.constant 5.000000e-01 : f32
    %431 = vector.broadcast %cst_149 : f32 to vector<2x4xf32>
    %432 = arith.mulf %431, %430 : vector<2x4xf32>
    %433 = math.tanh %432 : vector<2x4xf32>
    %cst_150 = arith.constant 1.000000e+00 : f32
    %434 = vector.broadcast %cst_150 : f32 to vector<2x4xf32>
    %435 = arith.addf %433, %434 : vector<2x4xf32>
    %cst_151 = arith.constant 5.000000e-01 : f32
    %436 = vector.broadcast %cst_151 : f32 to vector<2x4xf32>
    %437 = arith.mulf %436, %435 : vector<2x4xf32>
    %438 = tpu.concatenate %429, %437 in 1 : vector<2x10xf32>, vector<2x4xf32> -> vector<2x14xf32>
    %c0_152 = arith.constant 0 : index
    %c0_153 = arith.constant 0 : index
    %439 = vector.load %arg2[%c0_152, %c0_153] : memref<2x14xf32, #tpu.memory_space<vmem>>, vector<2x14xf32>
    tpu.vector_store %arg2[%c0_152, %c0_153], %438 {strides = array<i32>} : memref<2x14xf32, #tpu.memory_space<vmem>>, vector<2x14xf32>,
    return
  }
}

</mosaic_0001>

<llo_original>
// kernel: fused_forward.1
$region0: #{fused_forward.1}
  #allocation0 [shape = 'u32[]', space=smem, size = 0x4, offset = 0x4, fixed_abs, tag = 'smem constant byte address 0x4 - core index']
  #allocation1 [shape = 'u32[144,128]{1,0:T(1,128)}', space=vmem, size = 0x12000, scoped, tag = 'internal scratch']
  %s0 = inlined_call_operand.vmem [shape: f32[36,48], index: 0, kind: input, shape index: {}]
  %s1 = inlined_call_operand.hbm [shape: bf16[2176,128], index: 1, kind: input, shape index: {}]
  %s2 = inlined_call_operand.vmem [shape: f32[2,14], index: 2, kind: output, shape index: {}]
  %s3 = sld [smem:[#allocation0]]
  $region22: #{fused_forward.1} parent=0
    _
  %s5 = ssub.s32 1, %s3
  %s6 = scalar_select 0, %s5, %s3
  $region1: #{fused_forward.1} parent=0
    #allocation2 [shape = 'u8[557056]{0}', space=vmem, size = 0x88000, scoped, tag = 'input window, operand 1, single buffered']
    #allocation3 [shape = 's32[1]{0}', space=sflag, size = 0x4, scoped, tag = 'scoped memory for fused_forward.1']
    %7 = vsyncpa [#allocation3], 0
    // Predicated region
    $region2: #{fused_forward.1} parent=1 // pred_check
      _
    $region3: #{fused_forward.1} parent=1 // pred_check_branch
      %9 = sbr.rel (0) target = $region5
    $region4: #{fused_forward.1} parent=1 // pred_region
      _
    $region5: #{fused_forward.1} parent=1 // pred_fallthru
      _
    // Predicated region
    $region6: #{fused_forward.1} parent=1 // pred_check
      _
    $region7: #{fused_forward.1} parent=1 // pred_check_branch
      %11 = sbr.rel (0) target = $region9
    $region8: #{fused_forward.1} parent=1 // pred_region
      %s13 = ssub.s32 17408, 17408
      %14 = vsyncadd [#allocation3], %s13
      %s15 = sshll.u32 [#allocation2], 4
      %s16 = int_to_ptr.vmem [resolvable:$true] %s15
      %21 = dma.hbm_to_vmem [thread:$0]  %s1, 17408, %s16, [#allocation3], 64, 64, 4
    $region9: #{fused_forward.1} parent=1 // pred_fallthru
      _
    // Predicated region
    $region10: #{fused_forward.1} parent=1 // pred_check
      _
    $region11: #{fused_forward.1} parent=1 // pred_check_branch
      %23 = sbr.rel (0) target = $region13
    $region12: #{fused_forward.1} parent=1 // pred_region
      %24 = dma.done [#allocation3], 17408
    $region13: #{fused_forward.1} parent=1 // pred_fallthru
      _
    %v26 = vld [vmem:[%s0] sm:$0xff]
    %v27 = vld [vmem:[%s0 + $0x8] sm:$0xff]
    %v28 = vld [vmem:[%s0 + $0x10] sm:$0xff]
    %v29 = vld [vmem:[%s0 + $0x18] sm:$0xff]
    %v30 = vld [vmem:[%s0 + $0x20] sm:$0xf]
    %v31 = vpack.c.bf16 %v27, %v26
    %v32 = vpack.c.bf16 %v29, %v28
    %v33 = vpack.c.bf16 %v30, %v30
    %v34 = vld [vmem:[#allocation2] sm:$0xf]
    %v35 = vld [vmem:[#allocation2 + $0x4] sm:$0xf]
    %v36 = vld [vmem:[#allocation2 + $0x8] sm:$0xf]
    %v37 = vld [vmem:[#allocation2 + $0xc] sm:$0xf]
    %v38 = vld [vmem:[#allocation2 + $0x10] sm:$0xf]
    %v39 = vld [vmem:[#allocation2 + $0x14] sm:$0xf]
    %v40 = vld [vmem:[#allocation2 + $0x18] sm:$0xf]
    %v41 = vld [vmem:[#allocation2 + $0x1c] sm:$0xf]
    %v42 = vld [vmem:[#allocation2 + $0x20] sm:$0xf]
    %v43 = vld [vmem:[#allocation2 + $0x24] sm:$0xf]
    %v44 = vld [vmem:[#allocation2 + $0x28] sm:$0xf]
    %v45 = vld [vmem:[#allocation2 + $0x2c] sm:$0xf]
    %vm46 = vsmask.f32 7424
    %v48 = vshrl.u32 %v31, 16
    %v50 = vshll.u32 %v31, 16
    %v52 = vrot.slane %v50, 1
    %v53 = vor.u32 %v48, %v52
    %v55 = vshll.u32 %v32, 16
    %v57 = vrot.slane %v55, 1
    %v58 = vsel %vm46, %v53, %v57
    %v59 = vshrl.u32 %v32, 16
    %v61 = vor.u32 %v59, %v57
    %v63 = vshll.u32 %v33, 16
    %v65 = vrot.slane %v63, 1
    %v66 = vsel %vm46, %v61, %v65
    %v67 = vshrl.u32 %v33, 16
    %v69 = vor.u32 %v67, %v65
    %v76 = vunpack.c.l.b16 %v40
    %v77 = vunpack.c.l.b16 %v41
    %v78 = vunpack.c.l.b16 %v42
    %v79 = vunpack.c.l.b16 %v43
    %v80 = vunpack.c.l.b16 %v44
    %v81 = vunpack.c.l.b16 %v45
    %v82 = vpack.c.b16 %v77, %v76
    %v83 = vpack.c.b16 %v79, %v78
    %v84 = vpack.c.b16 %v81, %v80
    %vm88 = vcmask 392192
    %v90 = vsel %vm88, %v58, 0
    %v93 = vsel %vm88, %v66, 0
    %v96 = vsel %vm88, %v69, 0
    %98 = vmatprep.subr.bf16.mxu0 0
    %99 = vmatpush1.bf16.msra.mxu0 0
    %100 = vmatprep.subr.bf16.mxu0 0
    %101 = vmatpush1.bf16.msra.mxu0 0
    %102 = vmatprep.subr.bf16.mxu0 0
    %103 = vmatpush1.bf16.msra.mxu0 0
    %104 = vmatprep.subr.bf16.mxu0 0
    %105 = vmatpush1.bf16.msra.mxu0 0
    %106 = vmatprep.subr.bf16.mxu0 0
    %107 = vmatpush1.bf16.msra.mxu0 0
    %108 = vmatprep.subr.bf16.mxu0 0
    %109 = vmatpush1.bf16.msra.mxu0 %v84
    %110 = vmatprep.subr.bf16.mxu0 0
    %111 = vmatpush1.bf16.msra.mxu0 %v83
    %112 = vmatprep.subr.bf16.mxu0 0
    %113 = vmatpush1.bf16.msra.mxu0 %v82
    %114 = vmatprep.subr.bf16.mxu0 0
    %115 = vmatpush2.bf16.msra.mxu0 0
    %116 = vmatprep.subr.bf16.mxu0 0
    %117 = vmatpush2.bf16.msra.mxu0 0
    %118 = vmatprep.subr.bf16.mxu0 0
    %119 = vmatpush2.bf16.msra.mxu0 0
    %120 = vmatprep.subr.bf16.mxu0 0
    %121 = vmatpush2.bf16.msra.mxu0 0
    %122 = vmatprep.subr.bf16.mxu0 0
    %123 = vmatpush2.bf16.msra.mxu0 0
    %124 = vmatprep.subr.bf16.mxu0 0
    %125 = vmatpush2.bf16.msra.mxu0 0
    %126 = vmatprep.subr.bf16.mxu0 0
    %127 = vmatpush2.bf16.msra.mxu0 0
    %128 = vmatprep.subr.bf16.mxu0 0
    %129 = vmatpush2.bf16.msra.mxu0 0
    %130 = vmatprep.mubr.bf16.mxu0 0
    %131 = vmatmul.mubr.bf16.gmra.mxu0 %v90
    %v132 = vpop.f32.mrf.mxu0
    %v133 = vadd.f32 0.0, %v132
    %v134 = vpop.f32.mrf.mxu0
    %v135 = vpop.f32.mrf.mxu0
    %v136 = vadd.f32 0.0, %v135
    %v137 = vpop.f32.mrf.mxu0
    %138 = vmatprep.mubr.bf16.mxu0 0
    %139 = vmatmul.mubr.bf16.gmra.mxu0 %v93
    %v140 = vpop.f32.mrf.mxu0
    %v141 = vadd.f32 0.0, %v140
    %v142 = vpop.f32.mrf.mxu0
    %v143 = vpop.f32.mrf.mxu0
    %v144 = vadd.f32 0.0, %v143
    %v145 = vpop.f32.mrf.mxu0
    %146 = vmatprep.mubr.bf16.mxu0 0
    %147 = vmatmul.mubr.bf16.gmra.mxu0 %v96
    %v148 = vpop.f32.mrf.mxu0
    %v149 = vadd.f32 0.0, %v148
    %v150 = vpop.f32.mrf.mxu0
    %v151 = vpop.f32.mrf.mxu0
    %v152 = vpop.f32.mrf.mxu0
    %153 = vdwg.mxu0
    %v160 = vunpack.c.l.b16 %v34
    %v161 = vunpack.c.l.b16 %v35
    %v162 = vunpack.c.l.b16 %v36
    %v163 = vunpack.c.l.b16 %v37
    %v164 = vunpack.c.l.b16 %v38
    %v165 = vunpack.c.l.b16 %v39
    %v166 = vpack.c.b16 %v161, %v160
    %v167 = vpack.c.b16 %v163, %v162
    %v168 = vpack.c.b16 %v165, %v164
    %v172 = vsel %vm88, %v31, 0
    %v174 = vsel %vm88, %v32, 0
    %v176 = vsel %vm88, %v33, 0
    %178 = vmatprep.subr.bf16.mxu0 0
    %179 = vmatpush1.bf16.msra.mxu0 0
    %180 = vmatprep.subr.bf16.mxu0 0
    %181 = vmatpush1.bf16.msra.mxu0 0
    %182 = vmatprep.subr.bf16.mxu0 0
    %183 = vmatpush1.bf16.msra.mxu0 0
    %184 = vmatprep.subr.bf16.mxu0 0
    %185 = vmatpush1.bf16.msra.mxu0 0
    %186 = vmatprep.subr.bf16.mxu0 0
    %187 = vmatpush1.bf16.msra.mxu0 0
    %188 = vmatprep.subr.bf16.mxu0 0
    %189 = vmatpush1.bf16.msra.mxu0 %v168
    %190 = vmatprep.subr.bf16.mxu0 0
    %191 = vmatpush1.bf16.msra.mxu0 %v167
    %192 = vmatprep.subr.bf16.mxu0 0
    %193 = vmatpush1.bf16.msra.mxu0 %v166
    %194 = vmatprep.subr.bf16.mxu0 0
    %195 = vmatpush2.bf16.msra.mxu0 0
    %196 = vmatprep.subr.bf16.mxu0 0
    %197 = vmatpush2.bf16.msra.mxu0 0
    %198 = vmatprep.subr.bf16.mxu0 0
    %199 = vmatpush2.bf16.msra.mxu0 0
    %200 = vmatprep.subr.bf16.mxu0 0
    %201 = vmatpush2.bf16.msra.mxu0 0
    %202 = vmatprep.subr.bf16.mxu0 0
    %203 = vmatpush2.bf16.msra.mxu0 0
    %204 = vmatprep.subr.bf16.mxu0 0
    %205 = vmatpush2.bf16.msra.mxu0 0
    %206 = vmatprep.subr.bf16.mxu0 0
    %207 = vmatpush2.bf16.msra.mxu0 0
    %208 = vmatprep.subr.bf16.mxu0 0
    %209 = vmatpush2.bf16.msra.mxu0 0
    %210 = vmatprep.mubr.bf16.mxu0 0
    %211 = vmatmul.mubr.bf16.gmra.mxu0 %v172
    %v212 = vpop.f32.mrf.mxu0
    %v213 = vadd.f32 %v133, %v212
    %v214 = vpop.f32.mrf.mxu0
    %v215 = vpop.f32.mrf.mxu0
    %v216 = vadd.f32 %v136, %v215
    %v217 = vpop.f32.mrf.mxu0
    %218 = vmatprep.mubr.bf16.mxu0 0
    %219 = vmatmul.mubr.bf16.gmra.mxu0 %v174
    %v220 = vpop.f32.mrf.mxu0
    %v221 = vadd.f32 %v141, %v220
    %v222 = vpop.f32.mrf.mxu0
    %v223 = vpop.f32.mrf.mxu0
    %v224 = vadd.f32 %v144, %v223
    %v225 = vpop.f32.mrf.mxu0
    %226 = vmatprep.mubr.bf16.mxu0 0
    %227 = vmatmul.mubr.bf16.gmra.mxu0 %v176
    %v228 = vpop.f32.mrf.mxu0
    %v229 = vadd.f32 %v149, %v228
    %v230 = vpop.f32.mrf.mxu0
    %v231 = vpop.f32.mrf.mxu0
    %v232 = vpop.f32.mrf.mxu0
    %233 = vdwg.mxu0
    %v234 = vld [vmem:[#allocation2 + $0x30] sm:$0xf]
    %v235 = vld [vmem:[#allocation2 + $0x34] sm:$0xf]
    %v236 = vld [vmem:[#allocation2 + $0x38] sm:$0xf]
    %v237 = vld [vmem:[#allocation2 + $0x3c] sm:$0xf]
    %v238 = vld [vmem:[#allocation2 + $0x40] sm:$0xf]
    %v239 = vld [vmem:[#allocation2 + $0x44] sm:$0xf]
    %vm243 = vcmask 1046528
    %v244 = vrot.slane %v31, 1
    %v245 = vrot.slane %v32, 1
    %v246 = vsel %vm243, %v244, %v245
    %v247 = vrot.slane %v33, 1
    %v248 = vsel %vm243, %v245, %v247
    %v255 = vunpack.c.l.b16 %v234
    %v256 = vunpack.c.l.b16 %v235
    %v257 = vunpack.c.l.b16 %v236
    %v258 = vunpack.c.l.b16 %v237
    %v259 = vunpack.c.l.b16 %v238
    %v260 = vunpack.c.l.b16 %v239
    %v261 = vpack.c.b16 %v256, %v255
    %v262 = vpack.c.b16 %v258, %v257
    %v263 = vpack.c.b16 %v260, %v259
    %v268 = vsel %vm88, %v246, 0
    %v271 = vsel %vm88, %v248, 0
    %v274 = vsel %vm88, %v247, 0
    %276 = vmatprep.subr.bf16.mxu0 0
    %277 = vmatpush1.bf16.msra.mxu0 0
    %278 = vmatprep.subr.bf16.mxu0 0
    %279 = vmatpush1.bf16.msra.mxu0 0
    %280 = vmatprep.subr.bf16.mxu0 0
    %281 = vmatpush1.bf16.msra.mxu0 0
    %282 = vmatprep.subr.bf16.mxu0 0
    %283 = vmatpush1.bf16.msra.mxu0 0
    %284 = vmatprep.subr.bf16.mxu0 0
    %285 = vmatpush1.bf16.msra.mxu0 0
    %286 = vmatprep.subr.bf16.mxu0 0
    %287 = vmatpush1.bf16.msra.mxu0 %v263
    %288 = vmatprep.subr.bf16.mxu0 0
    %289 = vmatpush1.bf16.msra.mxu0 %v262
    %290 = vmatprep.subr.bf16.mxu0 0
    %291 = vmatpush1.bf16.msra.mxu0 %v261
    %292 = vmatprep.subr.bf16.mxu0 0
    %293 = vmatpush2.bf16.msra.mxu0 0
    %294 = vmatprep.subr.bf16.mxu0 0
    %295 = vmatpush2.bf16.msra.mxu0 0
    %296 = vmatprep.subr.bf16.mxu0 0
    %297 = vmatpush2.bf16.msra.mxu0 0
    %298 = vmatprep.subr.bf16.mxu0 0
    %299 = vmatpush2.bf16.msra.mxu0 0
    %300 = vmatprep.subr.bf16.mxu0 0
    %301 = vmatpush2.bf16.msra.mxu0 0
    %302 = vmatprep.subr.bf16.mxu0 0
    %303 = vmatpush2.bf16.msra.mxu0 0
    %304 = vmatprep.subr.bf16.mxu0 0
    %305 = vmatpush2.bf16.msra.mxu0 0
    %306 = vmatprep.subr.bf16.mxu0 0
    %307 = vmatpush2.bf16.msra.mxu0 0
    %308 = vmatprep.mubr.bf16.mxu0 0
    %309 = vmatmul.mubr.bf16.gmra.mxu0 %v268
    %v310 = vpop.f32.mrf.mxu0
    %v311 = vadd.f32 0.0, %v310
    %v312 = vpop.f32.mrf.mxu0
    %v313 = vpop.f32.mrf.mxu0
    %v314 = vadd.f32 0.0, %v313
    %v315 = vpop.f32.mrf.mxu0
    %316 = vmatprep.mubr.bf16.mxu0 0
    %317 = vmatmul.mubr.bf16.gmra.mxu0 %v271
    %v318 = vpop.f32.mrf.mxu0
    %v319 = vadd.f32 0.0, %v318
    %v320 = vpop.f32.mrf.mxu0
    %v321 = vpop.f32.mrf.mxu0
    %v322 = vadd.f32 0.0, %v321
    %v323 = vpop.f32.mrf.mxu0
    %324 = vmatprep.mubr.bf16.mxu0 0
    %325 = vmatmul.mubr.bf16.gmra.mxu0 %v274
    %v326 = vpop.f32.mrf.mxu0
    %v327 = vadd.f32 0.0, %v326
    %v328 = vpop.f32.mrf.mxu0
    %v329 = vpop.f32.mrf.mxu0
    %v330 = vpop.f32.mrf.mxu0
    %331 = vdwg.mxu0
    %v332 = vadd.f32 %v213, %v311
    %v333 = vadd.f32 %v216, %v314
    %v334 = vadd.f32 %v221, %v319
    %v335 = vadd.f32 %v224, %v322
    %v336 = vadd.f32 %v229, %v327
    %v337 = vld [vmem:[#allocation2 + $0x48] sm:$0x1]
    %v338 = vunpack.c.l.bf16 %v337
    %v339 = vlaneseq
    %v340 = vshrl.u32 %v339, 7
    %v341 = vsub.s32 0, %v340
    %v342 = vrot.slane %v338, %v341
    %v343 = vadd.f32 %v332, %v342
    %v344 = vadd.f32 %v333, %v342
    %v345 = vadd.f32 %v334, %v342
    %v346 = vadd.f32 %v335, %v342
    %v347 = vadd.f32 %v336, %v342
    %v348 = vmax.f32 %v343, 0.0
    %v349 = vmax.f32 %v344, 0.0
    %v350 = vmax.f32 %v345, 0.0
    %v351 = vmax.f32 %v346, 0.0
    %v352 = vmax.f32 %v347, 0.0
    %v353 = vlaneseq
    %v354 = vshrl.u32 %v353, 7
    %v355 = vadd.s32 %v354, 8
    %v356 = vadd.s32 %v354, 16
    %v357 = vadd.s32 %v354, 24
    %v358 = vadd.s32 %v354, 32
    %v359 = vlaneseq
    %v360 = vand.u32 %v359, 127
    %vm361 = vcmp.ge.s32.totalorder %v354, 18
    %vm362 = vcmp.ge.s32.totalorder %v355, 18
    %vm363 = vcmp.ge.s32.totalorder %v356, 18
    %vm364 = vcmp.ge.s32.totalorder %v357, 18
    %vm365 = vcmp.ge.s32.totalorder %v358, 18
    %v366 = vsel %vm361, 1, 0
    %v367 = vsel %vm362, 1, 0
    %v368 = vsel %vm363, 1, 0
    %v369 = vsel %vm364, 1, 0
    %v370 = vsel %vm365, 1, 0
    %v371 = vmul.u32 %v366, 18
    %v372 = vmul.u32 %v367, 18
    %v373 = vmul.u32 %v368, 18
    %v374 = vmul.u32 %v369, 18
    %v375 = vmul.u32 %v370, 18
    %v376 = vsub.s32 %v354, %v371
    %v377 = vsub.s32 %v355, %v372
    %v378 = vsub.s32 %v356, %v373
    %v379 = vsub.s32 %v357, %v374
    %v380 = vsub.s32 %v358, %v375
    %v381 = vsub.s32 %v376, 1
    %v382 = vsub.s32 %v377, 1
    %v383 = vsub.s32 %v378, 1
    %v384 = vsub.s32 %v379, 1
    %v385 = vsub.s32 %v380, 1
    %vm386 = vcmp.ge.s32.totalorder %v381, 0
    %vm387 = vcmp.ge.s32.totalorder %v382, 0
    %vm388 = vcmp.ge.s32.totalorder %v383, 0
    %vm389 = vcmp.ge.s32.totalorder %v384, 0
    %vm390 = vcmp.ge.s32.totalorder %v385, 0
    %vm391 = vcmp.lt.s32.totalorder %v381, 16
    %vm392 = vcmp.lt.s32.totalorder %v382, 16
    %vm393 = vcmp.lt.s32.totalorder %v383, 16
    %vm394 = vcmp.lt.s32.totalorder %v384, 16
    %vm395 = vcmp.lt.s32.totalorder %v385, 16
    %vm396 = vmand %vm386, %vm391
    %vm397 = vmand %vm387, %vm392
    %vm398 = vmand %vm388, %vm393
    %vm399 = vmand %vm389, %vm394
    %vm400 = vmand %vm390, %vm395
    %v401 = vadd.s32 %v371, %v381
    %v402 = vadd.s32 %v372, %v382
    %v403 = vadd.s32 %v373, %v383
    %v404 = vadd.s32 %v374, %v384
    %v405 = vadd.s32 %v375, %v385
    %vm406 = vcmp.eq.s32.totalorder %v360, %v401
    %vm407 = vcmp.eq.s32.totalorder %v360, %v402
    %vm408 = vcmp.eq.s32.totalorder %v360, %v403
    %vm409 = vcmp.eq.s32.totalorder %v360, %v404
    %vm410 = vcmp.eq.s32.totalorder %v360, %v405
    %vm411 = vmand %vm396, %vm406
    %vm412 = vmand %vm397, %vm407
    %vm413 = vmand %vm398, %vm408
    %vm414 = vmand %vm399, %vm409
    %vm415 = vmand %vm400, %vm410
    %v416 = vsel %vm411, 1.0, 0.0
    %v417 = vsel %vm412, 1.0, 0.0
    %v418 = vsel %vm413, 1.0, 0.0
    %v419 = vsel %vm414, 1.0, 0.0
    %v420 = vsel %vm415, 1.0, 0.0
    %v421 = vpack.c.bf16 %v417, %v416
    %v422 = vpack.c.bf16 %v419, %v418
    %v423 = vpack.c.bf16 %v420, %v420
    %v424 = vpack.c.bf16 %v349, %v348
    %v425 = vpack.c.bf16 %v351, %v350
    %v426 = vpack.c.bf16 %v352, %v352
    %vm427 = vcmask 277504
    %v429 = vsel %vm427, %v421, 0
    %v432 = vsel %vm427, %v422, 0
    %v435 = vsel %vm427, %v423, 0
    %vm437 = vcmask 1040384
    %v439 = vsel %vm437, %v426, 0
    %441 = vmatprep.subr.bf16.mxu0 0
    %442 = vmatpush1.bf16.msra.mxu0 0
    %443 = vmatprep.subr.bf16.mxu0 0
    %444 = vmatpush1.bf16.msra.mxu0 0
    %445 = vmatprep.subr.bf16.mxu0 0
    %446 = vmatpush1.bf16.msra.mxu0 0
    %447 = vmatprep.subr.bf16.mxu0 0
    %448 = vmatpush1.bf16.msra.mxu0 0
    %449 = vmatprep.subr.bf16.mxu0 0
    %450 = vmatpush1.bf16.msra.mxu0 0
    %451 = vmatprep.subr.bf16.mxu0 0
    %452 = vmatpush1.bf16.msra.mxu0 %v439
    %453 = vmatprep.subr.bf16.mxu0 0
    %454 = vmatpush1.bf16.msra.mxu0 %v425
    %455 = vmatprep.subr.bf16.mxu0 0
    %456 = vmatpush1.bf16.msra.mxu0 %v424
    %457 = vmatprep.subr.bf16.mxu0 0
    %458 = vmatpush2.bf16.msra.mxu0 0
    %459 = vmatprep.subr.bf16.mxu0 0
    %460 = vmatpush2.bf16.msra.mxu0 0
    %461 = vmatprep.subr.bf16.mxu0 0
    %462 = vmatpush2.bf16.msra.mxu0 0
    %463 = vmatprep.subr.bf16.mxu0 0
    %464 = vmatpush2.bf16.msra.mxu0 0
    %465 = vmatprep.subr.bf16.mxu0 0
    %466 = vmatpush2.bf16.msra.mxu0 0
    %467 = vmatprep.subr.bf16.mxu0 0
    %468 = vmatpush2.bf16.msra.mxu0 0
    %469 = vmatprep.subr.bf16.mxu0 0
    %470 = vmatpush2.bf16.msra.mxu0 0
    %471 = vmatprep.subr.bf16.mxu0 0
    %472 = vmatpush2.bf16.msra.mxu0 0
    %473 = vmatprep.mubr.bf16.mxu0 0
    %474 = vmatmul.mubr.bf16.gmra.mxu0 %v429
    %v475 = vpop.f32.mrf.mxu0
    %v476 = vadd.f32 0.0, %v475
    %v477 = vpop.f32.mrf.mxu0
    %v478 = vpop.f32.mrf.mxu0
    %v479 = vadd.f32 0.0, %v478
    %v480 = vpop.f32.mrf.mxu0
    %481 = vmatprep.mubr.bf16.mxu0 0
    %482 = vmatmul.mubr.bf16.gmra.mxu0 %v432
    %v483 = vpop.f32.mrf.mxu0
    %v484 = vadd.f32 0.0, %v483
    %v485 = vpop.f32.mrf.mxu0
    %v486 = vpop.f32.mrf.mxu0
    %v487 = vadd.f32 0.0, %v486
    %v488 = vpop.f32.mrf.mxu0
    %489 = vmatprep.mubr.bf16.mxu0 0
    %490 = vmatmul.mubr.bf16.gmra.mxu0 %v435
    %v491 = vpop.f32.mrf.mxu0
    %v492 = vadd.f32 0.0, %v491
    %v493 = vpop.f32.mrf.mxu0
    %v494 = vpop.f32.mrf.mxu0
    %v495 = vpop.f32.mrf.mxu0
    %496 = vdwg.mxu0
    %v497 = vpack.c.bf16 %v479, %v476
    %v498 = vpack.c.bf16 %v487, %v484
    %v499 = vpack.c.bf16 %v492, %v492
    %v500 = vld [vmem:[#allocation2 + $0x50] sm:$0xf]
    %v501 = vld [vmem:[#allocation2 + $0x54] sm:$0xf]
    %v502 = vld [vmem:[#allocation2 + $0x58] sm:$0xf]
    %v503 = vld [vmem:[#allocation2 + $0x5c] sm:$0xf]
    %v504 = vld [vmem:[#allocation2 + $0x60] sm:$0xf]
    %v505 = vld [vmem:[#allocation2 + $0x64] sm:$0xf]
    %v506 = vld [vmem:[#allocation2 + $0x68] sm:$0xf]
    %v507 = vld [vmem:[#allocation2 + $0x6c] sm:$0xf]
    %v508 = vld [vmem:[#allocation2 + $0x70] sm:$0xf]
    %v509 = vld [vmem:[#allocation2 + $0x74] sm:$0xf]
    %v510 = vld [vmem:[#allocation2 + $0x78] sm:$0xf]
    %v511 = vld [vmem:[#allocation2 + $0x7c] sm:$0xf]
    %v512 = vld [vmem:[#allocation2 + $0x80] sm:$0xf]
    %v513 = vld [vmem:[#allocation2 + $0x84] sm:$0xf]
    %v514 = vld [vmem:[#allocation2 + $0x88] sm:$0xf]
    %v515 = vld [vmem:[#allocation2 + $0x8c] sm:$0xf]
    %v516 = vld [vmem:[#allocation2 + $0x90] sm:$0xf]
    %v517 = vld [vmem:[#allocation2 + $0x94] sm:$0xf]
    %v518 = vld [vmem:[#allocation2 + $0x98] sm:$0xf]
    %v519 = vld [vmem:[#allocation2 + $0x9c] sm:$0xf]
    %v520 = vld [vmem:[#allocation2 + $0xa0] sm:$0xf]
    %v521 = vld [vmem:[#allocation2 + $0xa4] sm:$0xf]
    %v522 = vld [vmem:[#allocation2 + $0xa8] sm:$0xf]
    %v523 = vld [vmem:[#allocation2 + $0xac] sm:$0xf]
    %v524 = vld [vmem:[#allocation2 + $0xb0] sm:$0xf]
    %v525 = vld [vmem:[#allocation2 + $0xb4] sm:$0xf]
    %v526 = vld [vmem:[#allocation2 + $0xb8] sm:$0xf]
    %v527 = vld [vmem:[#allocation2 + $0xbc] sm:$0xf]
    %v528 = vld [vmem:[#allocation2 + $0xc0] sm:$0xf]
    %v529 = vld [vmem:[#allocation2 + $0xc4] sm:$0xf]
    %v530 = vld [vmem:[#allocation2 + $0xc8] sm:$0xf]
    %v531 = vld [vmem:[#allocation2 + $0xcc] sm:$0xf]
    %v533 = vshrl.u32 %v497, 16
    %v535 = vshll.u32 %v497, 16
    %v537 = vrot.slane %v535, 1
    %v538 = vor.u32 %v533, %v537
    %v540 = vshll.u32 %v498, 16
    %v542 = vrot.slane %v540, 1
    %v543 = vsel %vm46, %v538, %v542
    %v544 = vshrl.u32 %v498, 16
    %v546 = vor.u32 %v544, %v542
    %v548 = vshll.u32 %v499, 16
    %v550 = vrot.slane %v548, 1
    %v551 = vsel %vm46, %v546, %v550
    %v552 = vshrl.u32 %v499, 16
    %v554 = vor.u32 %v552, %v550
    %v574 = vunpack.c.l.b16 %v516
    %v575 = vunpack.c.l.b16 %v517
    %v576 = vunpack.c.l.b16 %v518
    %v577 = vunpack.c.l.b16 %v519
    %v578 = vunpack.c.l.b16 %v520
    %v579 = vunpack.c.l.b16 %v521
    %v580 = vunpack.c.l.b16 %v522
    %v581 = vunpack.c.l.b16 %v523
    %v582 = vunpack.c.l.b16 %v524
    %v583 = vunpack.c.l.b16 %v525
    %v584 = vunpack.c.l.b16 %v526
    %v585 = vunpack.c.l.b16 %v527
    %v586 = vunpack.c.l.b16 %v528
    %v587 = vunpack.c.l.b16 %v529
    %v588 = vunpack.c.l.b16 %v530
    %v589 = vunpack.c.l.b16 %v531
    %v590 = vpack.c.b16 %v575, %v574
    %v591 = vpack.c.b16 %v577, %v576
    %v592 = vpack.c.b16 %v579, %v578
    %v593 = vpack.c.b16 %v581, %v580
    %v594 = vpack.c.b16 %v583, %v582
    %v595 = vpack.c.b16 %v585, %v584
    %v596 = vpack.c.b16 %v587, %v586
    %v597 = vpack.c.b16 %v589, %v588
    %606 = vmatprep.subr.bf16.mxu0 0
    %607 = vmatpush1.bf16.msra.mxu0 %v597
    %608 = vmatprep.subr.bf16.mxu0 0
    %609 = vmatpush1.bf16.msra.mxu0 %v596
    %610 = vmatprep.subr.bf16.mxu0 0
    %611 = vmatpush1.bf16.msra.mxu0 %v595
    %612 = vmatprep.subr.bf16.mxu0 0
    %613 = vmatpush1.bf16.msra.mxu0 %v594
    %614 = vmatprep.subr.bf16.mxu0 0
    %615 = vmatpush1.bf16.msra.mxu0 %v593
    %616 = vmatprep.subr.bf16.mxu0 0
    %617 = vmatpush1.bf16.msra.mxu0 %v592
    %618 = vmatprep.subr.bf16.mxu0 0
    %619 = vmatpush1.bf16.msra.mxu0 %v591
    %620 = vmatprep.subr.bf16.mxu0 0
    %621 = vmatpush1.bf16.msra.mxu0 %v590
    %622 = vmatprep.subr.bf16.mxu0 0
    %623 = vmatpush2.bf16.msra.mxu0 0
    %624 = vmatprep.subr.bf16.mxu0 0
    %625 = vmatpush2.bf16.msra.mxu0 0
    %626 = vmatprep.subr.bf16.mxu0 0
    %627 = vmatpush2.bf16.msra.mxu0 0
    %628 = vmatprep.subr.bf16.mxu0 0
    %629 = vmatpush2.bf16.msra.mxu0 0
    %630 = vmatprep.subr.bf16.mxu0 0
    %631 = vmatpush2.bf16.msra.mxu0 0
    %632 = vmatprep.subr.bf16.mxu0 0
    %633 = vmatpush2.bf16.msra.mxu0 0
    %634 = vmatprep.subr.bf16.mxu0 0
    %635 = vmatpush2.bf16.msra.mxu0 0
    %636 = vmatprep.subr.bf16.mxu0 0
    %637 = vmatpush2.bf16.msra.mxu0 0
    %638 = vmatprep.mubr.bf16.mxu0 0
    %639 = vmatmul.mubr.bf16.gmra.mxu0 %v543
    %v640 = vpop.f32.mrf.mxu0
    %v641 = vadd.f32 0.0, %v640
    %v642 = vpop.f32.mrf.mxu0
    %v643 = vpop.f32.mrf.mxu0
    %v644 = vadd.f32 0.0, %v643
    %v645 = vpop.f32.mrf.mxu0
    %646 = vmatprep.mubr.bf16.mxu0 0
    %647 = vmatmul.mubr.bf16.gmra.mxu0 %v551
    %v648 = vpop.f32.mrf.mxu0
    %v649 = vadd.f32 0.0, %v648
    %v650 = vpop.f32.mrf.mxu0
    %v651 = vpop.f32.mrf.mxu0
    %v652 = vadd.f32 0.0, %v651
    %v653 = vpop.f32.mrf.mxu0
    %654 = vmatprep.mubr.bf16.mxu0 0
    %655 = vmatmul.mubr.bf16.gmra.mxu0 %v554
    %v656 = vpop.f32.mrf.mxu0
    %v657 = vadd.f32 0.0, %v656
    %v658 = vpop.f32.mrf.mxu0
    %v659 = vpop.f32.mrf.mxu0
    %v660 = vpop.f32.mrf.mxu0
    %661 = vdwg.mxu0
    %v678 = vunpack.c.l.b16 %v500
    %v679 = vunpack.c.l.b16 %v501
    %v680 = vunpack.c.l.b16 %v502
    %v681 = vunpack.c.l.b16 %v503
    %v682 = vunpack.c.l.b16 %v504
    %v683 = vunpack.c.l.b16 %v505
    %v684 = vunpack.c.l.b16 %v506
    %v685 = vunpack.c.l.b16 %v507
    %v686 = vunpack.c.l.b16 %v508
    %v687 = vunpack.c.l.b16 %v509
    %v688 = vunpack.c.l.b16 %v510
    %v689 = vunpack.c.l.b16 %v511
    %v690 = vunpack.c.l.b16 %v512
    %v691 = vunpack.c.l.b16 %v513
    %v692 = vunpack.c.l.b16 %v514
    %v693 = vunpack.c.l.b16 %v515
    %v694 = vpack.c.b16 %v679, %v678
    %v695 = vpack.c.b16 %v681, %v680
    %v696 = vpack.c.b16 %v683, %v682
    %v697 = vpack.c.b16 %v685, %v684
    %v698 = vpack.c.b16 %v687, %v686
    %v699 = vpack.c.b16 %v689, %v688
    %v700 = vpack.c.b16 %v691, %v690
    %v701 = vpack.c.b16 %v693, %v692
    %710 = vmatprep.subr.bf16.mxu0 0
    %711 = vmatpush1.bf16.msra.mxu0 %v701
    %712 = vmatprep.subr.bf16.mxu0 0
    %713 = vmatpush1.bf16.msra.mxu0 %v700
    %714 = vmatprep.subr.bf16.mxu0 0
    %715 = vmatpush1.bf16.msra.mxu0 %v699
    %716 = vmatprep.subr.bf16.mxu0 0
    %717 = vmatpush1.bf16.msra.mxu0 %v698
    %718 = vmatprep.subr.bf16.mxu0 0
    %719 = vmatpush1.bf16.msra.mxu0 %v697
    %720 = vmatprep.subr.bf16.mxu0 0
    %721 = vmatpush1.bf16.msra.mxu0 %v696
    %722 = vmatprep.subr.bf16.mxu0 0
    %723 = vmatpush1.bf16.msra.mxu0 %v695
    %724 = vmatprep.subr.bf16.mxu0 0
    %725 = vmatpush1.bf16.msra.mxu0 %v694
    %726 = vmatprep.subr.bf16.mxu0 0
    %727 = vmatpush2.bf16.msra.mxu0 0
    %728 = vmatprep.subr.bf16.mxu0 0
    %729 = vmatpush2.bf16.msra.mxu0 0
    %730 = vmatprep.subr.bf16.mxu0 0
    %731 = vmatpush2.bf16.msra.mxu0 0
    %732 = vmatprep.subr.bf16.mxu0 0
    %733 = vmatpush2.bf16.msra.mxu0 0
    %734 = vmatprep.subr.bf16.mxu0 0
    %735 = vmatpush2.bf16.msra.mxu0 0
    %736 = vmatprep.subr.bf16.mxu0 0
    %737 = vmatpush2.bf16.msra.mxu0 0
    %738 = vmatprep.subr.bf16.mxu0 0
    %739 = vmatpush2.bf16.msra.mxu0 0
    %740 = vmatprep.subr.bf16.mxu0 0
    %741 = vmatpush2.bf16.msra.mxu0 0
    %742 = vmatprep.mubr.bf16.mxu0 0
    %743 = vmatmul.mubr.bf16.gmra.mxu0 %v497
    %v744 = vpop.f32.mrf.mxu0
    %v745 = vadd.f32 %v641, %v744
    %v746 = vpop.f32.mrf.mxu0
    %v747 = vpop.f32.mrf.mxu0
    %v748 = vadd.f32 %v644, %v747
    %v749 = vpop.f32.mrf.mxu0
    %750 = vmatprep.mubr.bf16.mxu0 0
    %751 = vmatmul.mubr.bf16.gmra.mxu0 %v498
    %v752 = vpop.f32.mrf.mxu0
    %v753 = vadd.f32 %v649, %v752
    %v754 = vpop.f32.mrf.mxu0
    %v755 = vpop.f32.mrf.mxu0
    %v756 = vadd.f32 %v652, %v755
    %v757 = vpop.f32.mrf.mxu0
    %758 = vmatprep.mubr.bf16.mxu0 0
    %759 = vmatmul.mubr.bf16.gmra.mxu0 %v499
    %v760 = vpop.f32.mrf.mxu0
    %v761 = vadd.f32 %v657, %v760
    %v762 = vpop.f32.mrf.mxu0
    %v763 = vpop.f32.mrf.mxu0
    %v764 = vpop.f32.mrf.mxu0
    %765 = vdwg.mxu0
    %v766 = vld [vmem:[#allocation2 + $0xd0] sm:$0xf]
    %v767 = vld [vmem:[#allocation2 + $0xd4] sm:$0xf]
    %v768 = vld [vmem:[#allocation2 + $0xd8] sm:$0xf]
    %v769 = vld [vmem:[#allocation2 + $0xdc] sm:$0xf]
    %v770 = vld [vmem:[#allocation2 + $0xe0] sm:$0xf]
    %v771 = vld [vmem:[#allocation2 + $0xe4] sm:$0xf]
    %v772 = vld [vmem:[#allocation2 + $0xe8] sm:$0xf]
    %v773 = vld [vmem:[#allocation2 + $0xec] sm:$0xf]
    %v774 = vld [vmem:[#allocation2 + $0xf0] sm:$0xf]
    %v775 = vld [vmem:[#allocation2 + $0xf4] sm:$0xf]
    %v776 = vld [vmem:[#allocation2 + $0xf8] sm:$0xf]
    %v777 = vld [vmem:[#allocation2 + $0xfc] sm:$0xf]
    %v778 = vld [vmem:[#allocation2 + $0x100] sm:$0xf]
    %v779 = vld [vmem:[#allocation2 + $0x104] sm:$0xf]
    %v780 = vld [vmem:[#allocation2 + $0x108] sm:$0xf]
    %v781 = vld [vmem:[#allocation2 + $0x10c] sm:$0xf]
    %v785 = vrot.slane %v497, 1
    %v786 = vrot.slane %v498, 1
    %v787 = vsel %vm243, %v785, %v786
    %v788 = vrot.slane %v499, 1
    %v789 = vsel %vm243, %v786, %v788
    %v809 = vunpack.c.l.b16 %v766
    %v810 = vunpack.c.l.b16 %v767
    %v811 = vunpack.c.l.b16 %v768
    %v812 = vunpack.c.l.b16 %v769
    %v813 = vunpack.c.l.b16 %v770
    %v814 = vunpack.c.l.b16 %v771
    %v815 = vunpack.c.l.b16 %v772
    %v816 = vunpack.c.l.b16 %v773
    %v817 = vunpack.c.l.b16 %v774
    %v818 = vunpack.c.l.b16 %v775
    %v819 = vunpack.c.l.b16 %v776
    %v820 = vunpack.c.l.b16 %v777
    %v821 = vunpack.c.l.b16 %v778
    %v822 = vunpack.c.l.b16 %v779
    %v823 = vunpack.c.l.b16 %v780
    %v824 = vunpack.c.l.b16 %v781
    %v825 = vpack.c.b16 %v810, %v809
    %v826 = vpack.c.b16 %v812, %v811
    %v827 = vpack.c.b16 %v814, %v813
    %v828 = vpack.c.b16 %v816, %v815
    %v829 = vpack.c.b16 %v818, %v817
    %v830 = vpack.c.b16 %v820, %v819
    %v831 = vpack.c.b16 %v822, %v821
    %v832 = vpack.c.b16 %v824, %v823
    %841 = vmatprep.subr.bf16.mxu0 0
    %842 = vmatpush1.bf16.msra.mxu0 %v832
    %843 = vmatprep.subr.bf16.mxu0 0
    %844 = vmatpush1.bf16.msra.mxu0 %v831
    %845 = vmatprep.subr.bf16.mxu0 0
    %846 = vmatpush1.bf16.msra.mxu0 %v830
    %847 = vmatprep.subr.bf16.mxu0 0
    %848 = vmatpush1.bf16.msra.mxu0 %v829
    %849 = vmatprep.subr.bf16.mxu0 0
    %850 = vmatpush1.bf16.msra.mxu0 %v828
    %851 = vmatprep.subr.bf16.mxu0 0
    %852 = vmatpush1.bf16.msra.mxu0 %v827
    %853 = vmatprep.subr.bf16.mxu0 0
    %854 = vmatpush1.bf16.msra.mxu0 %v826
    %855 = vmatprep.subr.bf16.mxu0 0
    %856 = vmatpush1.bf16.msra.mxu0 %v825
    %857 = vmatprep.subr.bf16.mxu0 0
    %858 = vmatpush2.bf16.msra.mxu0 0
    %859 = vmatprep.subr.bf16.mxu0 0
    %860 = vmatpush2.bf16.msra.mxu0 0
    %861 = vmatprep.subr.bf16.mxu0 0
    %862 = vmatpush2.bf16.msra.mxu0 0
    %863 = vmatprep.subr.bf16.mxu0 0
    %864 = vmatpush2.bf16.msra.mxu0 0
    %865 = vmatprep.subr.bf16.mxu0 0
    %866 = vmatpush2.bf16.msra.mxu0 0
    %867 = vmatprep.subr.bf16.mxu0 0
    %868 = vmatpush2.bf16.msra.mxu0 0
    %869 = vmatprep.subr.bf16.mxu0 0
    %870 = vmatpush2.bf16.msra.mxu0 0
    %871 = vmatprep.subr.bf16.mxu0 0
    %872 = vmatpush2.bf16.msra.mxu0 0
    %873 = vmatprep.mubr.bf16.mxu0 0
    %874 = vmatmul.mubr.bf16.gmra.mxu0 %v787
    %v875 = vpop.f32.mrf.mxu0
    %v876 = vadd.f32 0.0, %v875
    %v877 = vpop.f32.mrf.mxu0
    %v878 = vpop.f32.mrf.mxu0
    %v879 = vadd.f32 0.0, %v878
    %v880 = vpop.f32.mrf.mxu0
    %881 = vmatprep.mubr.bf16.mxu0 0
    %882 = vmatmul.mubr.bf16.gmra.mxu0 %v789
    %v883 = vpop.f32.mrf.mxu0
    %v884 = vadd.f32 0.0, %v883
    %v885 = vpop.f32.mrf.mxu0
    %v886 = vpop.f32.mrf.mxu0
    %v887 = vadd.f32 0.0, %v886
    %v888 = vpop.f32.mrf.mxu0
    %889 = vmatprep.mubr.bf16.mxu0 0
    %890 = vmatmul.mubr.bf16.gmra.mxu0 %v788
    %v891 = vpop.f32.mrf.mxu0
    %v892 = vadd.f32 0.0, %v891
    %v893 = vpop.f32.mrf.mxu0
    %v894 = vpop.f32.mrf.mxu0
    %v895 = vpop.f32.mrf.mxu0
    %896 = vdwg.mxu0
    %v897 = vadd.f32 %v745, %v876
    %v898 = vadd.f32 %v748, %v879
    %v899 = vadd.f32 %v753, %v884
    %v900 = vadd.f32 %v756, %v887
    %v901 = vadd.f32 %v761, %v892
    %v902 = vld [vmem:[#allocation2 + $0x110] sm:$0x1]
    %v903 = vunpack.c.l.bf16 %v902
    %v904 = vlaneseq
    %v905 = vshrl.u32 %v904, 7
    %v906 = vsub.s32 0, %v905
    %v907 = vrot.slane %v903, %v906
    %v908 = vadd.f32 %v897, %v907
    %v909 = vadd.f32 %v898, %v907
    %v910 = vadd.f32 %v899, %v907
    %v911 = vadd.f32 %v900, %v907
    %v912 = vadd.f32 %v901, %v907
    %v913 = vmax.f32 %v908, 0.0
    %v914 = vmax.f32 %v909, 0.0
    %v915 = vmax.f32 %v910, 0.0
    %v916 = vmax.f32 %v911, 0.0
    %v917 = vmax.f32 %v912, 0.0
    %923 = vrot.lane.b32.xlu0 %v913, 64
    %v924 = vpop.permute.xlu0 %923
    %925 = vrot.lane.b32.xlu0 %v914, 64
    %v926 = vpop.permute.xlu0 %925
    %927 = vrot.lane.b32.xlu0 %v915, 64
    %v928 = vpop.permute.xlu0 %927
    %929 = vrot.lane.b32.xlu0 %v916, 64
    %v930 = vpop.permute.xlu0 %929
    %931 = vrot.lane.b32.xlu0 %v917, 64
    %v932 = vpop.permute.xlu0 %931
    %v938 = vmax.f32 %v913, %v924
    %v939 = vmax.f32 %v914, %v926
    %v940 = vmax.f32 %v915, %v928
    %v941 = vmax.f32 %v916, %v930
    %v942 = vmax.f32 %v917, %v932
    %v943 = vpack.c.bf16 %v939, %v938
    %v944 = vpack.c.bf16 %v941, %v940
    %v945 = vpack.c.bf16 %v942, %v942
    %vm946 = vcmp.ge.s32.totalorder %v354, 10
    %vm947 = vcmp.ge.s32.totalorder %v355, 10
    %vm948 = vcmp.ge.s32.totalorder %v356, 10
    %v949 = vsel %vm946, 1, 0
    %v950 = vsel %vm947, 1, 0
    %v951 = vsel %vm948, 1, 0
    %v952 = vmul.u32 %v949, 10
    %v953 = vmul.u32 %v950, 10
    %v954 = vmul.u32 %v951, 10
    %v955 = vsub.s32 %v354, %v952
    %v956 = vsub.s32 %v355, %v953
    %v957 = vsub.s32 %v356, %v954
    %v958 = vsub.s32 %v955, 1
    %v959 = vsub.s32 %v956, 1
    %v960 = vsub.s32 %v957, 1
    %vm961 = vcmp.ge.s32.totalorder %v958, 0
    %vm962 = vcmp.ge.s32.totalorder %v959, 0
    %vm963 = vcmp.ge.s32.totalorder %v960, 0
    %vm964 = vcmp.lt.s32.totalorder %v958, 8
    %vm965 = vcmp.lt.s32.totalorder %v959, 8
    %vm966 = vcmp.lt.s32.totalorder %v960, 8
    %vm967 = vmand %vm961, %vm964
    %vm968 = vmand %vm962, %vm965
    %vm969 = vmand %vm963, %vm966
    %v970 = vmul.u32 %v949, 18
    %v971 = vmul.u32 %v950, 18
    %v972 = vmul.u32 %v951, 18
    %v973 = vmul.u32 %v958, 2
    %v974 = vmul.u32 %v959, 2
    %v975 = vmul.u32 %v960, 2
    %v976 = vadd.s32 %v970, %v973
    %v977 = vadd.s32 %v971, %v974
    %v978 = vadd.s32 %v972, %v975
    %vm979 = vcmp.eq.s32.totalorder %v360, %v976
    %vm980 = vcmp.eq.s32.totalorder %v360, %v977
    %vm981 = vcmp.eq.s32.totalorder %v360, %v978
    %vm982 = vmand %vm967, %vm979
    %vm983 = vmand %vm968, %vm980
    %vm984 = vmand %vm969, %vm981
    %v985 = vsel %vm982, 1.0, 0.0
    %v986 = vsel %vm983, 1.0, 0.0
    %v987 = vsel %vm984, 1.0, 0.0
    %v988 = vpack.c.bf16 %v986, %v985
    %v989 = vpack.c.bf16 %v987, %v987
    %v991 = vsel %vm427, %v988, 0
    %v994 = vsel %vm427, %v989, 0
    %v997 = vsel %vm437, %v945, 0
    %999 = vmatprep.subr.bf16.mxu0 0
    %1000 = vmatpush1.bf16.msra.mxu0 0
    %1001 = vmatprep.subr.bf16.mxu0 0
    %1002 = vmatpush1.bf16.msra.mxu0 0
    %1003 = vmatprep.subr.bf16.mxu0 0
    %1004 = vmatpush1.bf16.msra.mxu0 0
    %1005 = vmatprep.subr.bf16.mxu0 0
    %1006 = vmatpush1.bf16.msra.mxu0 0
    %1007 = vmatprep.subr.bf16.mxu0 0
    %1008 = vmatpush1.bf16.msra.mxu0 0
    %1009 = vmatprep.subr.bf16.mxu0 0
    %1010 = vmatpush1.bf16.msra.mxu0 %v997
    %1011 = vmatprep.subr.bf16.mxu0 0
    %1012 = vmatpush1.bf16.msra.mxu0 %v944
    %1013 = vmatprep.subr.bf16.mxu0 0
    %1014 = vmatpush1.bf16.msra.mxu0 %v943
    %1015 = vmatprep.subr.bf16.mxu0 0
    %1016 = vmatpush2.bf16.msra.mxu0 0
    %1017 = vmatprep.subr.bf16.mxu0 0
    %1018 = vmatpush2.bf16.msra.mxu0 0
    %1019 = vmatprep.subr.bf16.mxu0 0
    %1020 = vmatpush2.bf16.msra.mxu0 0
    %1021 = vmatprep.subr.bf16.mxu0 0
    %1022 = vmatpush2.bf16.msra.mxu0 0
    %1023 = vmatprep.subr.bf16.mxu0 0
    %1024 = vmatpush2.bf16.msra.mxu0 0
    %1025 = vmatprep.subr.bf16.mxu0 0
    %1026 = vmatpush2.bf16.msra.mxu0 0
    %1027 = vmatprep.subr.bf16.mxu0 0
    %1028 = vmatpush2.bf16.msra.mxu0 0
    %1029 = vmatprep.subr.bf16.mxu0 0
    %1030 = vmatpush2.bf16.msra.mxu0 0
    %1031 = vmatprep.mubr.bf16.mxu0 0
    %1032 = vmatmul.mubr.bf16.gmra.mxu0 %v991
    %v1033 = vpop.f32.mrf.mxu0
    %v1034 = vadd.f32 0.0, %v1033
    %v1035 = vpop.f32.mrf.mxu0
    %v1036 = vpop.f32.mrf.mxu0
    %v1037 = vadd.f32 0.0, %v1036
    %v1038 = vpop.f32.mrf.mxu0
    %1039 = vmatprep.mubr.bf16.mxu0 0
    %1040 = vmatmul.mubr.bf16.gmra.mxu0 %v994
    %v1041 = vpop.f32.mrf.mxu0
    %v1042 = vadd.f32 0.0, %v1041
    %v1043 = vpop.f32.mrf.mxu0
    %v1044 = vpop.f32.mrf.mxu0
    %v1045 = vpop.f32.mrf.mxu0
    %1046 = vdwg.mxu0
    %v1047 = vadd.s32 %v976, 1
    %v1048 = vadd.s32 %v977, 1
    %v1049 = vadd.s32 %v978, 1
    %vm1050 = vcmp.eq.s32.totalorder %v360, %v1047
    %vm1051 = vcmp.eq.s32.totalorder %v360, %v1048
    %vm1052 = vcmp.eq.s32.totalorder %v360, %v1049
    %vm1053 = vmand %vm967, %vm1050
    %vm1054 = vmand %vm968, %vm1051
    %vm1055 = vmand %vm969, %vm1052
    %v1056 = vsel %vm1053, 1.0, 0.0
    %v1057 = vsel %vm1054, 1.0, 0.0
    %v1058 = vsel %vm1055, 1.0, 0.0
    %v1059 = vpack.c.bf16 %v1057, %v1056
    %v1060 = vpack.c.bf16 %v1058, %v1058
    %v1062 = vsel %vm427, %v1059, 0
    %v1065 = vsel %vm427, %v1060, 0
    %1067 = vmatprep.subr.bf16.mxu0 0
    %1068 = vmatpush1.bf16.msra.mxu0 0
    %1069 = vmatprep.subr.bf16.mxu0 0
    %1070 = vmatpush1.bf16.msra.mxu0 0
    %1071 = vmatprep.subr.bf16.mxu0 0
    %1072 = vmatpush1.bf16.msra.mxu0 0
    %1073 = vmatprep.subr.bf16.mxu0 0
    %1074 = vmatpush1.bf16.msra.mxu0 0
    %1075 = vmatprep.subr.bf16.mxu0 0
    %1076 = vmatpush1.bf16.msra.mxu0 0
    %1077 = vmatprep.subr.bf16.mxu0 0
    %1078 = vmatpush1.bf16.msra.mxu0 %v997
    %1079 = vmatprep.subr.bf16.mxu0 0
    %1080 = vmatpush1.bf16.msra.mxu0 %v944
    %1081 = vmatprep.subr.bf16.mxu0 0
    %1082 = vmatpush1.bf16.msra.mxu0 %v943
    %1083 = vmatprep.subr.bf16.mxu0 0
    %1084 = vmatpush2.bf16.msra.mxu0 0
    %1085 = vmatprep.subr.bf16.mxu0 0
    %1086 = vmatpush2.bf16.msra.mxu0 0
    %1087 = vmatprep.subr.bf16.mxu0 0
    %1088 = vmatpush2.bf16.msra.mxu0 0
    %1089 = vmatprep.subr.bf16.mxu0 0
    %1090 = vmatpush2.bf16.msra.mxu0 0
    %1091 = vmatprep.subr.bf16.mxu0 0
    %1092 = vmatpush2.bf16.msra.mxu0 0
    %1093 = vmatprep.subr.bf16.mxu0 0
    %1094 = vmatpush2.bf16.msra.mxu0 0
    %1095 = vmatprep.subr.bf16.mxu0 0
    %1096 = vmatpush2.bf16.msra.mxu0 0
    %1097 = vmatprep.subr.bf16.mxu0 0
    %1098 = vmatpush2.bf16.msra.mxu0 0
    %1099 = vmatprep.mubr.bf16.mxu0 0
    %1100 = vmatmul.mubr.bf16.gmra.mxu0 %v1062
    %v1101 = vpop.f32.mrf.mxu0
    %v1102 = vadd.f32 0.0, %v1101
    %v1103 = vpop.f32.mrf.mxu0
    %v1104 = vpop.f32.mrf.mxu0
    %v1105 = vadd.f32 0.0, %v1104
    %v1106 = vpop.f32.mrf.mxu0
    %1107 = vmatprep.mubr.bf16.mxu0 0
    %1108 = vmatmul.mubr.bf16.gmra.mxu0 %v1065
    %v1109 = vpop.f32.mrf.mxu0
    %v1110 = vadd.f32 0.0, %v1109
    %v1111 = vpop.f32.mrf.mxu0
    %v1112 = vpop.f32.mrf.mxu0
    %v1113 = vpop.f32.mrf.mxu0
    %1114 = vdwg.mxu0
    %v1115 = vmax.f32 %v1034, %v1102
    %v1116 = vmax.f32 %v1037, %v1105
    %v1117 = vmax.f32 %v1042, %v1110
    %v1118 = vpack.c.bf16 %v1116, %v1115
    %v1119 = vpack.c.bf16 %v1117, %v1117
    %v1120 = vld [vmem:[#allocation2 + $0x118] sm:$0xf]
    %v1121 = vld [vmem:[#allocation2 + $0x11c] sm:$0xf]
    %v1122 = vld [vmem:[#allocation2 + $0x120] sm:$0xf]
    %v1123 = vld [vmem:[#allocation2 + $0x124] sm:$0xf]
    %v1124 = vld [vmem:[#allocation2 + $0x128] sm:$0xf]
    %v1125 = vld [vmem:[#allocation2 + $0x12c] sm:$0xf]
    %v1126 = vld [vmem:[#allocation2 + $0x130] sm:$0xf]
    %v1127 = vld [vmem:[#allocation2 + $0x134] sm:$0xf]
    %v1128 = vld [vmem:[#allocation2 + $0x138] sm:$0xf]
    %v1129 = vld [vmem:[#allocation2 + $0x13c] sm:$0xf]
    %v1130 = vld [vmem:[#allocation2 + $0x140] sm:$0xf]
    %v1131 = vld [vmem:[#allocation2 + $0x144] sm:$0xf]
    %v1132 = vld [vmem:[#allocation2 + $0x148] sm:$0xf]
    %v1133 = vld [vmem:[#allocation2 + $0x14c] sm:$0xf]
    %v1134 = vld [vmem:[#allocation2 + $0x150] sm:$0xf]
    %v1135 = vld [vmem:[#allocation2 + $0x154] sm:$0xf]
    %v1137 = vshrl.u32 %v1118, 16
    %v1139 = vshll.u32 %v1118, 16
    %v1141 = vrot.slane %v1139, 1
    %v1142 = vor.u32 %v1137, %v1141
    %v1144 = vshll.u32 %v1119, 16
    %v1146 = vrot.slane %v1144, 1
    %v1147 = vsel %vm46, %v1142, %v1146
    %v1148 = vshrl.u32 %v1119, 16
    %v1150 = vor.u32 %v1148, %v1146
    %v1159 = vunpack.c.l.b16 %v1128
    %v1160 = vunpack.c.l.b16 %v1129
    %v1161 = vunpack.c.l.b16 %v1130
    %v1162 = vunpack.c.l.b16 %v1131
    %v1163 = vunpack.c.l.b16 %v1132
    %v1164 = vunpack.c.l.b16 %v1133
    %v1165 = vunpack.c.l.b16 %v1134
    %v1166 = vunpack.c.l.b16 %v1135
    %v1167 = vpack.c.b16 %v1160, %v1159
    %v1168 = vpack.c.b16 %v1162, %v1161
    %v1169 = vpack.c.b16 %v1164, %v1163
    %v1170 = vpack.c.b16 %v1166, %v1165
    %vm1175 = vcmask 523264
    %v1177 = vsel %vm1175, %v1147, 0
    %v1180 = vsel %vm1175, %v1150, 0
    %1182 = vmatprep.subr.bf16.mxu0 0
    %1183 = vmatpush1.bf16.msra.mxu0 0
    %1184 = vmatprep.subr.bf16.mxu0 0
    %1185 = vmatpush1.bf16.msra.mxu0 0
    %1186 = vmatprep.subr.bf16.mxu0 0
    %1187 = vmatpush1.bf16.msra.mxu0 0
    %1188 = vmatprep.subr.bf16.mxu0 0
    %1189 = vmatpush1.bf16.msra.mxu0 0
    %1190 = vmatprep.subr.bf16.mxu0 0
    %1191 = vmatpush1.bf16.msra.mxu0 %v1170
    %1192 = vmatprep.subr.bf16.mxu0 0
    %1193 = vmatpush1.bf16.msra.mxu0 %v1169
    %1194 = vmatprep.subr.bf16.mxu0 0
    %1195 = vmatpush1.bf16.msra.mxu0 %v1168
    %1196 = vmatprep.subr.bf16.mxu0 0
    %1197 = vmatpush1.bf16.msra.mxu0 %v1167
    %1198 = vmatprep.subr.bf16.mxu0 0
    %1199 = vmatpush2.bf16.msra.mxu0 0
    %1200 = vmatprep.subr.bf16.mxu0 0
    %1201 = vmatpush2.bf16.msra.mxu0 0
    %1202 = vmatprep.subr.bf16.mxu0 0
    %1203 = vmatpush2.bf16.msra.mxu0 0
    %1204 = vmatprep.subr.bf16.mxu0 0
    %1205 = vmatpush2.bf16.msra.mxu0 0
    %1206 = vmatprep.subr.bf16.mxu0 0
    %1207 = vmatpush2.bf16.msra.mxu0 0
    %1208 = vmatprep.subr.bf16.mxu0 0
    %1209 = vmatpush2.bf16.msra.mxu0 0
    %1210 = vmatprep.subr.bf16.mxu0 0
    %1211 = vmatpush2.bf16.msra.mxu0 0
    %1212 = vmatprep.subr.bf16.mxu0 0
    %1213 = vmatpush2.bf16.msra.mxu0 0
    %1214 = vmatprep.mubr.bf16.mxu0 0
    %1215 = vmatmul.mubr.bf16.gmra.mxu0 %v1177
    %v1216 = vpop.f32.mrf.mxu0
    %v1217 = vadd.f32 0.0, %v1216
    %v1218 = vpop.f32.mrf.mxu0
    %v1219 = vpop.f32.mrf.mxu0
    %v1220 = vadd.f32 0.0, %v1219
    %v1221 = vpop.f32.mrf.mxu0
    %1222 = vmatprep.mubr.bf16.mxu0 0
    %1223 = vmatmul.mubr.bf16.gmra.mxu0 %v1180
    %v1224 = vpop.f32.mrf.mxu0
    %v1225 = vadd.f32 0.0, %v1224
    %v1226 = vpop.f32.mrf.mxu0
    %v1227 = vpop.f32.mrf.mxu0
    %v1228 = vpop.f32.mrf.mxu0
    %1229 = vdwg.mxu0
    %v1238 = vunpack.c.l.b16 %v1120
    %v1239 = vunpack.c.l.b16 %v1121
    %v1240 = vunpack.c.l.b16 %v1122
    %v1241 = vunpack.c.l.b16 %v1123
    %v1242 = vunpack.c.l.b16 %v1124
    %v1243 = vunpack.c.l.b16 %v1125
    %v1244 = vunpack.c.l.b16 %v1126
    %v1245 = vunpack.c.l.b16 %v1127
    %v1246 = vpack.c.b16 %v1239, %v1238
    %v1247 = vpack.c.b16 %v1241, %v1240
    %v1248 = vpack.c.b16 %v1243, %v1242
    %v1249 = vpack.c.b16 %v1245, %v1244
    %v1254 = vsel %vm1175, %v1118, 0
    %v1256 = vsel %vm1175, %v1119, 0
    %1258 = vmatprep.subr.bf16.mxu0 0
    %1259 = vmatpush1.bf16.msra.mxu0 0
    %1260 = vmatprep.subr.bf16.mxu0 0
    %1261 = vmatpush1.bf16.msra.mxu0 0
    %1262 = vmatprep.subr.bf16.mxu0 0
    %1263 = vmatpush1.bf16.msra.mxu0 0
    %1264 = vmatprep.subr.bf16.mxu0 0
    %1265 = vmatpush1.bf16.msra.mxu0 0
    %1266 = vmatprep.subr.bf16.mxu0 0
    %1267 = vmatpush1.bf16.msra.mxu0 %v1249
    %1268 = vmatprep.subr.bf16.mxu0 0
    %1269 = vmatpush1.bf16.msra.mxu0 %v1248
    %1270 = vmatprep.subr.bf16.mxu0 0
    %1271 = vmatpush1.bf16.msra.mxu0 %v1247
    %1272 = vmatprep.subr.bf16.mxu0 0
    %1273 = vmatpush1.bf16.msra.mxu0 %v1246
    %1274 = vmatprep.subr.bf16.mxu0 0
    %1275 = vmatpush2.bf16.msra.mxu0 0
    %1276 = vmatprep.subr.bf16.mxu0 0
    %1277 = vmatpush2.bf16.msra.mxu0 0
    %1278 = vmatprep.subr.bf16.mxu0 0
    %1279 = vmatpush2.bf16.msra.mxu0 0
    %1280 = vmatprep.subr.bf16.mxu0 0
    %1281 = vmatpush2.bf16.msra.mxu0 0
    %1282 = vmatprep.subr.bf16.mxu0 0
    %1283 = vmatpush2.bf16.msra.mxu0 0
    %1284 = vmatprep.subr.bf16.mxu0 0
    %1285 = vmatpush2.bf16.msra.mxu0 0
    %1286 = vmatprep.subr.bf16.mxu0 0
    %1287 = vmatpush2.bf16.msra.mxu0 0
    %1288 = vmatprep.subr.bf16.mxu0 0
    %1289 = vmatpush2.bf16.msra.mxu0 0
    %1290 = vmatprep.mubr.bf16.mxu0 0
    %1291 = vmatmul.mubr.bf16.gmra.mxu0 %v1254
    %v1292 = vpop.f32.mrf.mxu0
    %v1293 = vadd.f32 %v1217, %v1292
    %v1294 = vpop.f32.mrf.mxu0
    %v1295 = vpop.f32.mrf.mxu0
    %v1296 = vadd.f32 %v1220, %v1295
    %v1297 = vpop.f32.mrf.mxu0
    %1298 = vmatprep.mubr.bf16.mxu0 0
    %1299 = vmatmul.mubr.bf16.gmra.mxu0 %v1256
    %v1300 = vpop.f32.mrf.mxu0
    %v1301 = vadd.f32 %v1225, %v1300
    %v1302 = vpop.f32.mrf.mxu0
    %v1303 = vpop.f32.mrf.mxu0
    %v1304 = vpop.f32.mrf.mxu0
    %1305 = vdwg.mxu0
    %v1306 = vld [vmem:[#allocation2 + $0x158] sm:$0xf]
    %v1307 = vld [vmem:[#allocation2 + $0x15c] sm:$0xf]
    %v1308 = vld [vmem:[#allocation2 + $0x160] sm:$0xf]
    %v1309 = vld [vmem:[#allocation2 + $0x164] sm:$0xf]
    %v1310 = vld [vmem:[#allocation2 + $0x168] sm:$0xf]
    %v1311 = vld [vmem:[#allocation2 + $0x16c] sm:$0xf]
    %v1312 = vld [vmem:[#allocation2 + $0x170] sm:$0xf]
    %v1313 = vld [vmem:[#allocation2 + $0x174] sm:$0xf]
    %v1316 = vrot.slane %v1118, 1
    %v1317 = vrot.slane %v1119, 1
    %v1318 = vsel %vm243, %v1316, %v1317
    %v1327 = vunpack.c.l.b16 %v1306
    %v1328 = vunpack.c.l.b16 %v1307
    %v1329 = vunpack.c.l.b16 %v1308
    %v1330 = vunpack.c.l.b16 %v1309
    %v1331 = vunpack.c.l.b16 %v1310
    %v1332 = vunpack.c.l.b16 %v1311
    %v1333 = vunpack.c.l.b16 %v1312
    %v1334 = vunpack.c.l.b16 %v1313
    %v1335 = vpack.c.b16 %v1328, %v1327
    %v1336 = vpack.c.b16 %v1330, %v1329
    %v1337 = vpack.c.b16 %v1332, %v1331
    %v1338 = vpack.c.b16 %v1334, %v1333
    %v1344 = vsel %vm1175, %v1318, 0
    %v1347 = vsel %vm1175, %v1317, 0
    %1349 = vmatprep.subr.bf16.mxu0 0
    %1350 = vmatpush1.bf16.msra.mxu0 0
    %1351 = vmatprep.subr.bf16.mxu0 0
    %1352 = vmatpush1.bf16.msra.mxu0 0
    %1353 = vmatprep.subr.bf16.mxu0 0
    %1354 = vmatpush1.bf16.msra.mxu0 0
    %1355 = vmatprep.subr.bf16.mxu0 0
    %1356 = vmatpush1.bf16.msra.mxu0 0
    %1357 = vmatprep.subr.bf16.mxu0 0
    %1358 = vmatpush1.bf16.msra.mxu0 %v1338
    %1359 = vmatprep.subr.bf16.mxu0 0
    %1360 = vmatpush1.bf16.msra.mxu0 %v1337
    %1361 = vmatprep.subr.bf16.mxu0 0
    %1362 = vmatpush1.bf16.msra.mxu0 %v1336
    %1363 = vmatprep.subr.bf16.mxu0 0
    %1364 = vmatpush1.bf16.msra.mxu0 %v1335
    %1365 = vmatprep.subr.bf16.mxu0 0
    %1366 = vmatpush2.bf16.msra.mxu0 0
    %1367 = vmatprep.subr.bf16.mxu0 0
    %1368 = vmatpush2.bf16.msra.mxu0 0
    %1369 = vmatprep.subr.bf16.mxu0 0
    %1370 = vmatpush2.bf16.msra.mxu0 0
    %1371 = vmatprep.subr.bf16.mxu0 0
    %1372 = vmatpush2.bf16.msra.mxu0 0
    %1373 = vmatprep.subr.bf16.mxu0 0
    %1374 = vmatpush2.bf16.msra.mxu0 0
    %1375 = vmatprep.subr.bf16.mxu0 0
    %1376 = vmatpush2.bf16.msra.mxu0 0
    %1377 = vmatprep.subr.bf16.mxu0 0
    %1378 = vmatpush2.bf16.msra.mxu0 0
    %1379 = vmatprep.subr.bf16.mxu0 0
    %1380 = vmatpush2.bf16.msra.mxu0 0
    %1381 = vmatprep.mubr.bf16.mxu0 0
    %1382 = vmatmul.mubr.bf16.gmra.mxu0 %v1344
    %v1383 = vpop.f32.mrf.mxu0
    %v1384 = vadd.f32 0.0, %v1383
    %v1385 = vpop.f32.mrf.mxu0
    %v1386 = vpop.f32.mrf.mxu0
    %v1387 = vadd.f32 0.0, %v1386
    %v1388 = vpop.f32.mrf.mxu0
    %1389 = vmatprep.mubr.bf16.mxu0 0
    %1390 = vmatmul.mubr.bf16.gmra.mxu0 %v1347
    %v1391 = vpop.f32.mrf.mxu0
    %v1392 = vadd.f32 0.0, %v1391
    %v1393 = vpop.f32.mrf.mxu0
    %v1394 = vpop.f32.mrf.mxu0
    %v1395 = vpop.f32.mrf.mxu0
    %1396 = vdwg.mxu0
    %v1397 = vadd.f32 %v1293, %v1384
    %v1398 = vadd.f32 %v1296, %v1387
    %v1399 = vadd.f32 %v1301, %v1392
    %v1400 = vld [vmem:[#allocation2 + $0x178] sm:$0x1]
    %v1401 = vunpack.c.l.bf16 %v1400
    %v1402 = vlaneseq
    %v1403 = vshrl.u32 %v1402, 7
    %v1404 = vsub.s32 0, %v1403
    %v1405 = vrot.slane %v1401, %v1404
    %v1406 = vadd.f32 %v1397, %v1405
    %v1407 = vadd.f32 %v1398, %v1405
    %v1408 = vadd.f32 %v1399, %v1405
    %v1409 = vmax.f32 %v1406, 0.0
    %v1410 = vmax.f32 %v1407, 0.0
    %v1411 = vmax.f32 %v1408, 0.0
    %v1412 = vadd.s32 %v952, %v958
    %v1413 = vadd.s32 %v953, %v959
    %v1414 = vadd.s32 %v954, %v960
    %vm1415 = vcmp.eq.s32.totalorder %v360, %v1412
    %vm1416 = vcmp.eq.s32.totalorder %v360, %v1413
    %vm1417 = vcmp.eq.s32.totalorder %v360, %v1414
    %vm1418 = vmand %vm967, %vm1415
    %vm1419 = vmand %vm968, %vm1416
    %vm1420 = vmand %vm969, %vm1417
    %v1421 = vsel %vm1418, 1.0, 0.0
    %v1422 = vsel %vm1419, 1.0, 0.0
    %v1423 = vsel %vm1420, 1.0, 0.0
    %v1424 = vpack.c.bf16 %v1422, %v1421
    %v1425 = vpack.c.bf16 %v1423, %v1423
    %v1426 = vpack.c.bf16 %v1410, %v1409
    %v1427 = vpack.c.bf16 %v1411, %v1411
    %vm1428 = vcmask 146432
    %v1430 = vsel %vm1428, %v1424, 0
    %v1433 = vsel %vm1428, %v1425, 0
    %v1436 = vsel %vm437, %v1427, 0
    %1438 = vmatprep.subr.bf16.mxu0 0
    %1439 = vmatpush1.bf16.msra.mxu0 0
    %1440 = vmatprep.subr.bf16.mxu0 0
    %1441 = vmatpush1.bf16.msra.mxu0 0
    %1442 = vmatprep.subr.bf16.mxu0 0
    %1443 = vmatpush1.bf16.msra.mxu0 0
    %1444 = vmatprep.subr.bf16.mxu0 0
    %1445 = vmatpush1.bf16.msra.mxu0 0
    %1446 = vmatprep.subr.bf16.mxu0 0
    %1447 = vmatpush1.bf16.msra.mxu0 0
    %1448 = vmatprep.subr.bf16.mxu0 0
    %1449 = vmatpush1.bf16.msra.mxu0 0
    %1450 = vmatprep.subr.bf16.mxu0 0
    %1451 = vmatpush1.bf16.msra.mxu0 %v1436
    %1452 = vmatprep.subr.bf16.mxu0 0
    %1453 = vmatpush1.bf16.msra.mxu0 %v1426
    %1454 = vmatprep.subr.bf16.mxu0 0
    %1455 = vmatpush2.bf16.msra.mxu0 0
    %1456 = vmatprep.subr.bf16.mxu0 0
    %1457 = vmatpush2.bf16.msra.mxu0 0
    %1458 = vmatprep.subr.bf16.mxu0 0
    %1459 = vmatpush2.bf16.msra.mxu0 0
    %1460 = vmatprep.subr.bf16.mxu0 0
    %1461 = vmatpush2.bf16.msra.mxu0 0
    %1462 = vmatprep.subr.bf16.mxu0 0
    %1463 = vmatpush2.bf16.msra.mxu0 0
    %1464 = vmatprep.subr.bf16.mxu0 0
    %1465 = vmatpush2.bf16.msra.mxu0 0
    %1466 = vmatprep.subr.bf16.mxu0 0
    %1467 = vmatpush2.bf16.msra.mxu0 0
    %1468 = vmatprep.subr.bf16.mxu0 0
    %1469 = vmatpush2.bf16.msra.mxu0 0
    %1470 = vmatprep.mubr.bf16.mxu0 0
    %1471 = vmatmul.mubr.bf16.gmra.mxu0 %v1430
    %v1472 = vpop.f32.mrf.mxu0
    %v1473 = vadd.f32 0.0, %v1472
    %v1474 = vpop.f32.mrf.mxu0
    %v1475 = vpop.f32.mrf.mxu0
    %v1476 = vadd.f32 0.0, %v1475
    %v1477 = vpop.f32.mrf.mxu0
    %1478 = vmatprep.mubr.bf16.mxu0 0
    %1479 = vmatmul.mubr.bf16.gmra.mxu0 %v1433
    %v1480 = vpop.f32.mrf.mxu0
    %v1481 = vadd.f32 0.0, %v1480
    %v1482 = vpop.f32.mrf.mxu0
    %v1483 = vpop.f32.mrf.mxu0
    %v1484 = vpop.f32.mrf.mxu0
    %1485 = vdwg.mxu0
    %v1486 = vpack.c.bf16 %v1476, %v1473
    %v1487 = vpack.c.bf16 %v1481, %v1481
    %v1488 = vld [vmem:[#allocation2 + $0x180] sm:$0xf]
    %v1489 = vld [vmem:[#allocation2 + $0x184] sm:$0xf]
    %v1490 = vld [vmem:[#allocation2 + $0x188] sm:$0xf]
    %v1491 = vld [vmem:[#allocation2 + $0x18c] sm:$0xf]
    %v1492 = vld [vmem:[#allocation2 + $0x190] sm:$0xf]
    %v1493 = vld [vmem:[#allocation2 + $0x194] sm:$0xf]
    %v1494 = vld [vmem:[#allocation2 + $0x198] sm:$0xf]
    %v1495 = vld [vmem:[#allocation2 + $0x19c] sm:$0xf]
    %v1496 = vld [vmem:[#allocation2 + $0x1a0] sm:$0xf]
    %v1497 = vld [vmem:[#allocation2 + $0x1a4] sm:$0xf]
    %v1498 = vld [vmem:[#allocation2 + $0x1a8] sm:$0xf]
    %v1499 = vld [vmem:[#allocation2 + $0x1ac] sm:$0xf]
    %v1500 = vld [vmem:[#allocation2 + $0x1b0] sm:$0xf]
    %v1501 = vld [vmem:[#allocation2 + $0x1b4] sm:$0xf]
    %v1502 = vld [vmem:[#allocation2 + $0x1b8] sm:$0xf]
    %v1503 = vld [vmem:[#allocation2 + $0x1bc] sm:$0xf]
    %v1504 = vld [vmem:[#allocation2 + $0x1c0] sm:$0xf]
    %v1505 = vld [vmem:[#allocation2 + $0x1c4] sm:$0xf]
    %v1506 = vld [vmem:[#allocation2 + $0x1c8] sm:$0xf]
    %v1507 = vld [vmem:[#allocation2 + $0x1cc] sm:$0xf]
    %v1508 = vld [vmem:[#allocation2 + $0x1d0] sm:$0xf]
    %v1509 = vld [vmem:[#allocation2 + $0x1d4] sm:$0xf]
    %v1510 = vld [vmem:[#allocation2 + $0x1d8] sm:$0xf]
    %v1511 = vld [vmem:[#allocation2 + $0x1dc] sm:$0xf]
    %v1512 = vld [vmem:[#allocation2 + $0x1e0] sm:$0xf]
    %v1513 = vld [vmem:[#allocation2 + $0x1e4] sm:$0xf]
    %v1514 = vld [vmem:[#allocation2 + $0x1e8] sm:$0xf]
    %v1515 = vld [vmem:[#allocation2 + $0x1ec] sm:$0xf]
    %v1516 = vld [vmem:[#allocation2 + $0x1f0] sm:$0xf]
    %v1517 = vld [vmem:[#allocation2 + $0x1f4] sm:$0xf]
    %v1518 = vld [vmem:[#allocation2 + $0x1f8] sm:$0xf]
    %v1519 = vld [vmem:[#allocation2 + $0x1fc] sm:$0xf]
    %v1521 = vshrl.u32 %v1486, 16
    %v1523 = vshll.u32 %v1486, 16
    %v1525 = vrot.slane %v1523, 1
    %v1526 = vor.u32 %v1521, %v1525
    %v1528 = vshll.u32 %v1487, 16
    %v1530 = vrot.slane %v1528, 1
    %v1531 = vsel %vm46, %v1526, %v1530
    %v1532 = vshrl.u32 %v1487, 16
    %v1534 = vor.u32 %v1532, %v1530
    %v1553 = vunpack.c.l.b16 %v1504
    %v1554 = vunpack.c.l.b16 %v1505
    %v1555 = vunpack.c.l.b16 %v1506
    %v1556 = vunpack.c.l.b16 %v1507
    %v1557 = vunpack.c.l.b16 %v1508
    %v1558 = vunpack.c.l.b16 %v1509
    %v1559 = vunpack.c.l.b16 %v1510
    %v1560 = vunpack.c.l.b16 %v1511
    %v1561 = vunpack.c.l.b16 %v1512
    %v1562 = vunpack.c.l.b16 %v1513
    %v1563 = vunpack.c.l.b16 %v1514
    %v1564 = vunpack.c.l.b16 %v1515
    %v1565 = vunpack.c.l.b16 %v1516
    %v1566 = vunpack.c.l.b16 %v1517
    %v1567 = vunpack.c.l.b16 %v1518
    %v1568 = vunpack.c.l.b16 %v1519
    %v1569 = vpack.c.b16 %v1554, %v1553
    %v1570 = vpack.c.b16 %v1556, %v1555
    %v1571 = vpack.c.b16 %v1558, %v1557
    %v1572 = vpack.c.b16 %v1560, %v1559
    %v1573 = vpack.c.b16 %v1562, %v1561
    %v1574 = vpack.c.b16 %v1564, %v1563
    %v1575 = vpack.c.b16 %v1566, %v1565
    %v1576 = vpack.c.b16 %v1568, %v1567
    %1585 = vmatprep.subr.bf16.mxu0 0
    %1586 = vmatpush1.bf16.msra.mxu0 %v1576
    %1587 = vmatprep.subr.bf16.mxu0 0
    %1588 = vmatpush1.bf16.msra.mxu0 %v1575
    %1589 = vmatprep.subr.bf16.mxu0 0
    %1590 = vmatpush1.bf16.msra.mxu0 %v1574
    %1591 = vmatprep.subr.bf16.mxu0 0
    %1592 = vmatpush1.bf16.msra.mxu0 %v1573
    %1593 = vmatprep.subr.bf16.mxu0 0
    %1594 = vmatpush1.bf16.msra.mxu0 %v1572
    %1595 = vmatprep.subr.bf16.mxu0 0
    %1596 = vmatpush1.bf16.msra.mxu0 %v1571
    %1597 = vmatprep.subr.bf16.mxu0 0
    %1598 = vmatpush1.bf16.msra.mxu0 %v1570
    %1599 = vmatprep.subr.bf16.mxu0 0
    %1600 = vmatpush1.bf16.msra.mxu0 %v1569
    %1601 = vmatprep.subr.bf16.mxu0 0
    %1602 = vmatpush2.bf16.msra.mxu0 0
    %1603 = vmatprep.subr.bf16.mxu0 0
    %1604 = vmatpush2.bf16.msra.mxu0 0
    %1605 = vmatprep.subr.bf16.mxu0 0
    %1606 = vmatpush2.bf16.msra.mxu0 0
    %1607 = vmatprep.subr.bf16.mxu0 0
    %1608 = vmatpush2.bf16.msra.mxu0 0
    %1609 = vmatprep.subr.bf16.mxu0 0
    %1610 = vmatpush2.bf16.msra.mxu0 0
    %1611 = vmatprep.subr.bf16.mxu0 0
    %1612 = vmatpush2.bf16.msra.mxu0 0
    %1613 = vmatprep.subr.bf16.mxu0 0
    %1614 = vmatpush2.bf16.msra.mxu0 0
    %1615 = vmatprep.subr.bf16.mxu0 0
    %1616 = vmatpush2.bf16.msra.mxu0 0
    %1617 = vmatprep.mubr.bf16.mxu0 0
    %1618 = vmatmul.mubr.bf16.gmra.mxu0 %v1531
    %v1619 = vpop.f32.mrf.mxu0
    %v1620 = vadd.f32 0.0, %v1619
    %v1621 = vpop.f32.mrf.mxu0
    %v1622 = vpop.f32.mrf.mxu0
    %v1623 = vadd.f32 0.0, %v1622
    %v1624 = vpop.f32.mrf.mxu0
    %1625 = vmatprep.mubr.bf16.mxu0 0
    %1626 = vmatmul.mubr.bf16.gmra.mxu0 %v1534
    %v1627 = vpop.f32.mrf.mxu0
    %v1628 = vadd.f32 0.0, %v1627
    %v1629 = vpop.f32.mrf.mxu0
    %v1630 = vpop.f32.mrf.mxu0
    %v1631 = vpop.f32.mrf.mxu0
    %1632 = vdwg.mxu0
    %v1649 = vunpack.c.l.b16 %v1488
    %v1650 = vunpack.c.l.b16 %v1489
    %v1651 = vunpack.c.l.b16 %v1490
    %v1652 = vunpack.c.l.b16 %v1491
    %v1653 = vunpack.c.l.b16 %v1492
    %v1654 = vunpack.c.l.b16 %v1493
    %v1655 = vunpack.c.l.b16 %v1494
    %v1656 = vunpack.c.l.b16 %v1495
    %v1657 = vunpack.c.l.b16 %v1496
    %v1658 = vunpack.c.l.b16 %v1497
    %v1659 = vunpack.c.l.b16 %v1498
    %v1660 = vunpack.c.l.b16 %v1499
    %v1661 = vunpack.c.l.b16 %v1500
    %v1662 = vunpack.c.l.b16 %v1501
    %v1663 = vunpack.c.l.b16 %v1502
    %v1664 = vunpack.c.l.b16 %v1503
    %v1665 = vpack.c.b16 %v1650, %v1649
    %v1666 = vpack.c.b16 %v1652, %v1651
    %v1667 = vpack.c.b16 %v1654, %v1653
    %v1668 = vpack.c.b16 %v1656, %v1655
    %v1669 = vpack.c.b16 %v1658, %v1657
    %v1670 = vpack.c.b16 %v1660, %v1659
    %v1671 = vpack.c.b16 %v1662, %v1661
    %v1672 = vpack.c.b16 %v1664, %v1663
    %1681 = vmatprep.subr.bf16.mxu0 0
    %1682 = vmatpush1.bf16.msra.mxu0 %v1672
    %1683 = vmatprep.subr.bf16.mxu0 0
    %1684 = vmatpush1.bf16.msra.mxu0 %v1671
    %1685 = vmatprep.subr.bf16.mxu0 0
    %1686 = vmatpush1.bf16.msra.mxu0 %v1670
    %1687 = vmatprep.subr.bf16.mxu0 0
    %1688 = vmatpush1.bf16.msra.mxu0 %v1669
    %1689 = vmatprep.subr.bf16.mxu0 0
    %1690 = vmatpush1.bf16.msra.mxu0 %v1668
    %1691 = vmatprep.subr.bf16.mxu0 0
    %1692 = vmatpush1.bf16.msra.mxu0 %v1667
    %1693 = vmatprep.subr.bf16.mxu0 0
    %1694 = vmatpush1.bf16.msra.mxu0 %v1666
    %1695 = vmatprep.subr.bf16.mxu0 0
    %1696 = vmatpush1.bf16.msra.mxu0 %v1665
    %1697 = vmatprep.subr.bf16.mxu0 0
    %1698 = vmatpush2.bf16.msra.mxu0 0
    %1699 = vmatprep.subr.bf16.mxu0 0
    %1700 = vmatpush2.bf16.msra.mxu0 0
    %1701 = vmatprep.subr.bf16.mxu0 0
    %1702 = vmatpush2.bf16.msra.mxu0 0
    %1703 = vmatprep.subr.bf16.mxu0 0
    %1704 = vmatpush2.bf16.msra.mxu0 0
    %1705 = vmatprep.subr.bf16.mxu0 0
    %1706 = vmatpush2.bf16.msra.mxu0 0
    %1707 = vmatprep.subr.bf16.mxu0 0
    %1708 = vmatpush2.bf16.msra.mxu0 0
    %1709 = vmatprep.subr.bf16.mxu0 0
    %1710 = vmatpush2.bf16.msra.mxu0 0
    %1711 = vmatprep.subr.bf16.mxu0 0
    %1712 = vmatpush2.bf16.msra.mxu0 0
    %1713 = vmatprep.mubr.bf16.mxu0 0
    %1714 = vmatmul.mubr.bf16.gmra.mxu0 %v1486
    %v1715 = vpop.f32.mrf.mxu0
    %v1716 = vadd.f32 %v1620, %v1715
    %v1717 = vpop.f32.mrf.mxu0
    %v1718 = vpop.f32.mrf.mxu0
    %v1719 = vadd.f32 %v1623, %v1718
    %v1720 = vpop.f32.mrf.mxu0
    %1721 = vmatprep.mubr.bf16.mxu0 0
    %1722 = vmatmul.mubr.bf16.gmra.mxu0 %v1487
    %v1723 = vpop.f32.mrf.mxu0
    %v1724 = vadd.f32 %v1628, %v1723
    %v1725 = vpop.f32.mrf.mxu0
    %v1726 = vpop.f32.mrf.mxu0
    %v1727 = vpop.f32.mrf.mxu0
    %1728 = vdwg.mxu0
    %v1729 = vld [vmem:[#allocation2 + $0x200] sm:$0xf]
    %v1730 = vld [vmem:[#allocation2 + $0x204] sm:$0xf]
    %v1731 = vld [vmem:[#allocation2 + $0x208] sm:$0xf]
    %v1732 = vld [vmem:[#allocation2 + $0x20c] sm:$0xf]
    %v1733 = vld [vmem:[#allocation2 + $0x210] sm:$0xf]
    %v1734 = vld [vmem:[#allocation2 + $0x214] sm:$0xf]
    %v1735 = vld [vmem:[#allocation2 + $0x218] sm:$0xf]
    %v1736 = vld [vmem:[#allocation2 + $0x21c] sm:$0xf]
    %v1737 = vld [vmem:[#allocation2 + $0x220] sm:$0xf]
    %v1738 = vld [vmem:[#allocation2 + $0x224] sm:$0xf]
    %v1739 = vld [vmem:[#allocation2 + $0x228] sm:$0xf]
    %v1740 = vld [vmem:[#allocation2 + $0x22c] sm:$0xf]
    %v1741 = vld [vmem:[#allocation2 + $0x230] sm:$0xf]
    %v1742 = vld [vmem:[#allocation2 + $0x234] sm:$0xf]
    %v1743 = vld [vmem:[#allocation2 + $0x238] sm:$0xf]
    %v1744 = vld [vmem:[#allocation2 + $0x23c] sm:$0xf]
    %v1747 = vrot.slane %v1486, 1
    %v1748 = vrot.slane %v1487, 1
    %v1749 = vsel %vm243, %v1747, %v1748
    %v1768 = vunpack.c.l.b16 %v1729
    %v1769 = vunpack.c.l.b16 %v1730
    %v1770 = vunpack.c.l.b16 %v1731
    %v1771 = vunpack.c.l.b16 %v1732
    %v1772 = vunpack.c.l.b16 %v1733
    %v1773 = vunpack.c.l.b16 %v1734
    %v1774 = vunpack.c.l.b16 %v1735
    %v1775 = vunpack.c.l.b16 %v1736
    %v1776 = vunpack.c.l.b16 %v1737
    %v1777 = vunpack.c.l.b16 %v1738
    %v1778 = vunpack.c.l.b16 %v1739
    %v1779 = vunpack.c.l.b16 %v1740
    %v1780 = vunpack.c.l.b16 %v1741
    %v1781 = vunpack.c.l.b16 %v1742
    %v1782 = vunpack.c.l.b16 %v1743
    %v1783 = vunpack.c.l.b16 %v1744
    %v1784 = vpack.c.b16 %v1769, %v1768
    %v1785 = vpack.c.b16 %v1771, %v1770
    %v1786 = vpack.c.b16 %v1773, %v1772
    %v1787 = vpack.c.b16 %v1775, %v1774
    %v1788 = vpack.c.b16 %v1777, %v1776
    %v1789 = vpack.c.b16 %v1779, %v1778
    %v1790 = vpack.c.b16 %v1781, %v1780
    %v1791 = vpack.c.b16 %v1783, %v1782
    %1800 = vmatprep.subr.bf16.mxu0 0
    %1801 = vmatpush1.bf16.msra.mxu0 %v1791
    %1802 = vmatprep.subr.bf16.mxu0 0
    %1803 = vmatpush1.bf16.msra.mxu0 %v1790
    %1804 = vmatprep.subr.bf16.mxu0 0
    %1805 = vmatpush1.bf16.msra.mxu0 %v1789
    %1806 = vmatprep.subr.bf16.mxu0 0
    %1807 = vmatpush1.bf16.msra.mxu0 %v1788
    %1808 = vmatprep.subr.bf16.mxu0 0
    %1809 = vmatpush1.bf16.msra.mxu0 %v1787
    %1810 = vmatprep.subr.bf16.mxu0 0
    %1811 = vmatpush1.bf16.msra.mxu0 %v1786
    %1812 = vmatprep.subr.bf16.mxu0 0
    %1813 = vmatpush1.bf16.msra.mxu0 %v1785
    %1814 = vmatprep.subr.bf16.mxu0 0
    %1815 = vmatpush1.bf16.msra.mxu0 %v1784
    %1816 = vmatprep.subr.bf16.mxu0 0
    %1817 = vmatpush2.bf16.msra.mxu0 0
    %1818 = vmatprep.subr.bf16.mxu0 0
    %1819 = vmatpush2.bf16.msra.mxu0 0
    %1820 = vmatprep.subr.bf16.mxu0 0
    %1821 = vmatpush2.bf16.msra.mxu0 0
    %1822 = vmatprep.subr.bf16.mxu0 0
    %1823 = vmatpush2.bf16.msra.mxu0 0
    %1824 = vmatprep.subr.bf16.mxu0 0
    %1825 = vmatpush2.bf16.msra.mxu0 0
    %1826 = vmatprep.subr.bf16.mxu0 0
    %1827 = vmatpush2.bf16.msra.mxu0 0
    %1828 = vmatprep.subr.bf16.mxu0 0
    %1829 = vmatpush2.bf16.msra.mxu0 0
    %1830 = vmatprep.subr.bf16.mxu0 0
    %1831 = vmatpush2.bf16.msra.mxu0 0
    %1832 = vmatprep.mubr.bf16.mxu0 0
    %1833 = vmatmul.mubr.bf16.gmra.mxu0 %v1749
    %v1834 = vpop.f32.mrf.mxu0
    %v1835 = vadd.f32 0.0, %v1834
    %v1836 = vpop.f32.mrf.mxu0
    %v1837 = vpop.f32.mrf.mxu0
    %v1838 = vadd.f32 0.0, %v1837
    %v1839 = vpop.f32.mrf.mxu0
    %1840 = vmatprep.mubr.bf16.mxu0 0
    %1841 = vmatmul.mubr.bf16.gmra.mxu0 %v1748
    %v1842 = vpop.f32.mrf.mxu0
    %v1843 = vadd.f32 0.0, %v1842
    %v1844 = vpop.f32.mrf.mxu0
    %v1845 = vpop.f32.mrf.mxu0
    %v1846 = vpop.f32.mrf.mxu0
    %1847 = vdwg.mxu0
    %v1848 = vadd.f32 %v1716, %v1835
    %v1849 = vadd.f32 %v1719, %v1838
    %v1850 = vadd.f32 %v1724, %v1843
    %v1851 = vld [vmem:[#allocation2 + $0x240] sm:$0x1]
    %v1852 = vunpack.c.l.bf16 %v1851
    %v1853 = vlaneseq
    %v1854 = vshrl.u32 %v1853, 7
    %v1855 = vsub.s32 0, %v1854
    %v1856 = vrot.slane %v1852, %v1855
    %v1857 = vadd.f32 %v1848, %v1856
    %v1858 = vadd.f32 %v1849, %v1856
    %v1859 = vadd.f32 %v1850, %v1856
    %v1860 = vmax.f32 %v1857, 0.0
    %v1861 = vmax.f32 %v1858, 0.0
    %v1862 = vmax.f32 %v1859, 0.0
    %1866 = vrot.lane.b32.xlu0 %v1860, 64
    %v1867 = vpop.permute.xlu0 %1866
    %1868 = vrot.lane.b32.xlu0 %v1861, 64
    %v1869 = vpop.permute.xlu0 %1868
    %1870 = vrot.lane.b32.xlu0 %v1862, 64
    %v1871 = vpop.permute.xlu0 %1870
    %v1875 = vmax.f32 %v1860, %v1867
    %v1876 = vmax.f32 %v1861, %v1869
    %v1877 = vmax.f32 %v1862, %v1871
    %v1878 = vpack.c.bf16 %v1876, %v1875
    %v1879 = vpack.c.bf16 %v1877, %v1877
    %vm1880 = vcmp.ge.s32.totalorder %v354, 6
    %vm1881 = vcmp.ge.s32.totalorder %v355, 6
    %v1882 = vsel %vm1880, 1, 0
    %v1883 = vsel %vm1881, 1, 0
    %v1884 = vmul.u32 %v1882, 6
    %v1885 = vmul.u32 %v1883, 6
    %v1886 = vsub.s32 %v354, %v1884
    %v1887 = vsub.s32 %v355, %v1885
    %v1888 = vsub.s32 %v1886, 1
    %v1889 = vsub.s32 %v1887, 1
    %vm1890 = vcmp.ge.s32.totalorder %v1888, 0
    %vm1891 = vcmp.ge.s32.totalorder %v1889, 0
    %vm1892 = vcmp.lt.s32.totalorder %v1888, 4
    %vm1893 = vcmp.lt.s32.totalorder %v1889, 4
    %vm1894 = vmand %vm1890, %vm1892
    %vm1895 = vmand %vm1891, %vm1893
    %v1896 = vmul.u32 %v1882, 10
    %v1897 = vmul.u32 %v1883, 10
    %v1898 = vmul.u32 %v1888, 2
    %v1899 = vmul.u32 %v1889, 2
    %v1900 = vadd.s32 %v1896, %v1898
    %v1901 = vadd.s32 %v1897, %v1899
    %vm1902 = vcmp.eq.s32.totalorder %v360, %v1900
    %vm1903 = vcmp.eq.s32.totalorder %v360, %v1901
    %vm1904 = vmand %vm1894, %vm1902
    %vm1905 = vmand %vm1895, %vm1903
    %v1906 = vsel %vm1904, 1.0, 0.0
    %v1907 = vsel %vm1905, 1.0, 0.0
    %v1908 = vpack.c.bf16 %v1907, %v1906
    %v1910 = vsel %vm1428, %v1908, 0
    %v1913 = vsel %vm437, %v1879, 0
    %1915 = vmatprep.subr.bf16.mxu0 0
    %1916 = vmatpush1.bf16.msra.mxu0 0
    %1917 = vmatprep.subr.bf16.mxu0 0
    %1918 = vmatpush1.bf16.msra.mxu0 0
    %1919 = vmatprep.subr.bf16.mxu0 0
    %1920 = vmatpush1.bf16.msra.mxu0 0
    %1921 = vmatprep.subr.bf16.mxu0 0
    %1922 = vmatpush1.bf16.msra.mxu0 0
    %1923 = vmatprep.subr.bf16.mxu0 0
    %1924 = vmatpush1.bf16.msra.mxu0 0
    %1925 = vmatprep.subr.bf16.mxu0 0
    %1926 = vmatpush1.bf16.msra.mxu0 0
    %1927 = vmatprep.subr.bf16.mxu0 0
    %1928 = vmatpush1.bf16.msra.mxu0 %v1913
    %1929 = vmatprep.subr.bf16.mxu0 0
    %1930 = vmatpush1.bf16.msra.mxu0 %v1878
    %1931 = vmatprep.subr.bf16.mxu0 0
    %1932 = vmatpush2.bf16.msra.mxu0 0
    %1933 = vmatprep.subr.bf16.mxu0 0
    %1934 = vmatpush2.bf16.msra.mxu0 0
    %1935 = vmatprep.subr.bf16.mxu0 0
    %1936 = vmatpush2.bf16.msra.mxu0 0
    %1937 = vmatprep.subr.bf16.mxu0 0
    %1938 = vmatpush2.bf16.msra.mxu0 0
    %1939 = vmatprep.subr.bf16.mxu0 0
    %1940 = vmatpush2.bf16.msra.mxu0 0
    %1941 = vmatprep.subr.bf16.mxu0 0
    %1942 = vmatpush2.bf16.msra.mxu0 0
    %1943 = vmatprep.subr.bf16.mxu0 0
    %1944 = vmatpush2.bf16.msra.mxu0 0
    %1945 = vmatprep.subr.bf16.mxu0 0
    %1946 = vmatpush2.bf16.msra.mxu0 0
    %1947 = vmatprep.mubr.bf16.mxu0 0
    %1948 = vmatmul.mubr.bf16.gmra.mxu0 %v1910
    %v1949 = vpop.f32.mrf.mxu0
    %v1950 = vadd.f32 0.0, %v1949
    %v1951 = vpop.f32.mrf.mxu0
    %v1952 = vpop.f32.mrf.mxu0
    %v1953 = vadd.f32 0.0, %v1952
    %v1954 = vpop.f32.mrf.mxu0
    %1955 = vdwg.mxu0
    %v1956 = vadd.s32 %v1900, 1
    %v1957 = vadd.s32 %v1901, 1
    %vm1958 = vcmp.eq.s32.totalorder %v360, %v1956
    %vm1959 = vcmp.eq.s32.totalorder %v360, %v1957
    %vm1960 = vmand %vm1894, %vm1958
    %vm1961 = vmand %vm1895, %vm1959
    %v1962 = vsel %vm1960, 1.0, 0.0
    %v1963 = vsel %vm1961, 1.0, 0.0
    %v1964 = vpack.c.bf16 %v1963, %v1962
    %v1966 = vsel %vm1428, %v1964, 0
    %1968 = vmatprep.subr.bf16.mxu0 0
    %1969 = vmatpush1.bf16.msra.mxu0 0
    %1970 = vmatprep.subr.bf16.mxu0 0
    %1971 = vmatpush1.bf16.msra.mxu0 0
    %1972 = vmatprep.subr.bf16.mxu0 0
    %1973 = vmatpush1.bf16.msra.mxu0 0
    %1974 = vmatprep.subr.bf16.mxu0 0
    %1975 = vmatpush1.bf16.msra.mxu0 0
    %1976 = vmatprep.subr.bf16.mxu0 0
    %1977 = vmatpush1.bf16.msra.mxu0 0
    %1978 = vmatprep.subr.bf16.mxu0 0
    %1979 = vmatpush1.bf16.msra.mxu0 0
    %1980 = vmatprep.subr.bf16.mxu0 0
    %1981 = vmatpush1.bf16.msra.mxu0 %v1913
    %1982 = vmatprep.subr.bf16.mxu0 0
    %1983 = vmatpush1.bf16.msra.mxu0 %v1878
    %1984 = vmatprep.subr.bf16.mxu0 0
    %1985 = vmatpush2.bf16.msra.mxu0 0
    %1986 = vmatprep.subr.bf16.mxu0 0
    %1987 = vmatpush2.bf16.msra.mxu0 0
    %1988 = vmatprep.subr.bf16.mxu0 0
    %1989 = vmatpush2.bf16.msra.mxu0 0
    %1990 = vmatprep.subr.bf16.mxu0 0
    %1991 = vmatpush2.bf16.msra.mxu0 0
    %1992 = vmatprep.subr.bf16.mxu0 0
    %1993 = vmatpush2.bf16.msra.mxu0 0
    %1994 = vmatprep.subr.bf16.mxu0 0
    %1995 = vmatpush2.bf16.msra.mxu0 0
    %1996 = vmatprep.subr.bf16.mxu0 0
    %1997 = vmatpush2.bf16.msra.mxu0 0
    %1998 = vmatprep.subr.bf16.mxu0 0
    %1999 = vmatpush2.bf16.msra.mxu0 0
    %2000 = vmatprep.mubr.bf16.mxu0 0
    %2001 = vmatmul.mubr.bf16.gmra.mxu0 %v1966
    %v2002 = vpop.f32.mrf.mxu0
    %v2003 = vadd.f32 0.0, %v2002
    %v2004 = vpop.f32.mrf.mxu0
    %v2005 = vpop.f32.mrf.mxu0
    %v2006 = vadd.f32 0.0, %v2005
    %v2007 = vpop.f32.mrf.mxu0
    %2008 = vdwg.mxu0
    %v2009 = vmax.f32 %v1950, %v2003
    %v2010 = vmax.f32 %v1953, %v2006
    %v2011 = vpack.c.bf16 %v2010, %v2009
    %v2012 = vld [vmem:[#allocation2 + $0x248] sm:$0xf]
    %v2013 = vld [vmem:[#allocation2 + $0x24c] sm:$0xf]
    %v2014 = vld [vmem:[#allocation2 + $0x250] sm:$0xf]
    %v2015 = vld [vmem:[#allocation2 + $0x254] sm:$0xf]
    %v2016 = vld [vmem:[#allocation2 + $0x258] sm:$0xf]
    %v2017 = vld [vmem:[#allocation2 + $0x25c] sm:$0xf]
    %v2018 = vld [vmem:[#allocation2 + $0x260] sm:$0xf]
    %v2019 = vld [vmem:[#allocation2 + $0x264] sm:$0xf]
    %v2020 = vld [vmem:[#allocation2 + $0x268] sm:$0xf]
    %v2021 = vld [vmem:[#allocation2 + $0x26c] sm:$0xf]
    %v2022 = vld [vmem:[#allocation2 + $0x270] sm:$0xf]
    %v2023 = vld [vmem:[#allocation2 + $0x274] sm:$0xf]
    %v2024 = vld [vmem:[#allocation2 + $0x278] sm:$0xf]
    %v2025 = vld [vmem:[#allocation2 + $0x27c] sm:$0xf]
    %v2026 = vld [vmem:[#allocation2 + $0x280] sm:$0xf]
    %v2027 = vld [vmem:[#allocation2 + $0x284] sm:$0xf]
    %v2029 = vshrl.u32 %v2011, 16
    %v2031 = vshll.u32 %v2011, 16
    %v2033 = vrot.slane %v2031, 1
    %v2034 = vor.u32 %v2029, %v2033
    %v2043 = vunpack.c.l.b16 %v2020
    %v2044 = vunpack.c.l.b16 %v2021
    %v2045 = vunpack.c.l.b16 %v2022
    %v2046 = vunpack.c.l.b16 %v2023
    %v2047 = vunpack.c.l.b16 %v2024
    %v2048 = vunpack.c.l.b16 %v2025
    %v2049 = vunpack.c.l.b16 %v2026
    %v2050 = vunpack.c.l.b16 %v2027
    %v2051 = vpack.c.b16 %v2044, %v2043
    %v2052 = vpack.c.b16 %v2046, %v2045
    %v2053 = vpack.c.b16 %v2048, %v2047
    %v2054 = vpack.c.b16 %v2050, %v2049
    %v2060 = vsel %vm1175, %v2034, 0
    %2062 = vmatprep.subr.bf16.mxu0 0
    %2063 = vmatpush1.bf16.msra.mxu0 0
    %2064 = vmatprep.subr.bf16.mxu0 0
    %2065 = vmatpush1.bf16.msra.mxu0 0
    %2066 = vmatprep.subr.bf16.mxu0 0
    %2067 = vmatpush1.bf16.msra.mxu0 0
    %2068 = vmatprep.subr.bf16.mxu0 0
    %2069 = vmatpush1.bf16.msra.mxu0 0
    %2070 = vmatprep.subr.bf16.mxu0 0
    %2071 = vmatpush1.bf16.msra.mxu0 %v2054
    %2072 = vmatprep.subr.bf16.mxu0 0
    %2073 = vmatpush1.bf16.msra.mxu0 %v2053
    %2074 = vmatprep.subr.bf16.mxu0 0
    %2075 = vmatpush1.bf16.msra.mxu0 %v2052
    %2076 = vmatprep.subr.bf16.mxu0 0
    %2077 = vmatpush1.bf16.msra.mxu0 %v2051
    %2078 = vmatprep.subr.bf16.mxu0 0
    %2079 = vmatpush2.bf16.msra.mxu0 0
    %2080 = vmatprep.subr.bf16.mxu0 0
    %2081 = vmatpush2.bf16.msra.mxu0 0
    %2082 = vmatprep.subr.bf16.mxu0 0
    %2083 = vmatpush2.bf16.msra.mxu0 0
    %2084 = vmatprep.subr.bf16.mxu0 0
    %2085 = vmatpush2.bf16.msra.mxu0 0
    %2086 = vmatprep.subr.bf16.mxu0 0
    %2087 = vmatpush2.bf16.msra.mxu0 0
    %2088 = vmatprep.subr.bf16.mxu0 0
    %2089 = vmatpush2.bf16.msra.mxu0 0
    %2090 = vmatprep.subr.bf16.mxu0 0
    %2091 = vmatpush2.bf16.msra.mxu0 0
    %2092 = vmatprep.subr.bf16.mxu0 0
    %2093 = vmatpush2.bf16.msra.mxu0 0
    %2094 = vmatprep.mubr.bf16.mxu0 0
    %2095 = vmatmul.mubr.bf16.gmra.mxu0 %v2060
    %v2096 = vpop.f32.mrf.mxu0
    %v2097 = vadd.f32 0.0, %v2096
    %v2098 = vpop.f32.mrf.mxu0
    %v2099 = vpop.f32.mrf.mxu0
    %v2100 = vadd.f32 0.0, %v2099
    %v2101 = vpop.f32.mrf.mxu0
    %2102 = vdwg.mxu0
    %v2111 = vunpack.c.l.b16 %v2012
    %v2112 = vunpack.c.l.b16 %v2013
    %v2113 = vunpack.c.l.b16 %v2014
    %v2114 = vunpack.c.l.b16 %v2015
    %v2115 = vunpack.c.l.b16 %v2016
    %v2116 = vunpack.c.l.b16 %v2017
    %v2117 = vunpack.c.l.b16 %v2018
    %v2118 = vunpack.c.l.b16 %v2019
    %v2119 = vpack.c.b16 %v2112, %v2111
    %v2120 = vpack.c.b16 %v2114, %v2113
    %v2121 = vpack.c.b16 %v2116, %v2115
    %v2122 = vpack.c.b16 %v2118, %v2117
    %v2127 = vsel %vm1175, %v2011, 0
    %2129 = vmatprep.subr.bf16.mxu0 0
    %2130 = vmatpush1.bf16.msra.mxu0 0
    %2131 = vmatprep.subr.bf16.mxu0 0
    %2132 = vmatpush1.bf16.msra.mxu0 0
    %2133 = vmatprep.subr.bf16.mxu0 0
    %2134 = vmatpush1.bf16.msra.mxu0 0
    %2135 = vmatprep.subr.bf16.mxu0 0
    %2136 = vmatpush1.bf16.msra.mxu0 0
    %2137 = vmatprep.subr.bf16.mxu0 0
    %2138 = vmatpush1.bf16.msra.mxu0 %v2122
    %2139 = vmatprep.subr.bf16.mxu0 0
    %2140 = vmatpush1.bf16.msra.mxu0 %v2121
    %2141 = vmatprep.subr.bf16.mxu0 0
    %2142 = vmatpush1.bf16.msra.mxu0 %v2120
    %2143 = vmatprep.subr.bf16.mxu0 0
    %2144 = vmatpush1.bf16.msra.mxu0 %v2119
    %2145 = vmatprep.subr.bf16.mxu0 0
    %2146 = vmatpush2.bf16.msra.mxu0 0
    %2147 = vmatprep.subr.bf16.mxu0 0
    %2148 = vmatpush2.bf16.msra.mxu0 0
    %2149 = vmatprep.subr.bf16.mxu0 0
    %2150 = vmatpush2.bf16.msra.mxu0 0
    %2151 = vmatprep.subr.bf16.mxu0 0
    %2152 = vmatpush2.bf16.msra.mxu0 0
    %2153 = vmatprep.subr.bf16.mxu0 0
    %2154 = vmatpush2.bf16.msra.mxu0 0
    %2155 = vmatprep.subr.bf16.mxu0 0
    %2156 = vmatpush2.bf16.msra.mxu0 0
    %2157 = vmatprep.subr.bf16.mxu0 0
    %2158 = vmatpush2.bf16.msra.mxu0 0
    %2159 = vmatprep.subr.bf16.mxu0 0
    %2160 = vmatpush2.bf16.msra.mxu0 0
    %2161 = vmatprep.mubr.bf16.mxu0 0
    %2162 = vmatmul.mubr.bf16.gmra.mxu0 %v2127
    %v2163 = vpop.f32.mrf.mxu0
    %v2164 = vadd.f32 %v2097, %v2163
    %v2165 = vpop.f32.mrf.mxu0
    %v2166 = vpop.f32.mrf.mxu0
    %v2167 = vadd.f32 %v2100, %v2166
    %v2168 = vpop.f32.mrf.mxu0
    %2169 = vdwg.mxu0
    %v2170 = vld [vmem:[#allocation2 + $0x288] sm:$0xf]
    %v2171 = vld [vmem:[#allocation2 + $0x28c] sm:$0xf]
    %v2172 = vld [vmem:[#allocation2 + $0x290] sm:$0xf]
    %v2173 = vld [vmem:[#allocation2 + $0x294] sm:$0xf]
    %v2174 = vld [vmem:[#allocation2 + $0x298] sm:$0xf]
    %v2175 = vld [vmem:[#allocation2 + $0x29c] sm:$0xf]
    %v2176 = vld [vmem:[#allocation2 + $0x2a0] sm:$0xf]
    %v2177 = vld [vmem:[#allocation2 + $0x2a4] sm:$0xf]
    %v2179 = vrot.slane %v2011, 1
    %v2188 = vunpack.c.l.b16 %v2170
    %v2189 = vunpack.c.l.b16 %v2171
    %v2190 = vunpack.c.l.b16 %v2172
    %v2191 = vunpack.c.l.b16 %v2173
    %v2192 = vunpack.c.l.b16 %v2174
    %v2193 = vunpack.c.l.b16 %v2175
    %v2194 = vunpack.c.l.b16 %v2176
    %v2195 = vunpack.c.l.b16 %v2177
    %v2196 = vpack.c.b16 %v2189, %v2188
    %v2197 = vpack.c.b16 %v2191, %v2190
    %v2198 = vpack.c.b16 %v2193, %v2192
    %v2199 = vpack.c.b16 %v2195, %v2194
    %v2205 = vsel %vm1175, %v2179, 0
    %2207 = vmatprep.subr.bf16.mxu0 0
    %2208 = vmatpush1.bf16.msra.mxu0 0
    %2209 = vmatprep.subr.bf16.mxu0 0
    %2210 = vmatpush1.bf16.msra.mxu0 0
    %2211 = vmatprep.subr.bf16.mxu0 0
    %2212 = vmatpush1.bf16.msra.mxu0 0
    %2213 = vmatprep.subr.bf16.mxu0 0
    %2214 = vmatpush1.bf16.msra.mxu0 0
    %2215 = vmatprep.subr.bf16.mxu0 0
    %2216 = vmatpush1.bf16.msra.mxu0 %v2199
    %2217 = vmatprep.subr.bf16.mxu0 0
    %2218 = vmatpush1.bf16.msra.mxu0 %v2198
    %2219 = vmatprep.subr.bf16.mxu0 0
    %2220 = vmatpush1.bf16.msra.mxu0 %v2197
    %2221 = vmatprep.subr.bf16.mxu0 0
    %2222 = vmatpush1.bf16.msra.mxu0 %v2196
    %2223 = vmatprep.subr.bf16.mxu0 0
    %2224 = vmatpush2.bf16.msra.mxu0 0
    %2225 = vmatprep.subr.bf16.mxu0 0
    %2226 = vmatpush2.bf16.msra.mxu0 0
    %2227 = vmatprep.subr.bf16.mxu0 0
    %2228 = vmatpush2.bf16.msra.mxu0 0
    %2229 = vmatprep.subr.bf16.mxu0 0
    %2230 = vmatpush2.bf16.msra.mxu0 0
    %2231 = vmatprep.subr.bf16.mxu0 0
    %2232 = vmatpush2.bf16.msra.mxu0 0
    %2233 = vmatprep.subr.bf16.mxu0 0
    %2234 = vmatpush2.bf16.msra.mxu0 0
    %2235 = vmatprep.subr.bf16.mxu0 0
    %2236 = vmatpush2.bf16.msra.mxu0 0
    %2237 = vmatprep.subr.bf16.mxu0 0
    %2238 = vmatpush2.bf16.msra.mxu0 0
    %2239 = vmatprep.mubr.bf16.mxu0 0
    %2240 = vmatmul.mubr.bf16.gmra.mxu0 %v2205
    %v2241 = vpop.f32.mrf.mxu0
    %v2242 = vadd.f32 0.0, %v2241
    %v2243 = vpop.f32.mrf.mxu0
    %v2244 = vpop.f32.mrf.mxu0
    %v2245 = vadd.f32 0.0, %v2244
    %v2246 = vpop.f32.mrf.mxu0
    %2247 = vdwg.mxu0
    %v2248 = vadd.f32 %v2164, %v2242
    %v2249 = vadd.f32 %v2167, %v2245
    %v2250 = vld [vmem:[#allocation2 + $0x2a8] sm:$0x1]
    %v2251 = vunpack.c.l.bf16 %v2250
    %v2252 = vlaneseq
    %v2253 = vshrl.u32 %v2252, 7
    %v2254 = vsub.s32 0, %v2253
    %v2255 = vrot.slane %v2251, %v2254
    %v2256 = vadd.f32 %v2248, %v2255
    %v2257 = vadd.f32 %v2249, %v2255
    %v2258 = vmax.f32 %v2256, 0.0
    %v2259 = vmax.f32 %v2257, 0.0
    %v2260 = vadd.s32 %v1884, %v1888
    %v2261 = vadd.s32 %v1885, %v1889
    %vm2262 = vcmp.eq.s32.totalorder %v360, %v2260
    %vm2263 = vcmp.eq.s32.totalorder %v360, %v2261
    %vm2264 = vmand %vm1894, %vm2262
    %vm2265 = vmand %vm1895, %vm2263
    %v2266 = vsel %vm2264, 1.0, 0.0
    %v2267 = vsel %vm2265, 1.0, 0.0
    %v2268 = vpack.c.bf16 %v2267, %v2266
    %v2269 = vpack.c.bf16 %v2259, %v2258
    %vm2270 = vcmask 80896
    %v2272 = vsel %vm2270, %v2268, 0
    %vm2274 = vcmask 1044480
    %v2276 = vsel %vm2274, %v2269, 0
    %2278 = vmatprep.subr.bf16.mxu0 0
    %2279 = vmatpush1.bf16.msra.mxu0 0
    %2280 = vmatprep.subr.bf16.mxu0 0
    %2281 = vmatpush1.bf16.msra.mxu0 0
    %2282 = vmatprep.subr.bf16.mxu0 0
    %2283 = vmatpush1.bf16.msra.mxu0 0
    %2284 = vmatprep.subr.bf16.mxu0 0
    %2285 = vmatpush1.bf16.msra.mxu0 0
    %2286 = vmatprep.subr.bf16.mxu0 0
    %2287 = vmatpush1.bf16.msra.mxu0 0
    %2288 = vmatprep.subr.bf16.mxu0 0
    %2289 = vmatpush1.bf16.msra.mxu0 0
    %2290 = vmatprep.subr.bf16.mxu0 0
    %2291 = vmatpush1.bf16.msra.mxu0 0
    %2292 = vmatprep.subr.bf16.mxu0 0
    %2293 = vmatpush1.bf16.msra.mxu0 %v2276
    %2294 = vmatprep.subr.bf16.mxu0 0
    %2295 = vmatpush2.bf16.msra.mxu0 0
    %2296 = vmatprep.subr.bf16.mxu0 0
    %2297 = vmatpush2.bf16.msra.mxu0 0
    %2298 = vmatprep.subr.bf16.mxu0 0
    %2299 = vmatpush2.bf16.msra.mxu0 0
    %2300 = vmatprep.subr.bf16.mxu0 0
    %2301 = vmatpush2.bf16.msra.mxu0 0
    %2302 = vmatprep.subr.bf16.mxu0 0
    %2303 = vmatpush2.bf16.msra.mxu0 0
    %2304 = vmatprep.subr.bf16.mxu0 0
    %2305 = vmatpush2.bf16.msra.mxu0 0
    %2306 = vmatprep.subr.bf16.mxu0 0
    %2307 = vmatpush2.bf16.msra.mxu0 0
    %2308 = vmatprep.subr.bf16.mxu0 0
    %2309 = vmatpush2.bf16.msra.mxu0 0
    %2310 = vmatprep.mubr.bf16.mxu0 0
    %2311 = vmatmul.mubr.bf16.gmra.mxu0 %v2272
    %v2312 = vpop.f32.mrf.mxu0
    %v2313 = vadd.f32 0.0, %v2312
    %v2314 = vpop.f32.mrf.mxu0
    %v2315 = vpop.f32.mrf.mxu0
    %v2316 = vadd.f32 0.0, %v2315
    %v2317 = vpop.f32.mrf.mxu0
    %2318 = vdwg.mxu0
    %v2319 = vpack.c.bf16 %v2316, %v2313
    %v2320 = vld [vmem:[#allocation2 + $0x2b0] sm:$0xf]
    %v2321 = vld [vmem:[#allocation2 + $0x2b4] sm:$0xf]
    %v2322 = vld [vmem:[#allocation2 + $0x2b8] sm:$0xf]
    %v2323 = vld [vmem:[#allocation2 + $0x2bc] sm:$0xf]
    %v2324 = vld [vmem:[#allocation2 + $0x2c0] sm:$0xf]
    %v2325 = vld [vmem:[#allocation2 + $0x2c4] sm:$0xf]
    %v2326 = vld [vmem:[#allocation2 + $0x2c8] sm:$0xf]
    %v2327 = vld [vmem:[#allocation2 + $0x2cc] sm:$0xf]
    %v2328 = vld [vmem:[#allocation2 + $0x2d0] sm:$0xf]
    %v2329 = vld [vmem:[#allocation2 + $0x2d4] sm:$0xf]
    %v2330 = vld [vmem:[#allocation2 + $0x2d8] sm:$0xf]
    %v2331 = vld [vmem:[#allocation2 + $0x2dc] sm:$0xf]
    %v2332 = vld [vmem:[#allocation2 + $0x2e0] sm:$0xf]
    %v2333 = vld [vmem:[#allocation2 + $0x2e4] sm:$0xf]
    %v2334 = vld [vmem:[#allocation2 + $0x2e8] sm:$0xf]
    %v2335 = vld [vmem:[#allocation2 + $0x2ec] sm:$0xf]
    %v2336 = vld [vmem:[#allocation2 + $0x2f0] sm:$0xf]
    %v2337 = vld [vmem:[#allocation2 + $0x2f4] sm:$0xf]
    %v2338 = vld [vmem:[#allocation2 + $0x2f8] sm:$0xf]
    %v2339 = vld [vmem:[#allocation2 + $0x2fc] sm:$0xf]
    %v2340 = vld [vmem:[#allocation2 + $0x300] sm:$0xf]
    %v2341 = vld [vmem:[#allocation2 + $0x304] sm:$0xf]
    %v2342 = vld [vmem:[#allocation2 + $0x308] sm:$0xf]
    %v2343 = vld [vmem:[#allocation2 + $0x30c] sm:$0xf]
    %v2344 = vld [vmem:[#allocation2 + $0x310] sm:$0xf]
    %v2345 = vld [vmem:[#allocation2 + $0x314] sm:$0xf]
    %v2346 = vld [vmem:[#allocation2 + $0x318] sm:$0xf]
    %v2347 = vld [vmem:[#allocation2 + $0x31c] sm:$0xf]
    %v2348 = vld [vmem:[#allocation2 + $0x320] sm:$0xf]
    %v2349 = vld [vmem:[#allocation2 + $0x324] sm:$0xf]
    %v2350 = vld [vmem:[#allocation2 + $0x328] sm:$0xf]
    %v2351 = vld [vmem:[#allocation2 + $0x32c] sm:$0xf]
    %v2353 = vshrl.u32 %v2319, 16
    %v2355 = vshll.u32 %v2319, 16
    %v2357 = vrot.slane %v2355, 1
    %v2358 = vor.u32 %v2353, %v2357
    %v2376 = vunpack.c.l.b16 %v2336
    %v2377 = vunpack.c.l.b16 %v2337
    %v2378 = vunpack.c.l.b16 %v2338
    %v2379 = vunpack.c.l.b16 %v2339
    %v2380 = vunpack.c.l.b16 %v2340
    %v2381 = vunpack.c.l.b16 %v2341
    %v2382 = vunpack.c.l.b16 %v2342
    %v2383 = vunpack.c.l.b16 %v2343
    %v2384 = vunpack.c.l.b16 %v2344
    %v2385 = vunpack.c.l.b16 %v2345
    %v2386 = vunpack.c.l.b16 %v2346
    %v2387 = vunpack.c.l.b16 %v2347
    %v2388 = vunpack.c.l.b16 %v2348
    %v2389 = vunpack.c.l.b16 %v2349
    %v2390 = vunpack.c.l.b16 %v2350
    %v2391 = vunpack.c.l.b16 %v2351
    %v2392 = vpack.c.b16 %v2377, %v2376
    %v2393 = vpack.c.b16 %v2379, %v2378
    %v2394 = vpack.c.b16 %v2381, %v2380
    %v2395 = vpack.c.b16 %v2383, %v2382
    %v2396 = vpack.c.b16 %v2385, %v2384
    %v2397 = vpack.c.b16 %v2387, %v2386
    %v2398 = vpack.c.b16 %v2389, %v2388
    %v2399 = vpack.c.b16 %v2391, %v2390
    %2408 = vmatprep.subr.bf16.mxu0 0
    %2409 = vmatpush1.bf16.msra.mxu0 %v2399
    %2410 = vmatprep.subr.bf16.mxu0 0
    %2411 = vmatpush1.bf16.msra.mxu0 %v2398
    %2412 = vmatprep.subr.bf16.mxu0 0
    %2413 = vmatpush1.bf16.msra.mxu0 %v2397
    %2414 = vmatprep.subr.bf16.mxu0 0
    %2415 = vmatpush1.bf16.msra.mxu0 %v2396
    %2416 = vmatprep.subr.bf16.mxu0 0
    %2417 = vmatpush1.bf16.msra.mxu0 %v2395
    %2418 = vmatprep.subr.bf16.mxu0 0
    %2419 = vmatpush1.bf16.msra.mxu0 %v2394
    %2420 = vmatprep.subr.bf16.mxu0 0
    %2421 = vmatpush1.bf16.msra.mxu0 %v2393
    %2422 = vmatprep.subr.bf16.mxu0 0
    %2423 = vmatpush1.bf16.msra.mxu0 %v2392
    %2424 = vmatprep.subr.bf16.mxu0 0
    %2425 = vmatpush2.bf16.msra.mxu0 0
    %2426 = vmatprep.subr.bf16.mxu0 0
    %2427 = vmatpush2.bf16.msra.mxu0 0
    %2428 = vmatprep.subr.bf16.mxu0 0
    %2429 = vmatpush2.bf16.msra.mxu0 0
    %2430 = vmatprep.subr.bf16.mxu0 0
    %2431 = vmatpush2.bf16.msra.mxu0 0
    %2432 = vmatprep.subr.bf16.mxu0 0
    %2433 = vmatpush2.bf16.msra.mxu0 0
    %2434 = vmatprep.subr.bf16.mxu0 0
    %2435 = vmatpush2.bf16.msra.mxu0 0
    %2436 = vmatprep.subr.bf16.mxu0 0
    %2437 = vmatpush2.bf16.msra.mxu0 0
    %2438 = vmatprep.subr.bf16.mxu0 0
    %2439 = vmatpush2.bf16.msra.mxu0 0
    %2440 = vmatprep.mubr.bf16.mxu0 0
    %2441 = vmatmul.mubr.bf16.gmra.mxu0 %v2358
    %v2442 = vpop.f32.mrf.mxu0
    %v2443 = vadd.f32 0.0, %v2442
    %v2444 = vpop.f32.mrf.mxu0
    %v2445 = vpop.f32.mrf.mxu0
    %v2446 = vadd.f32 0.0, %v2445
    %v2447 = vpop.f32.mrf.mxu0
    %2448 = vdwg.mxu0
    %v2465 = vunpack.c.l.b16 %v2320
    %v2466 = vunpack.c.l.b16 %v2321
    %v2467 = vunpack.c.l.b16 %v2322
    %v2468 = vunpack.c.l.b16 %v2323
    %v2469 = vunpack.c.l.b16 %v2324
    %v2470 = vunpack.c.l.b16 %v2325
    %v2471 = vunpack.c.l.b16 %v2326
    %v2472 = vunpack.c.l.b16 %v2327
    %v2473 = vunpack.c.l.b16 %v2328
    %v2474 = vunpack.c.l.b16 %v2329
    %v2475 = vunpack.c.l.b16 %v2330
    %v2476 = vunpack.c.l.b16 %v2331
    %v2477 = vunpack.c.l.b16 %v2332
    %v2478 = vunpack.c.l.b16 %v2333
    %v2479 = vunpack.c.l.b16 %v2334
    %v2480 = vunpack.c.l.b16 %v2335
    %v2481 = vpack.c.b16 %v2466, %v2465
    %v2482 = vpack.c.b16 %v2468, %v2467
    %v2483 = vpack.c.b16 %v2470, %v2469
    %v2484 = vpack.c.b16 %v2472, %v2471
    %v2485 = vpack.c.b16 %v2474, %v2473
    %v2486 = vpack.c.b16 %v2476, %v2475
    %v2487 = vpack.c.b16 %v2478, %v2477
    %v2488 = vpack.c.b16 %v2480, %v2479
    %2497 = vmatprep.subr.bf16.mxu0 0
    %2498 = vmatpush1.bf16.msra.mxu0 %v2488
    %2499 = vmatprep.subr.bf16.mxu0 0
    %2500 = vmatpush1.bf16.msra.mxu0 %v2487
    %2501 = vmatprep.subr.bf16.mxu0 0
    %2502 = vmatpush1.bf16.msra.mxu0 %v2486
    %2503 = vmatprep.subr.bf16.mxu0 0
    %2504 = vmatpush1.bf16.msra.mxu0 %v2485
    %2505 = vmatprep.subr.bf16.mxu0 0
    %2506 = vmatpush1.bf16.msra.mxu0 %v2484
    %2507 = vmatprep.subr.bf16.mxu0 0
    %2508 = vmatpush1.bf16.msra.mxu0 %v2483
    %2509 = vmatprep.subr.bf16.mxu0 0
    %2510 = vmatpush1.bf16.msra.mxu0 %v2482
    %2511 = vmatprep.subr.bf16.mxu0 0
    %2512 = vmatpush1.bf16.msra.mxu0 %v2481
    %2513 = vmatprep.subr.bf16.mxu0 0
    %2514 = vmatpush2.bf16.msra.mxu0 0
    %2515 = vmatprep.subr.bf16.mxu0 0
    %2516 = vmatpush2.bf16.msra.mxu0 0
    %2517 = vmatprep.subr.bf16.mxu0 0
    %2518 = vmatpush2.bf16.msra.mxu0 0
    %2519 = vmatprep.subr.bf16.mxu0 0
    %2520 = vmatpush2.bf16.msra.mxu0 0
    %2521 = vmatprep.subr.bf16.mxu0 0
    %2522 = vmatpush2.bf16.msra.mxu0 0
    %2523 = vmatprep.subr.bf16.mxu0 0
    %2524 = vmatpush2.bf16.msra.mxu0 0
    %2525 = vmatprep.subr.bf16.mxu0 0
    %2526 = vmatpush2.bf16.msra.mxu0 0
    %2527 = vmatprep.subr.bf16.mxu0 0
    %2528 = vmatpush2.bf16.msra.mxu0 0
    %2529 = vmatprep.mubr.bf16.mxu0 0
    %2530 = vmatmul.mubr.bf16.gmra.mxu0 %v2319
    %v2531 = vpop.f32.mrf.mxu0
    %v2532 = vadd.f32 %v2443, %v2531
    %v2533 = vpop.f32.mrf.mxu0
    %v2534 = vpop.f32.mrf.mxu0
    %v2535 = vadd.f32 %v2446, %v2534
    %v2536 = vpop.f32.mrf.mxu0
    %2537 = vdwg.mxu0
    %v2538 = vld [vmem:[#allocation2 + $0x330] sm:$0xf]
    %v2539 = vld [vmem:[#allocation2 + $0x334] sm:$0xf]
    %v2540 = vld [vmem:[#allocation2 + $0x338] sm:$0xf]
    %v2541 = vld [vmem:[#allocation2 + $0x33c] sm:$0xf]
    %v2542 = vld [vmem:[#allocation2 + $0x340] sm:$0xf]
    %v2543 = vld [vmem:[#allocation2 + $0x344] sm:$0xf]
    %v2544 = vld [vmem:[#allocation2 + $0x348] sm:$0xf]
    %v2545 = vld [vmem:[#allocation2 + $0x34c] sm:$0xf]
    %v2546 = vld [vmem:[#allocation2 + $0x350] sm:$0xf]
    %v2547 = vld [vmem:[#allocation2 + $0x354] sm:$0xf]
    %v2548 = vld [vmem:[#allocation2 + $0x358] sm:$0xf]
    %v2549 = vld [vmem:[#allocation2 + $0x35c] sm:$0xf]
    %v2550 = vld [vmem:[#allocation2 + $0x360] sm:$0xf]
    %v2551 = vld [vmem:[#allocation2 + $0x364] sm:$0xf]
    %v2552 = vld [vmem:[#allocation2 + $0x368] sm:$0xf]
    %v2553 = vld [vmem:[#allocation2 + $0x36c] sm:$0xf]
    %v2555 = vrot.slane %v2319, 1
    %v2573 = vunpack.c.l.b16 %v2538
    %v2574 = vunpack.c.l.b16 %v2539
    %v2575 = vunpack.c.l.b16 %v2540
    %v2576 = vunpack.c.l.b16 %v2541
    %v2577 = vunpack.c.l.b16 %v2542
    %v2578 = vunpack.c.l.b16 %v2543
    %v2579 = vunpack.c.l.b16 %v2544
    %v2580 = vunpack.c.l.b16 %v2545
    %v2581 = vunpack.c.l.b16 %v2546
    %v2582 = vunpack.c.l.b16 %v2547
    %v2583 = vunpack.c.l.b16 %v2548
    %v2584 = vunpack.c.l.b16 %v2549
    %v2585 = vunpack.c.l.b16 %v2550
    %v2586 = vunpack.c.l.b16 %v2551
    %v2587 = vunpack.c.l.b16 %v2552
    %v2588 = vunpack.c.l.b16 %v2553
    %v2589 = vpack.c.b16 %v2574, %v2573
    %v2590 = vpack.c.b16 %v2576, %v2575
    %v2591 = vpack.c.b16 %v2578, %v2577
    %v2592 = vpack.c.b16 %v2580, %v2579
    %v2593 = vpack.c.b16 %v2582, %v2581
    %v2594 = vpack.c.b16 %v2584, %v2583
    %v2595 = vpack.c.b16 %v2586, %v2585
    %v2596 = vpack.c.b16 %v2588, %v2587
    %2605 = vmatprep.subr.bf16.mxu0 0
    %2606 = vmatpush1.bf16.msra.mxu0 %v2596
    %2607 = vmatprep.subr.bf16.mxu0 0
    %2608 = vmatpush1.bf16.msra.mxu0 %v2595
    %2609 = vmatprep.subr.bf16.mxu0 0
    %2610 = vmatpush1.bf16.msra.mxu0 %v2594
    %2611 = vmatprep.subr.bf16.mxu0 0
    %2612 = vmatpush1.bf16.msra.mxu0 %v2593
    %2613 = vmatprep.subr.bf16.mxu0 0
    %2614 = vmatpush1.bf16.msra.mxu0 %v2592
    %2615 = vmatprep.subr.bf16.mxu0 0
    %2616 = vmatpush1.bf16.msra.mxu0 %v2591
    %2617 = vmatprep.subr.bf16.mxu0 0
    %2618 = vmatpush1.bf16.msra.mxu0 %v2590
    %2619 = vmatprep.subr.bf16.mxu0 0
    %2620 = vmatpush1.bf16.msra.mxu0 %v2589
    %2621 = vmatprep.subr.bf16.mxu0 0
    %2622 = vmatpush2.bf16.msra.mxu0 0
    %2623 = vmatprep.subr.bf16.mxu0 0
    %2624 = vmatpush2.bf16.msra.mxu0 0
    %2625 = vmatprep.subr.bf16.mxu0 0
    %2626 = vmatpush2.bf16.msra.mxu0 0
    %2627 = vmatprep.subr.bf16.mxu0 0
    %2628 = vmatpush2.bf16.msra.mxu0 0
    %2629 = vmatprep.subr.bf16.mxu0 0
    %2630 = vmatpush2.bf16.msra.mxu0 0
    %2631 = vmatprep.subr.bf16.mxu0 0
    %2632 = vmatpush2.bf16.msra.mxu0 0
    %2633 = vmatprep.subr.bf16.mxu0 0
    %2634 = vmatpush2.bf16.msra.mxu0 0
    %2635 = vmatprep.subr.bf16.mxu0 0
    %2636 = vmatpush2.bf16.msra.mxu0 0
    %2637 = vmatprep.mubr.bf16.mxu0 0
    %2638 = vmatmul.mubr.bf16.gmra.mxu0 %v2555
    %v2639 = vpop.f32.mrf.mxu0
    %v2640 = vadd.f32 0.0, %v2639
    %v2641 = vpop.f32.mrf.mxu0
    %v2642 = vpop.f32.mrf.mxu0
    %v2643 = vadd.f32 0.0, %v2642
    %v2644 = vpop.f32.mrf.mxu0
    %2645 = vdwg.mxu0
    %v2646 = vadd.f32 %v2532, %v2640
    %v2647 = vadd.f32 %v2535, %v2643
    %v2648 = vld [vmem:[#allocation2 + $0x370] sm:$0x1]
    %v2649 = vunpack.c.l.bf16 %v2648
    %v2650 = vlaneseq
    %v2651 = vshrl.u32 %v2650, 7
    %v2652 = vsub.s32 0, %v2651
    %v2653 = vrot.slane %v2649, %v2652
    %v2654 = vadd.f32 %v2646, %v2653
    %v2655 = vadd.f32 %v2647, %v2653
    %v2656 = vmax.f32 %v2654, 0.0
    %v2657 = vmax.f32 %v2655, 0.0
    %2660 = vrot.lane.b32.xlu0 %v2656, 64
    %v2661 = vpop.permute.xlu0 %2660
    %2662 = vrot.lane.b32.xlu0 %v2657, 64
    %v2663 = vpop.permute.xlu0 %2662
    %v2666 = vadd.f32 %v2656, %v2661
    %v2667 = vadd.f32 %v2657, %v2663
    %v2668 = vmul.f32 %v2666, 0.5
    %v2669 = vmul.f32 %v2667, 0.5
    %v2670 = vpack.c.bf16 %v2669, %v2668
    %vm2671 = vcmp.ge.s32.totalorder %v354, 2
    %v2672 = vsel %vm2671, 1, 0
    %v2673 = vmul.u32 %v2672, 2
    %v2674 = vsub.s32 %v354, %v2673
    %v2675 = vmul.u32 %v2674, 6
    %v2676 = vadd.s32 %v2675, %v2673
    %vm2677 = vcmp.eq.s32.totalorder %v360, %v2676
    %v2678 = vsel %vm2677, 1.0, 0.0
    %v2679 = vpack.c.bf16 %v2678, %v2678
    %v2680 = vadd.s32 %v2676, 1
    %vm2681 = vcmp.eq.s32.totalorder %v360, %v2680
    %v2682 = vsel %vm2681, 1.0, 0.0
    %v2683 = vpack.c.bf16 %v2682, %v2682
    %v2685 = vsel %vm2270, %v2683, 0
    %v2688 = vsel %vm2274, %v2670, 0
    %2690 = vmatprep.subr.bf16.mxu0 0
    %2691 = vmatpush1.bf16.msra.mxu0 0
    %2692 = vmatprep.subr.bf16.mxu0 0
    %2693 = vmatpush1.bf16.msra.mxu0 0
    %2694 = vmatprep.subr.bf16.mxu0 0
    %2695 = vmatpush1.bf16.msra.mxu0 0
    %2696 = vmatprep.subr.bf16.mxu0 0
    %2697 = vmatpush1.bf16.msra.mxu0 0
    %2698 = vmatprep.subr.bf16.mxu0 0
    %2699 = vmatpush1.bf16.msra.mxu0 0
    %2700 = vmatprep.subr.bf16.mxu0 0
    %2701 = vmatpush1.bf16.msra.mxu0 0
    %2702 = vmatprep.subr.bf16.mxu0 0
    %2703 = vmatpush1.bf16.msra.mxu0 0
    %2704 = vmatprep.subr.bf16.mxu0 0
    %2705 = vmatpush1.bf16.msra.mxu0 %v2688
    %2706 = vmatprep.subr.bf16.mxu0 0
    %2707 = vmatpush2.bf16.msra.mxu0 0
    %2708 = vmatprep.subr.bf16.mxu0 0
    %2709 = vmatpush2.bf16.msra.mxu0 0
    %2710 = vmatprep.subr.bf16.mxu0 0
    %2711 = vmatpush2.bf16.msra.mxu0 0
    %2712 = vmatprep.subr.bf16.mxu0 0
    %2713 = vmatpush2.bf16.msra.mxu0 0
    %2714 = vmatprep.subr.bf16.mxu0 0
    %2715 = vmatpush2.bf16.msra.mxu0 0
    %2716 = vmatprep.subr.bf16.mxu0 0
    %2717 = vmatpush2.bf16.msra.mxu0 0
    %2718 = vmatprep.subr.bf16.mxu0 0
    %2719 = vmatpush2.bf16.msra.mxu0 0
    %2720 = vmatprep.subr.bf16.mxu0 0
    %2721 = vmatpush2.bf16.msra.mxu0 0
    %2722 = vmatprep.mubr.bf16.mxu0 0
    %2723 = vmatmul.mubr.bf16.gmra.mxu0 %v2685
    %v2724 = vpop.f32.mrf.mxu0
    %v2725 = vadd.f32 0.0, %v2724
    %v2726 = vpop.f32.mrf.mxu0
    %v2727 = vpop.f32.mrf.mxu0
    %v2728 = vpop.f32.mrf.mxu0
    %2729 = vdwg.mxu0
    %v2731 = vsel %vm2270, %v2679, 0
    %2733 = vmatprep.subr.bf16.mxu0 0
    %2734 = vmatpush1.bf16.msra.mxu0 0
    %2735 = vmatprep.subr.bf16.mxu0 0
    %2736 = vmatpush1.bf16.msra.mxu0 0
    %2737 = vmatprep.subr.bf16.mxu0 0
    %2738 = vmatpush1.bf16.msra.mxu0 0
    %2739 = vmatprep.subr.bf16.mxu0 0
    %2740 = vmatpush1.bf16.msra.mxu0 0
    %2741 = vmatprep.subr.bf16.mxu0 0
    %2742 = vmatpush1.bf16.msra.mxu0 0
    %2743 = vmatprep.subr.bf16.mxu0 0
    %2744 = vmatpush1.bf16.msra.mxu0 0
    %2745 = vmatprep.subr.bf16.mxu0 0
    %2746 = vmatpush1.bf16.msra.mxu0 0
    %2747 = vmatprep.subr.bf16.mxu0 0
    %2748 = vmatpush1.bf16.msra.mxu0 %v2688
    %2749 = vmatprep.subr.bf16.mxu0 0
    %2750 = vmatpush2.bf16.msra.mxu0 0
    %2751 = vmatprep.subr.bf16.mxu0 0
    %2752 = vmatpush2.bf16.msra.mxu0 0
    %2753 = vmatprep.subr.bf16.mxu0 0
    %2754 = vmatpush2.bf16.msra.mxu0 0
    %2755 = vmatprep.subr.bf16.mxu0 0
    %2756 = vmatpush2.bf16.msra.mxu0 0
    %2757 = vmatprep.subr.bf16.mxu0 0
    %2758 = vmatpush2.bf16.msra.mxu0 0
    %2759 = vmatprep.subr.bf16.mxu0 0
    %2760 = vmatpush2.bf16.msra.mxu0 0
    %2761 = vmatprep.subr.bf16.mxu0 0
    %2762 = vmatpush2.bf16.msra.mxu0 0
    %2763 = vmatprep.subr.bf16.mxu0 0
    %2764 = vmatpush2.bf16.msra.mxu0 0
    %2765 = vmatprep.mubr.bf16.mxu0 0
    %2766 = vmatmul.mubr.bf16.gmra.mxu0 %v2731
    %v2767 = vpop.f32.mrf.mxu0
    %v2768 = vadd.f32 %v2725, %v2767
    %v2769 = vpop.f32.mrf.mxu0
    %v2770 = vpop.f32.mrf.mxu0
    %v2771 = vpop.f32.mrf.mxu0
    %2772 = vdwg.mxu0
    %v2773 = vmul.f32 %v2768, 0.5
    %v2774 = vpack.c.bf16 %v2773, %v2773
    %v2775 = vld [vmem:[#allocation2 + $0x438] sm:$0x3]
    %v2776 = vunpack.c.l.bf16 %v2775
    %v2777 = vld [vmem:[#allocation2 + $0x378] sm:$0xf]
    %v2778 = vld [vmem:[#allocation2 + $0x37c] sm:$0xf]
    %v2779 = vld [vmem:[#allocation2 + $0x380] sm:$0xf]
    %v2780 = vld [vmem:[#allocation2 + $0x384] sm:$0xf]
    %v2781 = vld [vmem:[#allocation2 + $0x388] sm:$0xf]
    %v2782 = vld [vmem:[#allocation2 + $0x38c] sm:$0xf]
    %v2783 = vld [vmem:[#allocation2 + $0x390] sm:$0xf]
    %v2784 = vld [vmem:[#allocation2 + $0x394] sm:$0xf]
    %v2785 = vld [vmem:[#allocation2 + $0x398] sm:$0xf]
    %v2786 = vld [vmem:[#allocation2 + $0x39c] sm:$0xf]
    %v2787 = vld [vmem:[#allocation2 + $0x3a0] sm:$0xf]
    %v2788 = vld [vmem:[#allocation2 + $0x3a4] sm:$0xf]
    %v2789 = vld [vmem:[#allocation2 + $0x3a8] sm:$0xf]
    %v2790 = vld [vmem:[#allocation2 + $0x3ac] sm:$0xf]
    %v2791 = vld [vmem:[#allocation2 + $0x3b0] sm:$0xf]
    %v2792 = vld [vmem:[#allocation2 + $0x3b4] sm:$0xf]
    %v2794 = vrot.slane %v2774, 1
    %v2803 = vunpack.c.l.b16 %v2785
    %v2804 = vunpack.c.l.b16 %v2786
    %v2805 = vunpack.c.l.b16 %v2787
    %v2806 = vunpack.c.l.b16 %v2788
    %v2807 = vunpack.c.l.b16 %v2789
    %v2808 = vunpack.c.l.b16 %v2790
    %v2809 = vunpack.c.l.b16 %v2791
    %v2810 = vunpack.c.l.b16 %v2792
    %v2811 = vpack.c.b16 %v2804, %v2803
    %v2812 = vpack.c.b16 %v2806, %v2805
    %v2813 = vpack.c.b16 %v2808, %v2807
    %v2814 = vpack.c.b16 %v2810, %v2809
    %v2820 = vsel %vm1175, %v2794, 0
    %2822 = vmatprep.subr.bf16.mxu0 0
    %2823 = vmatpush1.bf16.msra.mxu0 0
    %2824 = vmatprep.subr.bf16.mxu0 0
    %2825 = vmatpush1.bf16.msra.mxu0 0
    %2826 = vmatprep.subr.bf16.mxu0 0
    %2827 = vmatpush1.bf16.msra.mxu0 0
    %2828 = vmatprep.subr.bf16.mxu0 0
    %2829 = vmatpush1.bf16.msra.mxu0 0
    %2830 = vmatprep.subr.bf16.mxu0 0
    %2831 = vmatpush1.bf16.msra.mxu0 %v2814
    %2832 = vmatprep.subr.bf16.mxu0 0
    %2833 = vmatpush1.bf16.msra.mxu0 %v2813
    %2834 = vmatprep.subr.bf16.mxu0 0
    %2835 = vmatpush1.bf16.msra.mxu0 %v2812
    %2836 = vmatprep.subr.bf16.mxu0 0
    %2837 = vmatpush1.bf16.msra.mxu0 %v2811
    %2838 = vmatprep.subr.bf16.mxu0 0
    %2839 = vmatpush2.bf16.msra.mxu0 0
    %2840 = vmatprep.subr.bf16.mxu0 0
    %2841 = vmatpush2.bf16.msra.mxu0 0
    %2842 = vmatprep.subr.bf16.mxu0 0
    %2843 = vmatpush2.bf16.msra.mxu0 0
    %2844 = vmatprep.subr.bf16.mxu0 0
    %2845 = vmatpush2.bf16.msra.mxu0 0
    %2846 = vmatprep.subr.bf16.mxu0 0
    %2847 = vmatpush2.bf16.msra.mxu0 0
    %2848 = vmatprep.subr.bf16.mxu0 0
    %2849 = vmatpush2.bf16.msra.mxu0 0
    %2850 = vmatprep.subr.bf16.mxu0 0
    %2851 = vmatpush2.bf16.msra.mxu0 0
    %2852 = vmatprep.subr.bf16.mxu0 0
    %2853 = vmatpush2.bf16.msra.mxu0 0
    %2854 = vmatprep.mubr.bf16.mxu0 0
    %2855 = vmatmul.mubr.bf16.gmra.mxu0 %v2820
    %v2856 = vpop.f32.mrf.mxu0
    %v2857 = vadd.f32 0.0, %v2856
    %v2858 = vpop.f32.mrf.mxu0
    %v2859 = vpop.f32.mrf.mxu0
    %v2860 = vpop.f32.mrf.mxu0
    %2861 = vdwg.mxu0
    %v2870 = vunpack.c.l.b16 %v2777
    %v2871 = vunpack.c.l.b16 %v2778
    %v2872 = vunpack.c.l.b16 %v2779
    %v2873 = vunpack.c.l.b16 %v2780
    %v2874 = vunpack.c.l.b16 %v2781
    %v2875 = vunpack.c.l.b16 %v2782
    %v2876 = vunpack.c.l.b16 %v2783
    %v2877 = vunpack.c.l.b16 %v2784
    %v2878 = vpack.c.b16 %v2871, %v2870
    %v2879 = vpack.c.b16 %v2873, %v2872
    %v2880 = vpack.c.b16 %v2875, %v2874
    %v2881 = vpack.c.b16 %v2877, %v2876
    %v2887 = vsel %vm1175, %v2774, 0
    %2889 = vmatprep.subr.bf16.mxu0 0
    %2890 = vmatpush1.bf16.msra.mxu0 0
    %2891 = vmatprep.subr.bf16.mxu0 0
    %2892 = vmatpush1.bf16.msra.mxu0 0
    %2893 = vmatprep.subr.bf16.mxu0 0
    %2894 = vmatpush1.bf16.msra.mxu0 0
    %2895 = vmatprep.subr.bf16.mxu0 0
    %2896 = vmatpush1.bf16.msra.mxu0 0
    %2897 = vmatprep.subr.bf16.mxu0 0
    %2898 = vmatpush1.bf16.msra.mxu0 %v2881
    %2899 = vmatprep.subr.bf16.mxu0 0
    %2900 = vmatpush1.bf16.msra.mxu0 %v2880
    %2901 = vmatprep.subr.bf16.mxu0 0
    %2902 = vmatpush1.bf16.msra.mxu0 %v2879
    %2903 = vmatprep.subr.bf16.mxu0 0
    %2904 = vmatpush1.bf16.msra.mxu0 %v2878
    %2905 = vmatprep.subr.bf16.mxu0 0
    %2906 = vmatpush2.bf16.msra.mxu0 0
    %2907 = vmatprep.subr.bf16.mxu0 0
    %2908 = vmatpush2.bf16.msra.mxu0 0
    %2909 = vmatprep.subr.bf16.mxu0 0
    %2910 = vmatpush2.bf16.msra.mxu0 0
    %2911 = vmatprep.subr.bf16.mxu0 0
    %2912 = vmatpush2.bf16.msra.mxu0 0
    %2913 = vmatprep.subr.bf16.mxu0 0
    %2914 = vmatpush2.bf16.msra.mxu0 0
    %2915 = vmatprep.subr.bf16.mxu0 0
    %2916 = vmatpush2.bf16.msra.mxu0 0
    %2917 = vmatprep.subr.bf16.mxu0 0
    %2918 = vmatpush2.bf16.msra.mxu0 0
    %2919 = vmatprep.subr.bf16.mxu0 0
    %2920 = vmatpush2.bf16.msra.mxu0 0
    %2921 = vmatprep.mubr.bf16.mxu0 0
    %2922 = vmatmul.mubr.bf16.gmra.mxu0 %v2887
    %v2923 = vpop.f32.mrf.mxu0
    %v2924 = vadd.f32 %v2857, %v2923
    %v2925 = vpop.f32.mrf.mxu0
    %v2926 = vpop.f32.mrf.mxu0
    %v2927 = vpop.f32.mrf.mxu0
    %2928 = vdwg.mxu0
    %v2929 = vlaneseq
    %v2930 = vshrl.u32 %v2929, 7
    %v2931 = vsub.s32 0, %v2930
    %v2932 = vrot.slane %v2776, %v2931
    %v2933 = vadd.f32 %v2924, %v2932
    %v2934 = vmax.f32 %v2933, 0.0
    %v2935 = vpack.c.bf16 %v2934, %v2934
    %v2936 = vld [vmem:[#allocation2 + $0x3b8] sm:$0xf]
    %v2937 = vld [vmem:[#allocation2 + $0x3bc] sm:$0xf]
    %v2938 = vld [vmem:[#allocation2 + $0x3c0] sm:$0xf]
    %v2939 = vld [vmem:[#allocation2 + $0x3c4] sm:$0xf]
    %v2940 = vld [vmem:[#allocation2 + $0x3c8] sm:$0xf]
    %v2941 = vld [vmem:[#allocation2 + $0x3cc] sm:$0xf]
    %v2942 = vld [vmem:[#allocation2 + $0x3d0] sm:$0xf]
    %v2943 = vld [vmem:[#allocation2 + $0x3d4] sm:$0xf]
    %v2944 = vld [vmem:[#allocation2 + $0x3d8] sm:$0xf]
    %v2945 = vld [vmem:[#allocation2 + $0x3dc] sm:$0xf]
    %v2946 = vld [vmem:[#allocation2 + $0x3e0] sm:$0xf]
    %v2947 = vld [vmem:[#allocation2 + $0x3e4] sm:$0xf]
    %v2948 = vld [vmem:[#allocation2 + $0x3e8] sm:$0xf]
    %v2949 = vld [vmem:[#allocation2 + $0x3ec] sm:$0xf]
    %v2950 = vld [vmem:[#allocation2 + $0x3f0] sm:$0xf]
    %v2951 = vld [vmem:[#allocation2 + $0x3f4] sm:$0xf]
    %v2952 = vlaneseq
    %v2953 = vshrl.u32 %v2952, 7
    %v2954 = vsub.s32 1, %v2953
    %v2955 = vrot.slane %v2776, %v2954
    %v2972 = vunpack.c.l.b16 %v2936
    %v2973 = vunpack.c.l.b16 %v2937
    %v2974 = vunpack.c.l.b16 %v2938
    %v2975 = vunpack.c.l.b16 %v2939
    %v2976 = vunpack.c.l.b16 %v2940
    %v2977 = vunpack.c.l.b16 %v2941
    %v2978 = vunpack.c.l.b16 %v2942
    %v2979 = vunpack.c.l.b16 %v2943
    %v2980 = vunpack.c.l.b16 %v2944
    %v2981 = vunpack.c.l.b16 %v2945
    %v2982 = vunpack.c.l.b16 %v2946
    %v2983 = vunpack.c.l.b16 %v2947
    %v2984 = vunpack.c.l.b16 %v2948
    %v2985 = vunpack.c.l.b16 %v2949
    %v2986 = vunpack.c.l.b16 %v2950
    %v2987 = vunpack.c.l.b16 %v2951
    %v2988 = vpack.c.b16 %v2973, %v2972
    %v2989 = vpack.c.b16 %v2975, %v2974
    %v2990 = vpack.c.b16 %v2977, %v2976
    %v2991 = vpack.c.b16 %v2979, %v2978
    %v2992 = vpack.c.b16 %v2981, %v2980
    %v2993 = vpack.c.b16 %v2983, %v2982
    %v2994 = vpack.c.b16 %v2985, %v2984
    %v2995 = vpack.c.b16 %v2987, %v2986
    %3004 = vmatprep.subr.bf16.mxu0 0
    %3005 = vmatpush1.bf16.msra.mxu0 %v2995
    %3006 = vmatprep.subr.bf16.mxu0 0
    %3007 = vmatpush1.bf16.msra.mxu0 %v2994
    %3008 = vmatprep.subr.bf16.mxu0 0
    %3009 = vmatpush1.bf16.msra.mxu0 %v2993
    %3010 = vmatprep.subr.bf16.mxu0 0
    %3011 = vmatpush1.bf16.msra.mxu0 %v2992
    %3012 = vmatprep.subr.bf16.mxu0 0
    %3013 = vmatpush1.bf16.msra.mxu0 %v2991
    %3014 = vmatprep.subr.bf16.mxu0 0
    %3015 = vmatpush1.bf16.msra.mxu0 %v2990
    %3016 = vmatprep.subr.bf16.mxu0 0
    %3017 = vmatpush1.bf16.msra.mxu0 %v2989
    %3018 = vmatprep.subr.bf16.mxu0 0
    %3019 = vmatpush1.bf16.msra.mxu0 %v2988
    %3020 = vmatprep.subr.bf16.mxu0 0
    %3021 = vmatpush2.bf16.msra.mxu0 0
    %3022 = vmatprep.subr.bf16.mxu0 0
    %3023 = vmatpush2.bf16.msra.mxu0 0
    %3024 = vmatprep.subr.bf16.mxu0 0
    %3025 = vmatpush2.bf16.msra.mxu0 0
    %3026 = vmatprep.subr.bf16.mxu0 0
    %3027 = vmatpush2.bf16.msra.mxu0 0
    %3028 = vmatprep.subr.bf16.mxu0 0
    %3029 = vmatpush2.bf16.msra.mxu0 0
    %3030 = vmatprep.subr.bf16.mxu0 0
    %3031 = vmatpush2.bf16.msra.mxu0 0
    %3032 = vmatprep.subr.bf16.mxu0 0
    %3033 = vmatpush2.bf16.msra.mxu0 0
    %3034 = vmatprep.subr.bf16.mxu0 0
    %3035 = vmatpush2.bf16.msra.mxu0 0
    %3036 = vmatprep.mubr.bf16.mxu0 0
    %3037 = vmatmul.mubr.bf16.gmra.mxu0 %v2935
    %v3038 = vpop.f32.mrf.mxu0
    %v3039 = vadd.f32 %v2955, %v3038
    %v3040 = vpop.f32.mrf.mxu0
    %v3041 = vpop.f32.mrf.mxu0
    %v3042 = vpop.f32.mrf.mxu0
    %3043 = vdwg.mxu0
    %v3044 = vmax.f32 %v3039, 0.0
    %v3045 = vpack.c.bf16 %v3044, %v3044
    %v3046 = vld [vmem:[#allocation2 + $0x3f8] sm:$0xf]
    %v3047 = vld [vmem:[#allocation2 + $0x3fc] sm:$0xf]
    %v3048 = vld [vmem:[#allocation2 + $0x400] sm:$0xf]
    %v3049 = vld [vmem:[#allocation2 + $0x404] sm:$0xf]
    %v3050 = vld [vmem:[#allocation2 + $0x408] sm:$0xf]
    %v3051 = vld [vmem:[#allocation2 + $0x40c] sm:$0xf]
    %v3052 = vld [vmem:[#allocation2 + $0x410] sm:$0xf]
    %v3053 = vld [vmem:[#allocation2 + $0x414] sm:$0xf]
    %v3054 = vld [vmem:[#allocation2 + $0x418] sm:$0xf]
    %v3055 = vld [vmem:[#allocation2 + $0x41c] sm:$0xf]
    %v3056 = vld [vmem:[#allocation2 + $0x420] sm:$0xf]
    %v3057 = vld [vmem:[#allocation2 + $0x424] sm:$0xf]
    %v3058 = vld [vmem:[#allocation2 + $0x428] sm:$0xf]
    %v3059 = vld [vmem:[#allocation2 + $0x42c] sm:$0xf]
    %v3060 = vld [vmem:[#allocation2 + $0x430] sm:$0xf]
    %v3061 = vld [vmem:[#allocation2 + $0x434] sm:$0xf]
    %v3062 = vlaneseq
    %v3063 = vshrl.u32 %v3062, 7
    %v3064 = vsub.s32 2, %v3063
    %v3065 = vrot.slane %v2776, %v3064
    %v3082 = vunpack.c.l.b16 %v3046
    %v3083 = vunpack.c.l.b16 %v3047
    %v3084 = vunpack.c.l.b16 %v3048
    %v3085 = vunpack.c.l.b16 %v3049
    %v3086 = vunpack.c.l.b16 %v3050
    %v3087 = vunpack.c.l.b16 %v3051
    %v3088 = vunpack.c.l.b16 %v3052
    %v3089 = vunpack.c.l.b16 %v3053
    %v3090 = vunpack.c.l.b16 %v3054
    %v3091 = vunpack.c.l.b16 %v3055
    %v3092 = vunpack.c.l.b16 %v3056
    %v3093 = vunpack.c.l.b16 %v3057
    %v3094 = vunpack.c.l.b16 %v3058
    %v3095 = vunpack.c.l.b16 %v3059
    %v3096 = vunpack.c.l.b16 %v3060
    %v3097 = vunpack.c.l.b16 %v3061
    %v3098 = vpack.c.b16 %v3083, %v3082
    %v3099 = vpack.c.b16 %v3085, %v3084
    %v3100 = vpack.c.b16 %v3087, %v3086
    %v3101 = vpack.c.b16 %v3089, %v3088
    %v3102 = vpack.c.b16 %v3091, %v3090
    %v3103 = vpack.c.b16 %v3093, %v3092
    %v3104 = vpack.c.b16 %v3095, %v3094
    %v3105 = vpack.c.b16 %v3097, %v3096
    %3114 = vmatprep.subr.bf16.mxu0 0
    %3115 = vmatpush1.bf16.msra.mxu0 %v3105
    %3116 = vmatprep.subr.bf16.mxu0 0
    %3117 = vmatpush1.bf16.msra.mxu0 %v3104
    %3118 = vmatprep.subr.bf16.mxu0 0
    %3119 = vmatpush1.bf16.msra.mxu0 %v3103
    %3120 = vmatprep.subr.bf16.mxu0 0
    %3121 = vmatpush1.bf16.msra.mxu0 %v3102
    %3122 = vmatprep.subr.bf16.mxu0 0
    %3123 = vmatpush1.bf16.msra.mxu0 %v3101
    %3124 = vmatprep.subr.bf16.mxu0 0
    %3125 = vmatpush1.bf16.msra.mxu0 %v3100
    %3126 = vmatprep.subr.bf16.mxu0 0
    %3127 = vmatpush1.bf16.msra.mxu0 %v3099
    %3128 = vmatprep.subr.bf16.mxu0 0
    %3129 = vmatpush1.bf16.msra.mxu0 %v3098
    %3130 = vmatprep.subr.bf16.mxu0 0
    %3131 = vmatpush2.bf16.msra.mxu0 0
    %3132 = vmatprep.subr.bf16.mxu0 0
    %3133 = vmatpush2.bf16.msra.mxu0 0
    %3134 = vmatprep.subr.bf16.mxu0 0
    %3135 = vmatpush2.bf16.msra.mxu0 0
    %3136 = vmatprep.subr.bf16.mxu0 0
    %3137 = vmatpush2.bf16.msra.mxu0 0
    %3138 = vmatprep.subr.bf16.mxu0 0
    %3139 = vmatpush2.bf16.msra.mxu0 0
    %3140 = vmatprep.subr.bf16.mxu0 0
    %3141 = vmatpush2.bf16.msra.mxu0 0
    %3142 = vmatprep.subr.bf16.mxu0 0
    %3143 = vmatpush2.bf16.msra.mxu0 0
    %3144 = vmatprep.subr.bf16.mxu0 0
    %3145 = vmatpush2.bf16.msra.mxu0 0
    %3146 = vmatprep.mubr.bf16.mxu0 0
    %3147 = vmatmul.mubr.bf16.gmra.mxu0 %v3045
    %v3148 = vpop.f32.mrf.mxu0
    %v3149 = vadd.f32 %v3065, %v3148
    %v3150 = vpop.f32.mrf.mxu0
    %v3151 = vpop.f32.mrf.mxu0
    %v3152 = vpop.f32.mrf.mxu0
    %3153 = vdwg.mxu0
    %vm3154 = vcmask 74752
    %v3155 = vsel %vm3154, %v3149, -inf
    %3156 = vmax.xlane.f32.xlu0 %v3155
    %v3157 = vpop.xlane.xlu0 %3156
    %v3158 = vsub.f32 %v3149, %v3157
    %v3159 = vmul.f32 %v3158, 1.442695
    %v3160 = vpow.pop %v3159
    %v3161 = vsel %vm3154, %v3160, 0.0
    %3162 = vadd.xlane.f32.xlu0 %v3161
    %v3163 = vpop.xlane.xlu0 %3162
    %v3164 = vrcp.pop %v3163
    %v3165 = vmul.f32 %v3160, %v3164
    %v3166 = vmul.f32 %v3149, 0.5
    %v3167 = vtanh.pop %v3166
    %v3168 = vadd.f32 %v3167, 1.0
    %v3169 = vmul.f32 %v3168, 0.5
    %v3170 = vsel %vm2270, %v3165, %v3169
    %vm3171 = vcmask 107520
    %3172 = vst.msk [vmem:[%s2] sm:$0x3] %vm3171, %v3170
    // Predicated region
    $region14: #{fused_forward.1} parent=1 // pred_check
      _
    $region15: #{fused_forward.1} parent=1 // pred_check_branch
      %3174 = sbr.rel (0) target = $region17
    $region16: #{fused_forward.1} parent=1 // pred_region
      _
    $region17: #{fused_forward.1} parent=1 // pred_fallthru
      _
    // Predicated region
    $region18: #{fused_forward.1} parent=1 // pred_check
      _
    $region19: #{fused_forward.1} parent=1 // pred_check_branch
      %3176 = sbr.rel (0) target = $region21
    $region20: #{fused_forward.1} parent=1 // pred_region
      _
    $region21: #{fused_forward.1} parent=1 // pred_fallthru
      _
    %3177 = vsyncpa [#allocation3], 1

</llo_original>
